<compile_context>
chip_gen: v6e
topology: v6e:2x2x1
jax: 0.10.0
libtpu: 0.0.40
codegen_flags: <defaults>
</compile_context>

<pallas_src>
import functools
import math

import jax
import jax.numpy as jnp
from jax.experimental import pallas as pl
from jax.experimental.pallas import tpu as pltpu

EPS = 1e-6


# ------------------------------ in-kernel helpers -----------------------------
def _norm(x, alpha, bias):
    # alpha * (x - mean) / (unbiased_std + eps) + bias  (matches torch.std-based Norm)
    d = x.shape[-1]
    mean = jnp.mean(x, axis=-1, keepdims=True)
    xc = x - mean
    var = jnp.sum(xc * xc, axis=-1, keepdims=True) / (d - 1)
    return alpha * xc / (jnp.sqrt(var) + EPS) + bias


def _mha_perhead(q_src, kv_src, wq_ref, bq_ref, wk_ref, bk_ref, wv_ref, bv_ref,
                 wo_ref, bo_ref, *, heads, scale):
    """Multi-head softmax attention with per-head weight slabs.

    q_src: (Sq, D) bf16, kv_src: (Sk, D) bf16.
    Weight refs: wq/wk/wv (H, D, dk), wo (H, dk, D); biases (H, 1, dk) / (1, D).
    No lane slicing of activations, no head concat: the output projection is
    accumulated per head.  Returns (Sq, D) f32 (output bias included).
    """
    out = None
    for h in range(heads):                                   # static unroll, H small
        qh = jnp.dot(q_src, wq_ref[h], preferred_element_type=jnp.float32) + bq_ref[h]
        kh = jnp.dot(kv_src, wk_ref[h], preferred_element_type=jnp.float32) + bk_ref[h]
        vh = jnp.dot(kv_src, wv_ref[h], preferred_element_type=jnp.float32) + bv_ref[h]
        # fold 1/sqrt(dk) into q (Sq*dk elems) instead of the (Sq,Sk) scores
        qh = (qh * scale).astype(jnp.bfloat16)
        kh = kh.astype(jnp.bfloat16)
        s = jax.lax.dot_general(qh, kh, (((1,), (1,)), ((), ())),
                                preferred_element_type=jnp.float32)   # (Sq, Sk)
        m = jnp.max(s, axis=-1, keepdims=True)
        p = jnp.exp(s - m)
        p = p * pl.reciprocal(jnp.sum(p, axis=-1, keepdims=True), approx=True)  # EUP
        oh = jnp.dot(p.astype(jnp.bfloat16), vh.astype(jnp.bfloat16),
                     preferred_element_type=jnp.float32)              # (Sq, dk)
        contrib = jnp.dot(oh.astype(jnp.bfloat16), wo_ref[h],
                          preferred_element_type=jnp.float32)         # (Sq, D)
        out = contrib if out is None else out + contrib
    return out + bo_ref[...]


# ------------------- fused duplex attention (stage 1 + stage 2) ---------------
def _duplex_attn_kernel(x_ref, y_ref, na_ref, nb_ref,
                        wq_ref, bq_ref, wk_ref, bk_ref, wv_ref, bv_ref,
                        wo_ref, bo_ref, xout_ref, ynew_ref, *, heads, scale):
    x = x_ref[0]                                      # (Sx, D) f32
    y = y_ref[0]                                      # (Sy, D) f32

    x2 = _norm(x, na_ref[...], nb_ref[...])           # stays in VMEM/vregs only
    x2b = x2.astype(jnp.bfloat16)
    yb = y.astype(jnp.bfloat16)

    # stage 1: latents y attend to normalized inputs x2; residual update of y.
    attn1 = _mha_perhead(yb, x2b, wq_ref, bq_ref, wk_ref, bk_ref, wv_ref, bv_ref,
                         wo_ref, bo_ref, heads=heads, scale=scale)    # (Sy, D)
    y_new = y + attn1
    ynew_ref[0] = y_new

    # stage 2: x2 attends to updated latents.
    # TODO(synk): both stages reuse the same projections; swap in per-direction
    #             weights if the real MultiHeadDuplexAttention has them.
    attn2 = _mha_perhead(x2b, y_new.astype(jnp.bfloat16),
                         wq_ref, bq_ref, wk_ref, bk_ref, wv_ref, bv_ref,
                         wo_ref, bo_ref, heads=heads, scale=scale)    # (Sx, D)
    # x = x_attn; x = x + dropout_1(x)  ->  2 * x_attn   (dropout identity, eval)
    xout_ref[0] = 2.0 * attn2


# --------------- norm_2 + ConvFeedForward (k=3, pad=1) + residual -------------
def _ff_kernel(x_ref, na_ref, nb_ref, w1_ref, b1_ref, w2_ref, b2_ref, o_ref):
    x = x_ref[0]                                      # (S, D) f32
    s_len = x.shape[0]

    x2 = _norm(x, na_ref[...], nb_ref[...])           # (S, D) f32

    # (S, 1) boundary masks (not full-shape iotas)
    row = jax.lax.broadcasted_iota(jnp.int32, (s_len, 1), 0)
    first = row == 0
    last = row == s_len - 1

    # conv1: gather the 3 taps along channels -> single (S,3D) x (3D,F) matmul.
    # Shifts/masks act on the small (S, D) operand.
    xm1 = jnp.where(first, 0.0, pltpu.roll(x2, 1, axis=0))              # x2[t-1]
    xp1 = jnp.where(last, 0.0, pltpu.roll(x2, s_len - 1, axis=0))       # x2[t+1]
    xcat = jnp.concatenate([xm1.astype(jnp.bfloat16),
                            x2.astype(jnp.bfloat16),
                            xp1.astype(jnp.bfloat16)], axis=-1)         # (S, 3D) bf16
    h = jnp.dot(xcat, w1_ref[...], preferred_element_type=jnp.float32) + b1_ref[...]
    h = jnp.maximum(h, 0.0)                            # ReLU; inner dropout identity
    hb = h.astype(jnp.bfloat16)

    # conv2: three (S,F)x(F,D) matmuls; shift/mask only the small (S,D) outputs.
    n0 = jnp.dot(hb, w2_ref[0], preferred_element_type=jnp.float32)
    n1 = jnp.dot(hb, w2_ref[1], preferred_element_type=jnp.float32)
    n2 = jnp.dot(hb, w2_ref[2], preferred_element_type=jnp.float32)
    u0 = jnp.where(first, 0.0, pltpu.roll(n0, 1, axis=0))
    u2 = jnp.where(last, 0.0, pltpu.roll(n2, s_len - 1, axis=0))
    ff = u0 + n1 + u2 + b2_ref[...]

    o_ref[0] = x + ff                                  # x + dropout_2(ff(x2))


# --------------------------------- wrappers -----------------------------------
def _batch3(b):
    return (b, 0, 0)


def _weight_spec(shape):
    # Grid-invariant parameter block: single-buffered (no wasted double-buffer VMEM).
    if len(shape) == 2:
        return pl.BlockSpec(shape, lambda b: (0, 0), pipeline_mode=pl.Buffered(1))
    return pl.BlockSpec(shape, lambda b: (0, 0, 0), pipeline_mode=pl.Buffered(1))


def _vmem_limit_bytes(resident_bytes):
    # Headroom over the resident-block estimate; never below the default scoped
    # limit we rely on, never above v7x's 64 MiB physical VMEM per core.
    return int(min(max(4 * resident_bytes, 32 * 2 ** 20), 64 * 2 ** 20))


def duplex_attention(x, y, p, *, heads):
    B, Sx, D = x.shape
    Sy = y.shape[1]
    dk = D // heads
    scale = 1.0 / math.sqrt(dk)
    kern = functools.partial(_duplex_attn_kernel, heads=heads, scale=scale)

    flops = B * (8 * (Sx + Sy) * D * D + 8 * Sx * Sy * D)
    transc = 2 * B * heads * Sx * Sy
    bytes_acc = 4 * B * 2 * (Sx + Sy) * D + 2 * 4 * D * D + 4 * 4 * D

    act_blk = 4 * 2 * (Sx + Sy) * D                       # x,y in + xout,ynew out (f32)
    wgt_blk = 2 * 4 * D * D + 4 * 4 * D                   # bf16 weights + f32 biases
    inter = 4 * heads * max(Sx, Sy) * max(Sx, Sy)         # per-head scores, rough
    vmem = _vmem_limit_bytes(2 * act_blk + wgt_blk + inter)

    return pl.pallas_call(
        kern,
        out_shape=(jax.ShapeDtypeStruct((B, Sx, D), jnp.float32),
                   jax.ShapeDtypeStruct((B, Sy, D), jnp.float32)),
        grid=(B,),
        in_specs=[pl.BlockSpec((1, Sx, D), _batch3),      # x
                  pl.BlockSpec((1, Sy, D), _batch3),      # y
                  _weight_spec((1, D)),                   # norm1 alpha
                  _weight_spec((1, D)),                   # norm1 bias
                  _weight_spec((heads, D, dk)),           # wq per head (bf16)
                  _weight_spec((heads, 1, dk)),           # bq per head
                  _weight_spec((heads, D, dk)),           # wk per head
                  _weight_spec((heads, 1, dk)),           # bk per head
                  _weight_spec((heads, D, dk)),           # wv per head
                  _weight_spec((heads, 1, dk)),           # bv per head
                  _weight_spec((heads, dk, D)),           # wo per head (bf16)
                  _weight_spec((1, D))],                  # bo
        out_specs=(pl.BlockSpec((1, Sx, D), _batch3),
                   pl.BlockSpec((1, Sy, D), _batch3)),
        compiler_params=pltpu.CompilerParams(
            dimension_semantics=("parallel",),
            vmem_limit_bytes=vmem),
        cost_estimate=pl.CostEstimate(flops=int(flops),
                                      transcendentals=int(transc),
                                      bytes_accessed=int(bytes_acc)),
    )(x, y, p['n1_a'], p['n1_b'], p['wq'], p['bq'], p['wk'], p['bk'],
      p['wv'], p['bv'], p['wo'], p['bo'])


def ff_block(x, p):
    B, S, D = x.shape
    F = p['b1'].shape[1]

    flops = 12 * B * S * D * F
    bytes_acc = 4 * 2 * B * S * D + 2 * 6 * D * F + 4 * (2 * D + F + D)

    act_blk = 4 * 2 * S * D
    wgt_blk = 2 * 6 * D * F + 4 * (2 * D + F + D)
    inter = 4 * S * F + 2 * S * 3 * D + 3 * 4 * S * D
    vmem = _vmem_limit_bytes(2 * act_blk + wgt_blk + inter)

    return pl.pallas_call(
        _ff_kernel,
        out_shape=jax.ShapeDtypeStruct((B, S, D), jnp.float32),
        grid=(B,),
        in_specs=[pl.BlockSpec((1, S, D), _batch3),       # x (post-attention)
                  _weight_spec((1, D)),                   # norm2 alpha
                  _weight_spec((1, D)),                   # norm2 bias
                  _weight_spec((3 * D, F)),               # conv1 taps, flattened (bf16)
                  _weight_spec((1, F)),                   # conv1 bias
                  _weight_spec((3, F, D)),                # conv2 taps (bf16)
                  _weight_spec((1, D))],                  # conv2 bias
        out_specs=pl.BlockSpec((1, S, D), _batch3),
        compiler_params=pltpu.CompilerParams(
            dimension_semantics=("parallel",),
            vmem_limit_bytes=vmem),
        cost_estimate=pl.CostEstimate(flops=int(flops),
                                      transcendentals=0,
                                      bytes_accessed=int(bytes_acc)),
    )(x, p['n2_a'], p['n2_b'], p['w1'], p['b1'], p['w2'], p['b2'])


# --------------------------- DuplexEncoderLayerConv ---------------------------
def duplex_encoder_layer_conv(x, y, p, *, heads):
    # fused: x2 = norm_1(x); y_new = y + attn(Q=y,K/V=x2); x = 2*attn(Q=x2,K/V=y_new)
    x_attn, y_new = duplex_attention(x, y, p, heads=heads)
    # x = x + ff(norm_2(x))
    x_out = ff_block(x_attn, p)
    return x_out, y_new


# ----------------------------------- params -----------------------------------
def init_params(key, d_model, d_ff, heads):
    dk = d_model // heads
    ks = jax.random.split(key, 6)
    s = 0.02
    f32z = lambda shape: jnp.zeros(shape, jnp.float32)
    bf16n = lambda k, shape: (s * jax.random.normal(k, shape, jnp.float32)
                              ).astype(jnp.bfloat16)

    # PyTorch mapping (for a real import):
    #   wq/wk/wv  <- Linear(d,d).weight.T  reshaped (d, H, dk) -> (H, d, dk)
    #   wo        <- Linear(d,d).weight.T  reshaped (H, dk, d)
    #   conv taps <- Conv1d.weight (C_out, C_in, K) -> tap k is weight[:, :, k].T,
    #                taps stacked tap-major: conv1 flattened to (3*d, d_ff).
    wq = bf16n(ks[0], (d_model, d_model)).reshape(d_model, heads, dk).transpose(1, 0, 2)
    wk = bf16n(ks[1], (d_model, d_model)).reshape(d_model, heads, dk).transpose(1, 0, 2)
    wv = bf16n(ks[2], (d_model, d_model)).reshape(d_model, heads, dk).transpose(1, 0, 2)
    wo = bf16n(ks[3], (d_model, d_model)).reshape(heads, dk, d_model)

    return {
        'n1_a': jnp.ones((1, d_model), jnp.float32), 'n1_b': f32z((1, d_model)),
        'n2_a': jnp.ones((1, d_model), jnp.float32), 'n2_b': f32z((1, d_model)),
        'wq': wq, 'wk': wk, 'wv': wv, 'wo': wo,
        'bq': f32z((heads, 1, dk)), 'bk': f32z((heads, 1, dk)),
        'bv': f32z((heads, 1, dk)), 'bo': f32z((1, d_model)),
        # conv1 taps flattened (3*d_model, d_ff) for the single gathered matmul.
        'w1': bf16n(ks[4], (3, d_model, d_ff)).reshape(3 * d_model, d_ff),
        'b1': f32z((1, d_ff)),
        'w2': bf16n(ks[5], (3, d_ff, d_model)),
        'b2': f32z((1, d_model)),
    }


if __name__ == "__main__":
    # NOTE: these are correctness-demo shapes.  For any benchmarking use D a
    # multiple of 128 and S a multiple of 8 (D=32 gives masked partial stores).
    B, Sx, Sy, D, H, F = 2, 16, 8, 32, 4, 64
    key = jax.random.PRNGKey(0)
    kx, ky, kp = jax.random.split(key, 3)
    x = jax.random.normal(kx, (B, Sx, D), jnp.float32)
    y = jax.random.normal(ky, (B, Sy, D), jnp.float32)
    params = init_params(kp, D, F, H)

    fwd = jax.jit(functools.partial(duplex_encoder_layer_conv, heads=H))
    out_x, out_y = fwd(x, y, params)
    jax.block_until_ready((out_x, out_y))
    assert out_x.shape == (B, Sx, D) and out_y.shape == (B, Sy, D)
    assert bool(jnp.all(jnp.isfinite(out_x))) and bool(jnp.all(jnp.isfinite(out_y)))
    print("KERNEL_OK")
</pallas_src>

<mosaic_0001>
module attributes {stable_mosaic.version = 11 : i64} {
  func.func @_duplex_attn_kernel(%arg0: i32, %arg1: memref<1x16x32xf32, #tpu.memory_space<vmem>>, %arg2: memref<1x8x32xf32, #tpu.memory_space<vmem>>, %arg3: memref<1x32xf32, #tpu.memory_space<vmem>>, %arg4: memref<1x32xf32, #tpu.memory_space<vmem>>, %arg5: memref<4x32x8xbf16, #tpu.memory_space<vmem>>, %arg6: memref<4x1x8xf32, #tpu.memory_space<vmem>>, %arg7: memref<4x32x8xbf16, #tpu.memory_space<vmem>>, %arg8: memref<4x1x8xf32, #tpu.memory_space<vmem>>, %arg9: memref<4x32x8xbf16, #tpu.memory_space<vmem>>, %arg10: memref<4x1x8xf32, #tpu.memory_space<vmem>>, %arg11: memref<4x8x32xbf16, #tpu.memory_space<vmem>>, %arg12: memref<1x32xf32, #tpu.memory_space<vmem>>, %arg13: memref<1x16x32xf32, #tpu.memory_space<vmem>>, %arg14: memref<1x8x32xf32, #tpu.memory_space<vmem>>) attributes {dimension_semantics = [#tpu.dimension_semantics<parallel>], iteration_bounds = array<i64: 2>, scalar_prefetch = 0 : i64, scratch_operands = 0 : i64, tpu.core_type = #tpu.core_type<tc>, window_params = [{transform_indices = @transform_0, window_bounds = array<i64: 1, 16, 32>}, {transform_indices = @transform_1, window_bounds = array<i64: 1, 8, 32>}, {pipeline_mode = #tpu.pipeline_mode<synchronous>, transform_indices = @transform_2, window_bounds = array<i64: 1, 32>}, {pipeline_mode = #tpu.pipeline_mode<synchronous>, transform_indices = @transform_3, window_bounds = array<i64: 1, 32>}, {pipeline_mode = #tpu.pipeline_mode<synchronous>, transform_indices = @transform_4, window_bounds = array<i64: 4, 32, 8>}, {pipeline_mode = #tpu.pipeline_mode<synchronous>, transform_indices = @transform_5, window_bounds = array<i64: 4, 1, 8>}, {pipeline_mode = #tpu.pipeline_mode<synchronous>, transform_indices = @transform_6, window_bounds = array<i64: 4, 32, 8>}, {pipeline_mode = #tpu.pipeline_mode<synchronous>, transform_indices = @transform_7, window_bounds = array<i64: 4, 1, 8>}, {pipeline_mode = #tpu.pipeline_mode<synchronous>, transform_indices = @transform_8, window_bounds = array<i64: 4, 32, 8>}, {pipeline_mode = #tpu.pipeline_mode<synchronous>, transform_indices = @transform_9, window_bounds = array<i64: 4, 1, 8>}, {pipeline_mode = #tpu.pipeline_mode<synchronous>, transform_indices = @transform_10, window_bounds = array<i64: 4, 8, 32>}, {pipeline_mode = #tpu.pipeline_mode<synchronous>, transform_indices = @transform_11, window_bounds = array<i64: 1, 32>}, {transform_indices = @transform_12, window_bounds = array<i64: 1, 16, 32>}, {transform_indices = @transform_13, window_bounds = array<i64: 1, 8, 32>}]} {
    %c0 = arith.constant 0 : index
    %c0_0 = arith.constant 0 : index
    %c0_1 = arith.constant 0 : index
    %0 = vector.load %arg1[%c0, %c0_0, %c0_1] : memref<1x16x32xf32, #tpu.memory_space<vmem>>, vector<1x16x32xf32>
    %1 = vector.shape_cast %0 : vector<1x16x32xf32> to vector<16x32xf32>
    %c0_2 = arith.constant 0 : index
    %c0_3 = arith.constant 0 : index
    %c0_4 = arith.constant 0 : index
    %2 = vector.load %arg2[%c0_2, %c0_3, %c0_4] : memref<1x8x32xf32, #tpu.memory_space<vmem>>, vector<1x8x32xf32>
    %3 = vector.shape_cast %2 : vector<1x8x32xf32> to vector<8x32xf32>
    %c0_5 = arith.constant 0 : index
    %c0_6 = arith.constant 0 : index
    %4 = vector.load %arg3[%c0_5, %c0_6] : memref<1x32xf32, #tpu.memory_space<vmem>>, vector<1x32xf32>
    %c0_7 = arith.constant 0 : index
    %c0_8 = arith.constant 0 : index
    %5 = vector.load %arg4[%c0_7, %c0_8] : memref<1x32xf32, #tpu.memory_space<vmem>>, vector<1x32xf32>
    %cst = arith.constant dense<0.000000e+00> : vector<16xf32>
    %6 = vector.multi_reduction <add>, %1, %cst [1] : vector<16x32xf32> to vector<16xf32>
    %7 = vector.shape_cast %6 : vector<16xf32> to vector<16x1xf32>
    %cst_9 = arith.constant 3.200000e+01 : f32
    %8 = vector.broadcast %cst_9 : f32 to vector<16x1xf32>
    %9 = arith.divf %7, %8 : vector<16x1xf32>
    %10 = vector.broadcast %9 : vector<16x1xf32> to vector<16x32xf32>
    %11 = arith.subf %1, %10 : vector<16x32xf32>
    %12 = arith.mulf %11, %11 : vector<16x32xf32>
    %cst_10 = arith.constant dense<0.000000e+00> : vector<16xf32>
    %13 = vector.multi_reduction <add>, %12, %cst_10 [1] : vector<16x32xf32> to vector<16xf32>
    %14 = vector.shape_cast %13 : vector<16xf32> to vector<16x1xf32>
    %cst_11 = arith.constant 3.100000e+01 : f32
    %15 = vector.broadcast %cst_11 : f32 to vector<16x1xf32>
    %16 = arith.divf %14, %15 : vector<16x1xf32>
    %17 = vector.broadcast %4 : vector<1x32xf32> to vector<16x32xf32>
    %18 = arith.mulf %17, %11 : vector<16x32xf32>
    %19 = math.sqrt %16 : vector<16x1xf32>
    %cst_12 = arith.constant 9.99999997E-7 : f32
    %20 = vector.broadcast %cst_12 : f32 to vector<16x1xf32>
    %21 = arith.addf %19, %20 : vector<16x1xf32>
    %22 = vector.broadcast %21 : vector<16x1xf32> to vector<16x32xf32>
    %23 = arith.divf %18, %22 : vector<16x32xf32>
    %24 = vector.broadcast %5 : vector<1x32xf32> to vector<16x32xf32>
    %25 = arith.addf %23, %24 : vector<16x32xf32>
    %26 = arith.truncf %25 : vector<16x32xf32> to vector<16x32xbf16>
    %27 = arith.truncf %3 : vector<8x32xf32> to vector<8x32xbf16>
    %c0_13 = arith.constant 0 : index
    %c0_14 = arith.constant 0 : index
    %c0_15 = arith.constant 0 : index
    %28 = vector.load %arg5[%c0_13, %c0_14, %c0_15] : memref<4x32x8xbf16, #tpu.memory_space<vmem>>, vector<1x32x8xbf16>
    %29 = vector.shape_cast %28 : vector<1x32x8xbf16> to vector<32x8xbf16>
    %cst_16 = arith.constant dense<0.000000e+00> : vector<8x8xf32>
    %30 = tpu.matmul %27, %29, %cst_16 {dimension_numbers = #tpu.dot_dimension_numbers<[1], [0], [0], [1], [0, 0, 1, 1], [], []>} : vector<8x32xbf16>, vector<32x8xbf16>, vector<8x8xf32> -> vector<8x8xf32>
    %c0_17 = arith.constant 0 : index
    %c0_18 = arith.constant 0 : index
    %c0_19 = arith.constant 0 : index
    %31 = vector.load %arg6[%c0_17, %c0_18, %c0_19] : memref<4x1x8xf32, #tpu.memory_space<vmem>>, vector<1x1x8xf32>
    %32 = vector.shape_cast %31 : vector<1x1x8xf32> to vector<1x8xf32>
    %33 = vector.broadcast %32 : vector<1x8xf32> to vector<8x8xf32>
    %34 = arith.addf %30, %33 : vector<8x8xf32>
    %c0_20 = arith.constant 0 : index
    %c0_21 = arith.constant 0 : index
    %c0_22 = arith.constant 0 : index
    %35 = vector.load %arg7[%c0_20, %c0_21, %c0_22] : memref<4x32x8xbf16, #tpu.memory_space<vmem>>, vector<1x32x8xbf16>
    %36 = vector.shape_cast %35 : vector<1x32x8xbf16> to vector<32x8xbf16>
    %cst_23 = arith.constant dense<0.000000e+00> : vector<16x8xf32>
    %37 = tpu.matmul %26, %36, %cst_23 {dimension_numbers = #tpu.dot_dimension_numbers<[1], [0], [0], [1], [0, 0, 1, 1], [], []>} : vector<16x32xbf16>, vector<32x8xbf16>, vector<16x8xf32> -> vector<16x8xf32>
    %c0_24 = arith.constant 0 : index
    %c0_25 = arith.constant 0 : index
    %c0_26 = arith.constant 0 : index
    %38 = vector.load %arg8[%c0_24, %c0_25, %c0_26] : memref<4x1x8xf32, #tpu.memory_space<vmem>>, vector<1x1x8xf32>
    %39 = vector.shape_cast %38 : vector<1x1x8xf32> to vector<1x8xf32>
    %40 = vector.broadcast %39 : vector<1x8xf32> to vector<16x8xf32>
    %41 = arith.addf %37, %40 : vector<16x8xf32>
    %c0_27 = arith.constant 0 : index
    %c0_28 = arith.constant 0 : index
    %c0_29 = arith.constant 0 : index
    %42 = vector.load %arg9[%c0_27, %c0_28, %c0_29] : memref<4x32x8xbf16, #tpu.memory_space<vmem>>, vector<1x32x8xbf16>
    %43 = vector.shape_cast %42 : vector<1x32x8xbf16> to vector<32x8xbf16>
    %cst_30 = arith.constant dense<0.000000e+00> : vector<16x8xf32>
    %44 = tpu.matmul %26, %43, %cst_30 {dimension_numbers = #tpu.dot_dimension_numbers<[1], [0], [0], [1], [0, 0, 1, 1], [], []>} : vector<16x32xbf16>, vector<32x8xbf16>, vector<16x8xf32> -> vector<16x8xf32>
    %c0_31 = arith.constant 0 : index
    %c0_32 = arith.constant 0 : index
    %c0_33 = arith.constant 0 : index
    %45 = vector.load %arg10[%c0_31, %c0_32, %c0_33] : memref<4x1x8xf32, #tpu.memory_space<vmem>>, vector<1x1x8xf32>
    %46 = vector.shape_cast %45 : vector<1x1x8xf32> to vector<1x8xf32>
    %47 = vector.broadcast %46 : vector<1x8xf32> to vector<16x8xf32>
    %48 = arith.addf %44, %47 : vector<16x8xf32>
    %cst_34 = arith.constant 0.353553385 : f32
    %49 = vector.broadcast %cst_34 : f32 to vector<8x8xf32>
    %50 = arith.mulf %34, %49 : vector<8x8xf32>
    %51 = arith.truncf %50 : vector<8x8xf32> to vector<8x8xbf16>
    %52 = arith.truncf %41 : vector<16x8xf32> to vector<16x8xbf16>
    %cst_35 = arith.constant dense<0.000000e+00> : vector<8x16xf32>
    %53 = tpu.matmul %51, %52, %cst_35 {dimension_numbers = #tpu.dot_dimension_numbers<[1], [1], [0], [0], [0, 0, 1, 0], [], []>} : vector<8x8xbf16>, vector<16x8xbf16>, vector<8x16xf32> -> vector<8x16xf32>
    %cst_36 = arith.constant dense<0xFF800000> : vector<8xf32>
    %54 = vector.multi_reduction <maximumf>, %53, %cst_36 [1] : vector<8x16xf32> to vector<8xf32>
    %55 = vector.shape_cast %54 : vector<8xf32> to vector<8x1xf32>
    %56 = vector.broadcast %55 : vector<8x1xf32> to vector<8x16xf32>
    %57 = arith.subf %53, %56 : vector<8x16xf32>
    %58 = math.exp %57 : vector<8x16xf32>
    %cst_37 = arith.constant dense<0.000000e+00> : vector<8xf32>
    %59 = vector.multi_reduction <add>, %58, %cst_37 [1] : vector<8x16xf32> to vector<8xf32>
    %60 = vector.shape_cast %59 : vector<8xf32> to vector<8x1xf32>
    %61 = tpu.reciprocal %60 {approx = true} : vector<8x1xf32> -> vector<8x1xf32>
    %62 = vector.broadcast %61 : vector<8x1xf32> to vector<8x16xf32>
    %63 = arith.mulf %58, %62 : vector<8x16xf32>
    %64 = arith.truncf %63 : vector<8x16xf32> to vector<8x16xbf16>
    %65 = arith.truncf %48 : vector<16x8xf32> to vector<16x8xbf16>
    %cst_38 = arith.constant dense<0.000000e+00> : vector<8x8xf32>
    %66 = tpu.matmul %64, %65, %cst_38 {dimension_numbers = #tpu.dot_dimension_numbers<[1], [0], [0], [1], [0, 0, 1, 1], [], []>} : vector<8x16xbf16>, vector<16x8xbf16>, vector<8x8xf32> -> vector<8x8xf32>
    %67 = arith.truncf %66 : vector<8x8xf32> to vector<8x8xbf16>
    %c0_39 = arith.constant 0 : index
    %c0_40 = arith.constant 0 : index
    %c0_41 = arith.constant 0 : index
    %68 = vector.load %arg11[%c0_39, %c0_40, %c0_41] : memref<4x8x32xbf16, #tpu.memory_space<vmem>>, vector<1x8x32xbf16>
    %69 = vector.shape_cast %68 : vector<1x8x32xbf16> to vector<8x32xbf16>
    %cst_42 = arith.constant dense<0.000000e+00> : vector<8x32xf32>
    %70 = tpu.matmul %67, %69, %cst_42 {dimension_numbers = #tpu.dot_dimension_numbers<[1], [0], [0], [1], [0, 0, 1, 1], [], []>} : vector<8x8xbf16>, vector<8x32xbf16>, vector<8x32xf32> -> vector<8x32xf32>
    %c1 = arith.constant 1 : index
    %c0_43 = arith.constant 0 : index
    %c0_44 = arith.constant 0 : index
    %71 = vector.load %arg5[%c1, %c0_43, %c0_44] : memref<4x32x8xbf16, #tpu.memory_space<vmem>>, vector<1x32x8xbf16>
    %72 = vector.shape_cast %71 : vector<1x32x8xbf16> to vector<32x8xbf16>
    %cst_45 = arith.constant dense<0.000000e+00> : vector<8x8xf32>
    %73 = tpu.matmul %27, %72, %cst_45 {dimension_numbers = #tpu.dot_dimension_numbers<[1], [0], [0], [1], [0, 0, 1, 1], [], []>} : vector<8x32xbf16>, vector<32x8xbf16>, vector<8x8xf32> -> vector<8x8xf32>
    %c1_46 = arith.constant 1 : index
    %c0_47 = arith.constant 0 : index
    %c0_48 = arith.constant 0 : index
    %74 = vector.load %arg6[%c1_46, %c0_47, %c0_48] : memref<4x1x8xf32, #tpu.memory_space<vmem>>, vector<1x1x8xf32>
    %75 = vector.shape_cast %74 : vector<1x1x8xf32> to vector<1x8xf32>
    %76 = vector.broadcast %75 : vector<1x8xf32> to vector<8x8xf32>
    %77 = arith.addf %73, %76 : vector<8x8xf32>
    %c1_49 = arith.constant 1 : index
    %c0_50 = arith.constant 0 : index
    %c0_51 = arith.constant 0 : index
    %78 = vector.load %arg7[%c1_49, %c0_50, %c0_51] : memref<4x32x8xbf16, #tpu.memory_space<vmem>>, vector<1x32x8xbf16>
    %79 = vector.shape_cast %78 : vector<1x32x8xbf16> to vector<32x8xbf16>
    %cst_52 = arith.constant dense<0.000000e+00> : vector<16x8xf32>
    %80 = tpu.matmul %26, %79, %cst_52 {dimension_numbers = #tpu.dot_dimension_numbers<[1], [0], [0], [1], [0, 0, 1, 1], [], []>} : vector<16x32xbf16>, vector<32x8xbf16>, vector<16x8xf32> -> vector<16x8xf32>
    %c1_53 = arith.constant 1 : index
    %c0_54 = arith.constant 0 : index
    %c0_55 = arith.constant 0 : index
    %81 = vector.load %arg8[%c1_53, %c0_54, %c0_55] : memref<4x1x8xf32, #tpu.memory_space<vmem>>, vector<1x1x8xf32>
    %82 = vector.shape_cast %81 : vector<1x1x8xf32> to vector<1x8xf32>
    %83 = vector.broadcast %82 : vector<1x8xf32> to vector<16x8xf32>
    %84 = arith.addf %80, %83 : vector<16x8xf32>
    %c1_56 = arith.constant 1 : index
    %c0_57 = arith.constant 0 : index
    %c0_58 = arith.constant 0 : index
    %85 = vector.load %arg9[%c1_56, %c0_57, %c0_58] : memref<4x32x8xbf16, #tpu.memory_space<vmem>>, vector<1x32x8xbf16>
    %86 = vector.shape_cast %85 : vector<1x32x8xbf16> to vector<32x8xbf16>
    %cst_59 = arith.constant dense<0.000000e+00> : vector<16x8xf32>
    %87 = tpu.matmul %26, %86, %cst_59 {dimension_numbers = #tpu.dot_dimension_numbers<[1], [0], [0], [1], [0, 0, 1, 1], [], []>} : vector<16x32xbf16>, vector<32x8xbf16>, vector<16x8xf32> -> vector<16x8xf32>
    %c1_60 = arith.constant 1 : index
    %c0_61 = arith.constant 0 : index
    %c0_62 = arith.constant 0 : index
    %88 = vector.load %arg10[%c1_60, %c0_61, %c0_62] : memref<4x1x8xf32, #tpu.memory_space<vmem>>, vector<1x1x8xf32>
    %89 = vector.shape_cast %88 : vector<1x1x8xf32> to vector<1x8xf32>
    %90 = vector.broadcast %89 : vector<1x8xf32> to vector<16x8xf32>
    %91 = arith.addf %87, %90 : vector<16x8xf32>
    %cst_63 = arith.constant 0.353553385 : f32
    %92 = vector.broadcast %cst_63 : f32 to vector<8x8xf32>
    %93 = arith.mulf %77, %92 : vector<8x8xf32>
    %94 = arith.truncf %93 : vector<8x8xf32> to vector<8x8xbf16>
    %95 = arith.truncf %84 : vector<16x8xf32> to vector<16x8xbf16>
    %cst_64 = arith.constant dense<0.000000e+00> : vector<8x16xf32>
    %96 = tpu.matmul %94, %95, %cst_64 {dimension_numbers = #tpu.dot_dimension_numbers<[1], [1], [0], [0], [0, 0, 1, 0], [], []>} : vector<8x8xbf16>, vector<16x8xbf16>, vector<8x16xf32> -> vector<8x16xf32>
    %cst_65 = arith.constant dense<0xFF800000> : vector<8xf32>
    %97 = vector.multi_reduction <maximumf>, %96, %cst_65 [1] : vector<8x16xf32> to vector<8xf32>
    %98 = vector.shape_cast %97 : vector<8xf32> to vector<8x1xf32>
    %99 = vector.broadcast %98 : vector<8x1xf32> to vector<8x16xf32>
    %100 = arith.subf %96, %99 : vector<8x16xf32>
    %101 = math.exp %100 : vector<8x16xf32>
    %cst_66 = arith.constant dense<0.000000e+00> : vector<8xf32>
    %102 = vector.multi_reduction <add>, %101, %cst_66 [1] : vector<8x16xf32> to vector<8xf32>
    %103 = vector.shape_cast %102 : vector<8xf32> to vector<8x1xf32>
    %104 = tpu.reciprocal %103 {approx = true} : vector<8x1xf32> -> vector<8x1xf32>
    %105 = vector.broadcast %104 : vector<8x1xf32> to vector<8x16xf32>
    %106 = arith.mulf %101, %105 : vector<8x16xf32>
    %107 = arith.truncf %106 : vector<8x16xf32> to vector<8x16xbf16>
    %108 = arith.truncf %91 : vector<16x8xf32> to vector<16x8xbf16>
    %cst_67 = arith.constant dense<0.000000e+00> : vector<8x8xf32>
    %109 = tpu.matmul %107, %108, %cst_67 {dimension_numbers = #tpu.dot_dimension_numbers<[1], [0], [0], [1], [0, 0, 1, 1], [], []>} : vector<8x16xbf16>, vector<16x8xbf16>, vector<8x8xf32> -> vector<8x8xf32>
    %110 = arith.truncf %109 : vector<8x8xf32> to vector<8x8xbf16>
    %c1_68 = arith.constant 1 : index
    %c0_69 = arith.constant 0 : index
    %c0_70 = arith.constant 0 : index
    %111 = vector.load %arg11[%c1_68, %c0_69, %c0_70] : memref<4x8x32xbf16, #tpu.memory_space<vmem>>, vector<1x8x32xbf16>
    %112 = vector.shape_cast %111 : vector<1x8x32xbf16> to vector<8x32xbf16>
    %cst_71 = arith.constant dense<0.000000e+00> : vector<8x32xf32>
    %113 = tpu.matmul %110, %112, %cst_71 {dimension_numbers = #tpu.dot_dimension_numbers<[1], [0], [0], [1], [0, 0, 1, 1], [], []>} : vector<8x8xbf16>, vector<8x32xbf16>, vector<8x32xf32> -> vector<8x32xf32>
    %114 = arith.addf %70, %113 : vector<8x32xf32>
    %c2 = arith.constant 2 : index
    %c0_72 = arith.constant 0 : index
    %c0_73 = arith.constant 0 : index
    %115 = vector.load %arg5[%c2, %c0_72, %c0_73] : memref<4x32x8xbf16, #tpu.memory_space<vmem>>, vector<1x32x8xbf16>
    %116 = vector.shape_cast %115 : vector<1x32x8xbf16> to vector<32x8xbf16>
    %cst_74 = arith.constant dense<0.000000e+00> : vector<8x8xf32>
    %117 = tpu.matmul %27, %116, %cst_74 {dimension_numbers = #tpu.dot_dimension_numbers<[1], [0], [0], [1], [0, 0, 1, 1], [], []>} : vector<8x32xbf16>, vector<32x8xbf16>, vector<8x8xf32> -> vector<8x8xf32>
    %c2_75 = arith.constant 2 : index
    %c0_76 = arith.constant 0 : index
    %c0_77 = arith.constant 0 : index
    %118 = vector.load %arg6[%c2_75, %c0_76, %c0_77] : memref<4x1x8xf32, #tpu.memory_space<vmem>>, vector<1x1x8xf32>
    %119 = vector.shape_cast %118 : vector<1x1x8xf32> to vector<1x8xf32>
    %120 = vector.broadcast %119 : vector<1x8xf32> to vector<8x8xf32>
    %121 = arith.addf %117, %120 : vector<8x8xf32>
    %c2_78 = arith.constant 2 : index
    %c0_79 = arith.constant 0 : index
    %c0_80 = arith.constant 0 : index
    %122 = vector.load %arg7[%c2_78, %c0_79, %c0_80] : memref<4x32x8xbf16, #tpu.memory_space<vmem>>, vector<1x32x8xbf16>
    %123 = vector.shape_cast %122 : vector<1x32x8xbf16> to vector<32x8xbf16>
    %cst_81 = arith.constant dense<0.000000e+00> : vector<16x8xf32>
    %124 = tpu.matmul %26, %123, %cst_81 {dimension_numbers = #tpu.dot_dimension_numbers<[1], [0], [0], [1], [0, 0, 1, 1], [], []>} : vector<16x32xbf16>, vector<32x8xbf16>, vector<16x8xf32> -> vector<16x8xf32>
    %c2_82 = arith.constant 2 : index
    %c0_83 = arith.constant 0 : index
    %c0_84 = arith.constant 0 : index
    %125 = vector.load %arg8[%c2_82, %c0_83, %c0_84] : memref<4x1x8xf32, #tpu.memory_space<vmem>>, vector<1x1x8xf32>
    %126 = vector.shape_cast %125 : vector<1x1x8xf32> to vector<1x8xf32>
    %127 = vector.broadcast %126 : vector<1x8xf32> to vector<16x8xf32>
    %128 = arith.addf %124, %127 : vector<16x8xf32>
    %c2_85 = arith.constant 2 : index
    %c0_86 = arith.constant 0 : index
    %c0_87 = arith.constant 0 : index
    %129 = vector.load %arg9[%c2_85, %c0_86, %c0_87] : memref<4x32x8xbf16, #tpu.memory_space<vmem>>, vector<1x32x8xbf16>
    %130 = vector.shape_cast %129 : vector<1x32x8xbf16> to vector<32x8xbf16>
    %cst_88 = arith.constant dense<0.000000e+00> : vector<16x8xf32>
    %131 = tpu.matmul %26, %130, %cst_88 {dimension_numbers = #tpu.dot_dimension_numbers<[1], [0], [0], [1], [0, 0, 1, 1], [], []>} : vector<16x32xbf16>, vector<32x8xbf16>, vector<16x8xf32> -> vector<16x8xf32>
    %c2_89 = arith.constant 2 : index
    %c0_90 = arith.constant 0 : index
    %c0_91 = arith.constant 0 : index
    %132 = vector.load %arg10[%c2_89, %c0_90, %c0_91] : memref<4x1x8xf32, #tpu.memory_space<vmem>>, vector<1x1x8xf32>
    %133 = vector.shape_cast %132 : vector<1x1x8xf32> to vector<1x8xf32>
    %134 = vector.broadcast %133 : vector<1x8xf32> to vector<16x8xf32>
    %135 = arith.addf %131, %134 : vector<16x8xf32>
    %cst_92 = arith.constant 0.353553385 : f32
    %136 = vector.broadcast %cst_92 : f32 to vector<8x8xf32>
    %137 = arith.mulf %121, %136 : vector<8x8xf32>
    %138 = arith.truncf %137 : vector<8x8xf32> to vector<8x8xbf16>
    %139 = arith.truncf %128 : vector<16x8xf32> to vector<16x8xbf16>
    %cst_93 = arith.constant dense<0.000000e+00> : vector<8x16xf32>
    %140 = tpu.matmul %138, %139, %cst_93 {dimension_numbers = #tpu.dot_dimension_numbers<[1], [1], [0], [0], [0, 0, 1, 0], [], []>} : vector<8x8xbf16>, vector<16x8xbf16>, vector<8x16xf32> -> vector<8x16xf32>
    %cst_94 = arith.constant dense<0xFF800000> : vector<8xf32>
    %141 = vector.multi_reduction <maximumf>, %140, %cst_94 [1] : vector<8x16xf32> to vector<8xf32>
    %142 = vector.shape_cast %141 : vector<8xf32> to vector<8x1xf32>
    %143 = vector.broadcast %142 : vector<8x1xf32> to vector<8x16xf32>
    %144 = arith.subf %140, %143 : vector<8x16xf32>
    %145 = math.exp %144 : vector<8x16xf32>
    %cst_95 = arith.constant dense<0.000000e+00> : vector<8xf32>
    %146 = vector.multi_reduction <add>, %145, %cst_95 [1] : vector<8x16xf32> to vector<8xf32>
    %147 = vector.shape_cast %146 : vector<8xf32> to vector<8x1xf32>
    %148 = tpu.reciprocal %147 {approx = true} : vector<8x1xf32> -> vector<8x1xf32>
    %149 = vector.broadcast %148 : vector<8x1xf32> to vector<8x16xf32>
    %150 = arith.mulf %145, %149 : vector<8x16xf32>
    %151 = arith.truncf %150 : vector<8x16xf32> to vector<8x16xbf16>
    %152 = arith.truncf %135 : vector<16x8xf32> to vector<16x8xbf16>
    %cst_96 = arith.constant dense<0.000000e+00> : vector<8x8xf32>
    %153 = tpu.matmul %151, %152, %cst_96 {dimension_numbers = #tpu.dot_dimension_numbers<[1], [0], [0], [1], [0, 0, 1, 1], [], []>} : vector<8x16xbf16>, vector<16x8xbf16>, vector<8x8xf32> -> vector<8x8xf32>
    %154 = arith.truncf %153 : vector<8x8xf32> to vector<8x8xbf16>
    %c2_97 = arith.constant 2 : index
    %c0_98 = arith.constant 0 : index
    %c0_99 = arith.constant 0 : index
    %155 = vector.load %arg11[%c2_97, %c0_98, %c0_99] : memref<4x8x32xbf16, #tpu.memory_space<vmem>>, vector<1x8x32xbf16>
    %156 = vector.shape_cast %155 : vector<1x8x32xbf16> to vector<8x32xbf16>
    %cst_100 = arith.constant dense<0.000000e+00> : vector<8x32xf32>
    %157 = tpu.matmul %154, %156, %cst_100 {dimension_numbers = #tpu.dot_dimension_numbers<[1], [0], [0], [1], [0, 0, 1, 1], [], []>} : vector<8x8xbf16>, vector<8x32xbf16>, vector<8x32xf32> -> vector<8x32xf32>
    %158 = arith.addf %114, %157 : vector<8x32xf32>
    %c3 = arith.constant 3 : index
    %c0_101 = arith.constant 0 : index
    %c0_102 = arith.constant 0 : index
    %159 = vector.load %arg5[%c3, %c0_101, %c0_102] : memref<4x32x8xbf16, #tpu.memory_space<vmem>>, vector<1x32x8xbf16>
    %160 = vector.shape_cast %159 : vector<1x32x8xbf16> to vector<32x8xbf16>
    %cst_103 = arith.constant dense<0.000000e+00> : vector<8x8xf32>
    %161 = tpu.matmul %27, %160, %cst_103 {dimension_numbers = #tpu.dot_dimension_numbers<[1], [0], [0], [1], [0, 0, 1, 1], [], []>} : vector<8x32xbf16>, vector<32x8xbf16>, vector<8x8xf32> -> vector<8x8xf32>
    %c3_104 = arith.constant 3 : index
    %c0_105 = arith.constant 0 : index
    %c0_106 = arith.constant 0 : index
    %162 = vector.load %arg6[%c3_104, %c0_105, %c0_106] : memref<4x1x8xf32, #tpu.memory_space<vmem>>, vector<1x1x8xf32>
    %163 = vector.shape_cast %162 : vector<1x1x8xf32> to vector<1x8xf32>
    %164 = vector.broadcast %163 : vector<1x8xf32> to vector<8x8xf32>
    %165 = arith.addf %161, %164 : vector<8x8xf32>
    %c3_107 = arith.constant 3 : index
    %c0_108 = arith.constant 0 : index
    %c0_109 = arith.constant 0 : index
    %166 = vector.load %arg7[%c3_107, %c0_108, %c0_109] : memref<4x32x8xbf16, #tpu.memory_space<vmem>>, vector<1x32x8xbf16>
    %167 = vector.shape_cast %166 : vector<1x32x8xbf16> to vector<32x8xbf16>
    %cst_110 = arith.constant dense<0.000000e+00> : vector<16x8xf32>
    %168 = tpu.matmul %26, %167, %cst_110 {dimension_numbers = #tpu.dot_dimension_numbers<[1], [0], [0], [1], [0, 0, 1, 1], [], []>} : vector<16x32xbf16>, vector<32x8xbf16>, vector<16x8xf32> -> vector<16x8xf32>
    %c3_111 = arith.constant 3 : index
    %c0_112 = arith.constant 0 : index
    %c0_113 = arith.constant 0 : index
    %169 = vector.load %arg8[%c3_111, %c0_112, %c0_113] : memref<4x1x8xf32, #tpu.memory_space<vmem>>, vector<1x1x8xf32>
    %170 = vector.shape_cast %169 : vector<1x1x8xf32> to vector<1x8xf32>
    %171 = vector.broadcast %170 : vector<1x8xf32> to vector<16x8xf32>
    %172 = arith.addf %168, %171 : vector<16x8xf32>
    %c3_114 = arith.constant 3 : index
    %c0_115 = arith.constant 0 : index
    %c0_116 = arith.constant 0 : index
    %173 = vector.load %arg9[%c3_114, %c0_115, %c0_116] : memref<4x32x8xbf16, #tpu.memory_space<vmem>>, vector<1x32x8xbf16>
    %174 = vector.shape_cast %173 : vector<1x32x8xbf16> to vector<32x8xbf16>
    %cst_117 = arith.constant dense<0.000000e+00> : vector<16x8xf32>
    %175 = tpu.matmul %26, %174, %cst_117 {dimension_numbers = #tpu.dot_dimension_numbers<[1], [0], [0], [1], [0, 0, 1, 1], [], []>} : vector<16x32xbf16>, vector<32x8xbf16>, vector<16x8xf32> -> vector<16x8xf32>
    %c3_118 = arith.constant 3 : index
    %c0_119 = arith.constant 0 : index
    %c0_120 = arith.constant 0 : index
    %176 = vector.load %arg10[%c3_118, %c0_119, %c0_120] : memref<4x1x8xf32, #tpu.memory_space<vmem>>, vector<1x1x8xf32>
    %177 = vector.shape_cast %176 : vector<1x1x8xf32> to vector<1x8xf32>
    %178 = vector.broadcast %177 : vector<1x8xf32> to vector<16x8xf32>
    %179 = arith.addf %175, %178 : vector<16x8xf32>
    %cst_121 = arith.constant 0.353553385 : f32
    %180 = vector.broadcast %cst_121 : f32 to vector<8x8xf32>
    %181 = arith.mulf %165, %180 : vector<8x8xf32>
    %182 = arith.truncf %181 : vector<8x8xf32> to vector<8x8xbf16>
    %183 = arith.truncf %172 : vector<16x8xf32> to vector<16x8xbf16>
    %cst_122 = arith.constant dense<0.000000e+00> : vector<8x16xf32>
    %184 = tpu.matmul %182, %183, %cst_122 {dimension_numbers = #tpu.dot_dimension_numbers<[1], [1], [0], [0], [0, 0, 1, 0], [], []>} : vector<8x8xbf16>, vector<16x8xbf16>, vector<8x16xf32> -> vector<8x16xf32>
    %cst_123 = arith.constant dense<0xFF800000> : vector<8xf32>
    %185 = vector.multi_reduction <maximumf>, %184, %cst_123 [1] : vector<8x16xf32> to vector<8xf32>
    %186 = vector.shape_cast %185 : vector<8xf32> to vector<8x1xf32>
    %187 = vector.broadcast %186 : vector<8x1xf32> to vector<8x16xf32>
    %188 = arith.subf %184, %187 : vector<8x16xf32>
    %189 = math.exp %188 : vector<8x16xf32>
    %cst_124 = arith.constant dense<0.000000e+00> : vector<8xf32>
    %190 = vector.multi_reduction <add>, %189, %cst_124 [1] : vector<8x16xf32> to vector<8xf32>
    %191 = vector.shape_cast %190 : vector<8xf32> to vector<8x1xf32>
    %192 = tpu.reciprocal %191 {approx = true} : vector<8x1xf32> -> vector<8x1xf32>
    %193 = vector.broadcast %192 : vector<8x1xf32> to vector<8x16xf32>
    %194 = arith.mulf %189, %193 : vector<8x16xf32>
    %195 = arith.truncf %194 : vector<8x16xf32> to vector<8x16xbf16>
    %196 = arith.truncf %179 : vector<16x8xf32> to vector<16x8xbf16>
    %cst_125 = arith.constant dense<0.000000e+00> : vector<8x8xf32>
    %197 = tpu.matmul %195, %196, %cst_125 {dimension_numbers = #tpu.dot_dimension_numbers<[1], [0], [0], [1], [0, 0, 1, 1], [], []>} : vector<8x16xbf16>, vector<16x8xbf16>, vector<8x8xf32> -> vector<8x8xf32>
    %198 = arith.truncf %197 : vector<8x8xf32> to vector<8x8xbf16>
    %c3_126 = arith.constant 3 : index
    %c0_127 = arith.constant 0 : index
    %c0_128 = arith.constant 0 : index
    %199 = vector.load %arg11[%c3_126, %c0_127, %c0_128] : memref<4x8x32xbf16, #tpu.memory_space<vmem>>, vector<1x8x32xbf16>
    %200 = vector.shape_cast %199 : vector<1x8x32xbf16> to vector<8x32xbf16>
    %cst_129 = arith.constant dense<0.000000e+00> : vector<8x32xf32>
    %201 = tpu.matmul %198, %200, %cst_129 {dimension_numbers = #tpu.dot_dimension_numbers<[1], [0], [0], [1], [0, 0, 1, 1], [], []>} : vector<8x8xbf16>, vector<8x32xbf16>, vector<8x32xf32> -> vector<8x32xf32>
    %202 = arith.addf %158, %201 : vector<8x32xf32>
    %c0_130 = arith.constant 0 : index
    %c0_131 = arith.constant 0 : index
    %203 = vector.load %arg12[%c0_130, %c0_131] : memref<1x32xf32, #tpu.memory_space<vmem>>, vector<1x32xf32>
    %204 = vector.broadcast %203 : vector<1x32xf32> to vector<8x32xf32>
    %205 = arith.addf %202, %204 : vector<8x32xf32>
    %206 = arith.addf %3, %205 : vector<8x32xf32>
    %c0_132 = arith.constant 0 : index
    %c0_133 = arith.constant 0 : index
    %c0_134 = arith.constant 0 : index
    %207 = vector.load %arg14[%c0_132, %c0_133, %c0_134] : memref<1x8x32xf32, #tpu.memory_space<vmem>>, vector<1x8x32xf32>
    %208 = vector.shape_cast %207 : vector<1x8x32xf32> to vector<8x32xf32>
    %209 = vector.shape_cast %206 : vector<8x32xf32> to vector<1x8x32xf32>
    tpu.vector_store %arg14[%c0_132, %c0_133, %c0_134], %209 {strides = array<i32>} : memref<1x8x32xf32, #tpu.memory_space<vmem>>, vector<1x8x32xf32>,
    %210 = arith.truncf %206 : vector<8x32xf32> to vector<8x32xbf16>
    %c0_135 = arith.constant 0 : index
    %c0_136 = arith.constant 0 : index
    %c0_137 = arith.constant 0 : index
    %211 = vector.load %arg5[%c0_135, %c0_136, %c0_137] : memref<4x32x8xbf16, #tpu.memory_space<vmem>>, vector<1x32x8xbf16>
    %212 = vector.shape_cast %211 : vector<1x32x8xbf16> to vector<32x8xbf16>
    %cst_138 = arith.constant dense<0.000000e+00> : vector<16x8xf32>
    %213 = tpu.matmul %26, %212, %cst_138 {dimension_numbers = #tpu.dot_dimension_numbers<[1], [0], [0], [1], [0, 0, 1, 1], [], []>} : vector<16x32xbf16>, vector<32x8xbf16>, vector<16x8xf32> -> vector<16x8xf32>
    %c0_139 = arith.constant 0 : index
    %c0_140 = arith.constant 0 : index
    %c0_141 = arith.constant 0 : index
    %214 = vector.load %arg6[%c0_139, %c0_140, %c0_141] : memref<4x1x8xf32, #tpu.memory_space<vmem>>, vector<1x1x8xf32>
    %215 = vector.shape_cast %214 : vector<1x1x8xf32> to vector<1x8xf32>
    %216 = vector.broadcast %215 : vector<1x8xf32> to vector<16x8xf32>
    %217 = arith.addf %213, %216 : vector<16x8xf32>
    %c0_142 = arith.constant 0 : index
    %c0_143 = arith.constant 0 : index
    %c0_144 = arith.constant 0 : index
    %218 = vector.load %arg7[%c0_142, %c0_143, %c0_144] : memref<4x32x8xbf16, #tpu.memory_space<vmem>>, vector<1x32x8xbf16>
    %219 = vector.shape_cast %218 : vector<1x32x8xbf16> to vector<32x8xbf16>
    %cst_145 = arith.constant dense<0.000000e+00> : vector<8x8xf32>
    %220 = tpu.matmul %210, %219, %cst_145 {dimension_numbers = #tpu.dot_dimension_numbers<[1], [0], [0], [1], [0, 0, 1, 1], [], []>} : vector<8x32xbf16>, vector<32x8xbf16>, vector<8x8xf32> -> vector<8x8xf32>
    %c0_146 = arith.constant 0 : index
    %c0_147 = arith.constant 0 : index
    %c0_148 = arith.constant 0 : index
    %221 = vector.load %arg8[%c0_146, %c0_147, %c0_148] : memref<4x1x8xf32, #tpu.memory_space<vmem>>, vector<1x1x8xf32>
    %222 = vector.shape_cast %221 : vector<1x1x8xf32> to vector<1x8xf32>
    %223 = vector.broadcast %222 : vector<1x8xf32> to vector<8x8xf32>
    %224 = arith.addf %220, %223 : vector<8x8xf32>
    %c0_149 = arith.constant 0 : index
    %c0_150 = arith.constant 0 : index
    %c0_151 = arith.constant 0 : index
    %225 = vector.load %arg9[%c0_149, %c0_150, %c0_151] : memref<4x32x8xbf16, #tpu.memory_space<vmem>>, vector<1x32x8xbf16>
    %226 = vector.shape_cast %225 : vector<1x32x8xbf16> to vector<32x8xbf16>
    %cst_152 = arith.constant dense<0.000000e+00> : vector<8x8xf32>
    %227 = tpu.matmul %210, %226, %cst_152 {dimension_numbers = #tpu.dot_dimension_numbers<[1], [0], [0], [1], [0, 0, 1, 1], [], []>} : vector<8x32xbf16>, vector<32x8xbf16>, vector<8x8xf32> -> vector<8x8xf32>
    %c0_153 = arith.constant 0 : index
    %c0_154 = arith.constant 0 : index
    %c0_155 = arith.constant 0 : index
    %228 = vector.load %arg10[%c0_153, %c0_154, %c0_155] : memref<4x1x8xf32, #tpu.memory_space<vmem>>, vector<1x1x8xf32>
    %229 = vector.shape_cast %228 : vector<1x1x8xf32> to vector<1x8xf32>
    %230 = vector.broadcast %229 : vector<1x8xf32> to vector<8x8xf32>
    %231 = arith.addf %227, %230 : vector<8x8xf32>
    %cst_156 = arith.constant 0.353553385 : f32
    %232 = vector.broadcast %cst_156 : f32 to vector<16x8xf32>
    %233 = arith.mulf %217, %232 : vector<16x8xf32>
    %234 = arith.truncf %233 : vector<16x8xf32> to vector<16x8xbf16>
    %235 = arith.truncf %224 : vector<8x8xf32> to vector<8x8xbf16>
    %cst_157 = arith.constant dense<0.000000e+00> : vector<16x8xf32>
    %236 = tpu.matmul %234, %235, %cst_157 {dimension_numbers = #tpu.dot_dimension_numbers<[1], [1], [0], [0], [0, 0, 1, 0], [], []>} : vector<16x8xbf16>, vector<8x8xbf16>, vector<16x8xf32> -> vector<16x8xf32>
    %cst_158 = arith.constant dense<0xFF800000> : vector<16xf32>
    %237 = vector.multi_reduction <maximumf>, %236, %cst_158 [1] : vector<16x8xf32> to vector<16xf32>
    %238 = vector.shape_cast %237 : vector<16xf32> to vector<16x1xf32>
    %239 = vector.broadcast %238 : vector<16x1xf32> to vector<16x8xf32>
    %240 = arith.subf %236, %239 : vector<16x8xf32>
    %241 = math.exp %240 : vector<16x8xf32>
    %cst_159 = arith.constant dense<0.000000e+00> : vector<16xf32>
    %242 = vector.multi_reduction <add>, %241, %cst_159 [1] : vector<16x8xf32> to vector<16xf32>
    %243 = vector.shape_cast %242 : vector<16xf32> to vector<16x1xf32>
    %244 = tpu.reciprocal %243 {approx = true} : vector<16x1xf32> -> vector<16x1xf32>
    %245 = vector.broadcast %244 : vector<16x1xf32> to vector<16x8xf32>
    %246 = arith.mulf %241, %245 : vector<16x8xf32>
    %247 = arith.truncf %246 : vector<16x8xf32> to vector<16x8xbf16>
    %248 = arith.truncf %231 : vector<8x8xf32> to vector<8x8xbf16>
    %cst_160 = arith.constant dense<0.000000e+00> : vector<16x8xf32>
    %249 = tpu.matmul %247, %248, %cst_160 {dimension_numbers = #tpu.dot_dimension_numbers<[1], [0], [0], [1], [0, 0, 1, 1], [], []>} : vector<16x8xbf16>, vector<8x8xbf16>, vector<16x8xf32> -> vector<16x8xf32>
    %250 = arith.truncf %249 : vector<16x8xf32> to vector<16x8xbf16>
    %c0_161 = arith.constant 0 : index
    %c0_162 = arith.constant 0 : index
    %c0_163 = arith.constant 0 : index
    %251 = vector.load %arg11[%c0_161, %c0_162, %c0_163] : memref<4x8x32xbf16, #tpu.memory_space<vmem>>, vector<1x8x32xbf16>
    %252 = vector.shape_cast %251 : vector<1x8x32xbf16> to vector<8x32xbf16>
    %cst_164 = arith.constant dense<0.000000e+00> : vector<16x32xf32>
    %253 = tpu.matmul %250, %252, %cst_164 {dimension_numbers = #tpu.dot_dimension_numbers<[1], [0], [0], [1], [0, 0, 1, 1], [], []>} : vector<16x8xbf16>, vector<8x32xbf16>, vector<16x32xf32> -> vector<16x32xf32>
    %c1_165 = arith.constant 1 : index
    %c0_166 = arith.constant 0 : index
    %c0_167 = arith.constant 0 : index
    %254 = vector.load %arg5[%c1_165, %c0_166, %c0_167] : memref<4x32x8xbf16, #tpu.memory_space<vmem>>, vector<1x32x8xbf16>
    %255 = vector.shape_cast %254 : vector<1x32x8xbf16> to vector<32x8xbf16>
    %cst_168 = arith.constant dense<0.000000e+00> : vector<16x8xf32>
    %256 = tpu.matmul %26, %255, %cst_168 {dimension_numbers = #tpu.dot_dimension_numbers<[1], [0], [0], [1], [0, 0, 1, 1], [], []>} : vector<16x32xbf16>, vector<32x8xbf16>, vector<16x8xf32> -> vector<16x8xf32>
    %c1_169 = arith.constant 1 : index
    %c0_170 = arith.constant 0 : index
    %c0_171 = arith.constant 0 : index
    %257 = vector.load %arg6[%c1_169, %c0_170, %c0_171] : memref<4x1x8xf32, #tpu.memory_space<vmem>>, vector<1x1x8xf32>
    %258 = vector.shape_cast %257 : vector<1x1x8xf32> to vector<1x8xf32>
    %259 = vector.broadcast %258 : vector<1x8xf32> to vector<16x8xf32>
    %260 = arith.addf %256, %259 : vector<16x8xf32>
    %c1_172 = arith.constant 1 : index
    %c0_173 = arith.constant 0 : index
    %c0_174 = arith.constant 0 : index
    %261 = vector.load %arg7[%c1_172, %c0_173, %c0_174] : memref<4x32x8xbf16, #tpu.memory_space<vmem>>, vector<1x32x8xbf16>
    %262 = vector.shape_cast %261 : vector<1x32x8xbf16> to vector<32x8xbf16>
    %cst_175 = arith.constant dense<0.000000e+00> : vector<8x8xf32>
    %263 = tpu.matmul %210, %262, %cst_175 {dimension_numbers = #tpu.dot_dimension_numbers<[1], [0], [0], [1], [0, 0, 1, 1], [], []>} : vector<8x32xbf16>, vector<32x8xbf16>, vector<8x8xf32> -> vector<8x8xf32>
    %c1_176 = arith.constant 1 : index
    %c0_177 = arith.constant 0 : index
    %c0_178 = arith.constant 0 : index
    %264 = vector.load %arg8[%c1_176, %c0_177, %c0_178] : memref<4x1x8xf32, #tpu.memory_space<vmem>>, vector<1x1x8xf32>
    %265 = vector.shape_cast %264 : vector<1x1x8xf32> to vector<1x8xf32>
    %266 = vector.broadcast %265 : vector<1x8xf32> to vector<8x8xf32>
    %267 = arith.addf %263, %266 : vector<8x8xf32>
    %c1_179 = arith.constant 1 : index
    %c0_180 = arith.constant 0 : index
    %c0_181 = arith.constant 0 : index
    %268 = vector.load %arg9[%c1_179, %c0_180, %c0_181] : memref<4x32x8xbf16, #tpu.memory_space<vmem>>, vector<1x32x8xbf16>
    %269 = vector.shape_cast %268 : vector<1x32x8xbf16> to vector<32x8xbf16>
    %cst_182 = arith.constant dense<0.000000e+00> : vector<8x8xf32>
    %270 = tpu.matmul %210, %269, %cst_182 {dimension_numbers = #tpu.dot_dimension_numbers<[1], [0], [0], [1], [0, 0, 1, 1], [], []>} : vector<8x32xbf16>, vector<32x8xbf16>, vector<8x8xf32> -> vector<8x8xf32>
    %c1_183 = arith.constant 1 : index
    %c0_184 = arith.constant 0 : index
    %c0_185 = arith.constant 0 : index
    %271 = vector.load %arg10[%c1_183, %c0_184, %c0_185] : memref<4x1x8xf32, #tpu.memory_space<vmem>>, vector<1x1x8xf32>
    %272 = vector.shape_cast %271 : vector<1x1x8xf32> to vector<1x8xf32>
    %273 = vector.broadcast %272 : vector<1x8xf32> to vector<8x8xf32>
    %274 = arith.addf %270, %273 : vector<8x8xf32>
    %cst_186 = arith.constant 0.353553385 : f32
    %275 = vector.broadcast %cst_186 : f32 to vector<16x8xf32>
    %276 = arith.mulf %260, %275 : vector<16x8xf32>
    %277 = arith.truncf %276 : vector<16x8xf32> to vector<16x8xbf16>
    %278 = arith.truncf %267 : vector<8x8xf32> to vector<8x8xbf16>
    %cst_187 = arith.constant dense<0.000000e+00> : vector<16x8xf32>
    %279 = tpu.matmul %277, %278, %cst_187 {dimension_numbers = #tpu.dot_dimension_numbers<[1], [1], [0], [0], [0, 0, 1, 0], [], []>} : vector<16x8xbf16>, vector<8x8xbf16>, vector<16x8xf32> -> vector<16x8xf32>
    %cst_188 = arith.constant dense<0xFF800000> : vector<16xf32>
    %280 = vector.multi_reduction <maximumf>, %279, %cst_188 [1] : vector<16x8xf32> to vector<16xf32>
    %281 = vector.shape_cast %280 : vector<16xf32> to vector<16x1xf32>
    %282 = vector.broadcast %281 : vector<16x1xf32> to vector<16x8xf32>
    %283 = arith.subf %279, %282 : vector<16x8xf32>
    %284 = math.exp %283 : vector<16x8xf32>
    %cst_189 = arith.constant dense<0.000000e+00> : vector<16xf32>
    %285 = vector.multi_reduction <add>, %284, %cst_189 [1] : vector<16x8xf32> to vector<16xf32>
    %286 = vector.shape_cast %285 : vector<16xf32> to vector<16x1xf32>
    %287 = tpu.reciprocal %286 {approx = true} : vector<16x1xf32> -> vector<16x1xf32>
    %288 = vector.broadcast %287 : vector<16x1xf32> to vector<16x8xf32>
    %289 = arith.mulf %284, %288 : vector<16x8xf32>
    %290 = arith.truncf %289 : vector<16x8xf32> to vector<16x8xbf16>
    %291 = arith.truncf %274 : vector<8x8xf32> to vector<8x8xbf16>
    %cst_190 = arith.constant dense<0.000000e+00> : vector<16x8xf32>
    %292 = tpu.matmul %290, %291, %cst_190 {dimension_numbers = #tpu.dot_dimension_numbers<[1], [0], [0], [1], [0, 0, 1, 1], [], []>} : vector<16x8xbf16>, vector<8x8xbf16>, vector<16x8xf32> -> vector<16x8xf32>
    %293 = arith.truncf %292 : vector<16x8xf32> to vector<16x8xbf16>
    %c1_191 = arith.constant 1 : index
    %c0_192 = arith.constant 0 : index
    %c0_193 = arith.constant 0 : index
    %294 = vector.load %arg11[%c1_191, %c0_192, %c0_193] : memref<4x8x32xbf16, #tpu.memory_space<vmem>>, vector<1x8x32xbf16>
    %295 = vector.shape_cast %294 : vector<1x8x32xbf16> to vector<8x32xbf16>
    %cst_194 = arith.constant dense<0.000000e+00> : vector<16x32xf32>
    %296 = tpu.matmul %293, %295, %cst_194 {dimension_numbers = #tpu.dot_dimension_numbers<[1], [0], [0], [1], [0, 0, 1, 1], [], []>} : vector<16x8xbf16>, vector<8x32xbf16>, vector<16x32xf32> -> vector<16x32xf32>
    %297 = arith.addf %253, %296 : vector<16x32xf32>
    %c2_195 = arith.constant 2 : index
    %c0_196 = arith.constant 0 : index
    %c0_197 = arith.constant 0 : index
    %298 = vector.load %arg5[%c2_195, %c0_196, %c0_197] : memref<4x32x8xbf16, #tpu.memory_space<vmem>>, vector<1x32x8xbf16>
    %299 = vector.shape_cast %298 : vector<1x32x8xbf16> to vector<32x8xbf16>
    %cst_198 = arith.constant dense<0.000000e+00> : vector<16x8xf32>
    %300 = tpu.matmul %26, %299, %cst_198 {dimension_numbers = #tpu.dot_dimension_numbers<[1], [0], [0], [1], [0, 0, 1, 1], [], []>} : vector<16x32xbf16>, vector<32x8xbf16>, vector<16x8xf32> -> vector<16x8xf32>
    %c2_199 = arith.constant 2 : index
    %c0_200 = arith.constant 0 : index
    %c0_201 = arith.constant 0 : index
    %301 = vector.load %arg6[%c2_199, %c0_200, %c0_201] : memref<4x1x8xf32, #tpu.memory_space<vmem>>, vector<1x1x8xf32>
    %302 = vector.shape_cast %301 : vector<1x1x8xf32> to vector<1x8xf32>
    %303 = vector.broadcast %302 : vector<1x8xf32> to vector<16x8xf32>
    %304 = arith.addf %300, %303 : vector<16x8xf32>
    %c2_202 = arith.constant 2 : index
    %c0_203 = arith.constant 0 : index
    %c0_204 = arith.constant 0 : index
    %305 = vector.load %arg7[%c2_202, %c0_203, %c0_204] : memref<4x32x8xbf16, #tpu.memory_space<vmem>>, vector<1x32x8xbf16>
    %306 = vector.shape_cast %305 : vector<1x32x8xbf16> to vector<32x8xbf16>
    %cst_205 = arith.constant dense<0.000000e+00> : vector<8x8xf32>
    %307 = tpu.matmul %210, %306, %cst_205 {dimension_numbers = #tpu.dot_dimension_numbers<[1], [0], [0], [1], [0, 0, 1, 1], [], []>} : vector<8x32xbf16>, vector<32x8xbf16>, vector<8x8xf32> -> vector<8x8xf32>
    %c2_206 = arith.constant 2 : index
    %c0_207 = arith.constant 0 : index
    %c0_208 = arith.constant 0 : index
    %308 = vector.load %arg8[%c2_206, %c0_207, %c0_208] : memref<4x1x8xf32, #tpu.memory_space<vmem>>, vector<1x1x8xf32>
    %309 = vector.shape_cast %308 : vector<1x1x8xf32> to vector<1x8xf32>
    %310 = vector.broadcast %309 : vector<1x8xf32> to vector<8x8xf32>
    %311 = arith.addf %307, %310 : vector<8x8xf32>
    %c2_209 = arith.constant 2 : index
    %c0_210 = arith.constant 0 : index
    %c0_211 = arith.constant 0 : index
    %312 = vector.load %arg9[%c2_209, %c0_210, %c0_211] : memref<4x32x8xbf16, #tpu.memory_space<vmem>>, vector<1x32x8xbf16>
    %313 = vector.shape_cast %312 : vector<1x32x8xbf16> to vector<32x8xbf16>
    %cst_212 = arith.constant dense<0.000000e+00> : vector<8x8xf32>
    %314 = tpu.matmul %210, %313, %cst_212 {dimension_numbers = #tpu.dot_dimension_numbers<[1], [0], [0], [1], [0, 0, 1, 1], [], []>} : vector<8x32xbf16>, vector<32x8xbf16>, vector<8x8xf32> -> vector<8x8xf32>
    %c2_213 = arith.constant 2 : index
    %c0_214 = arith.constant 0 : index
    %c0_215 = arith.constant 0 : index
    %315 = vector.load %arg10[%c2_213, %c0_214, %c0_215] : memref<4x1x8xf32, #tpu.memory_space<vmem>>, vector<1x1x8xf32>
    %316 = vector.shape_cast %315 : vector<1x1x8xf32> to vector<1x8xf32>
    %317 = vector.broadcast %316 : vector<1x8xf32> to vector<8x8xf32>
    %318 = arith.addf %314, %317 : vector<8x8xf32>
    %cst_216 = arith.constant 0.353553385 : f32
    %319 = vector.broadcast %cst_216 : f32 to vector<16x8xf32>
    %320 = arith.mulf %304, %319 : vector<16x8xf32>
    %321 = arith.truncf %320 : vector<16x8xf32> to vector<16x8xbf16>
    %322 = arith.truncf %311 : vector<8x8xf32> to vector<8x8xbf16>
    %cst_217 = arith.constant dense<0.000000e+00> : vector<16x8xf32>
    %323 = tpu.matmul %321, %322, %cst_217 {dimension_numbers = #tpu.dot_dimension_numbers<[1], [1], [0], [0], [0, 0, 1, 0], [], []>} : vector<16x8xbf16>, vector<8x8xbf16>, vector<16x8xf32> -> vector<16x8xf32>
    %cst_218 = arith.constant dense<0xFF800000> : vector<16xf32>
    %324 = vector.multi_reduction <maximumf>, %323, %cst_218 [1] : vector<16x8xf32> to vector<16xf32>
    %325 = vector.shape_cast %324 : vector<16xf32> to vector<16x1xf32>
    %326 = vector.broadcast %325 : vector<16x1xf32> to vector<16x8xf32>
    %327 = arith.subf %323, %326 : vector<16x8xf32>
    %328 = math.exp %327 : vector<16x8xf32>
    %cst_219 = arith.constant dense<0.000000e+00> : vector<16xf32>
    %329 = vector.multi_reduction <add>, %328, %cst_219 [1] : vector<16x8xf32> to vector<16xf32>
    %330 = vector.shape_cast %329 : vector<16xf32> to vector<16x1xf32>
    %331 = tpu.reciprocal %330 {approx = true} : vector<16x1xf32> -> vector<16x1xf32>
    %332 = vector.broadcast %331 : vector<16x1xf32> to vector<16x8xf32>
    %333 = arith.mulf %328, %332 : vector<16x8xf32>
    %334 = arith.truncf %333 : vector<16x8xf32> to vector<16x8xbf16>
    %335 = arith.truncf %318 : vector<8x8xf32> to vector<8x8xbf16>
    %cst_220 = arith.constant dense<0.000000e+00> : vector<16x8xf32>
    %336 = tpu.matmul %334, %335, %cst_220 {dimension_numbers = #tpu.dot_dimension_numbers<[1], [0], [0], [1], [0, 0, 1, 1], [], []>} : vector<16x8xbf16>, vector<8x8xbf16>, vector<16x8xf32> -> vector<16x8xf32>
    %337 = arith.truncf %336 : vector<16x8xf32> to vector<16x8xbf16>
    %c2_221 = arith.constant 2 : index
    %c0_222 = arith.constant 0 : index
    %c0_223 = arith.constant 0 : index
    %338 = vector.load %arg11[%c2_221, %c0_222, %c0_223] : memref<4x8x32xbf16, #tpu.memory_space<vmem>>, vector<1x8x32xbf16>
    %339 = vector.shape_cast %338 : vector<1x8x32xbf16> to vector<8x32xbf16>
    %cst_224 = arith.constant dense<0.000000e+00> : vector<16x32xf32>
    %340 = tpu.matmul %337, %339, %cst_224 {dimension_numbers = #tpu.dot_dimension_numbers<[1], [0], [0], [1], [0, 0, 1, 1], [], []>} : vector<16x8xbf16>, vector<8x32xbf16>, vector<16x32xf32> -> vector<16x32xf32>
    %341 = arith.addf %297, %340 : vector<16x32xf32>
    %c3_225 = arith.constant 3 : index
    %c0_226 = arith.constant 0 : index
    %c0_227 = arith.constant 0 : index
    %342 = vector.load %arg5[%c3_225, %c0_226, %c0_227] : memref<4x32x8xbf16, #tpu.memory_space<vmem>>, vector<1x32x8xbf16>
    %343 = vector.shape_cast %342 : vector<1x32x8xbf16> to vector<32x8xbf16>
    %cst_228 = arith.constant dense<0.000000e+00> : vector<16x8xf32>
    %344 = tpu.matmul %26, %343, %cst_228 {dimension_numbers = #tpu.dot_dimension_numbers<[1], [0], [0], [1], [0, 0, 1, 1], [], []>} : vector<16x32xbf16>, vector<32x8xbf16>, vector<16x8xf32> -> vector<16x8xf32>
    %c3_229 = arith.constant 3 : index
    %c0_230 = arith.constant 0 : index
    %c0_231 = arith.constant 0 : index
    %345 = vector.load %arg6[%c3_229, %c0_230, %c0_231] : memref<4x1x8xf32, #tpu.memory_space<vmem>>, vector<1x1x8xf32>
    %346 = vector.shape_cast %345 : vector<1x1x8xf32> to vector<1x8xf32>
    %347 = vector.broadcast %346 : vector<1x8xf32> to vector<16x8xf32>
    %348 = arith.addf %344, %347 : vector<16x8xf32>
    %c3_232 = arith.constant 3 : index
    %c0_233 = arith.constant 0 : index
    %c0_234 = arith.constant 0 : index
    %349 = vector.load %arg7[%c3_232, %c0_233, %c0_234] : memref<4x32x8xbf16, #tpu.memory_space<vmem>>, vector<1x32x8xbf16>
    %350 = vector.shape_cast %349 : vector<1x32x8xbf16> to vector<32x8xbf16>
    %cst_235 = arith.constant dense<0.000000e+00> : vector<8x8xf32>
    %351 = tpu.matmul %210, %350, %cst_235 {dimension_numbers = #tpu.dot_dimension_numbers<[1], [0], [0], [1], [0, 0, 1, 1], [], []>} : vector<8x32xbf16>, vector<32x8xbf16>, vector<8x8xf32> -> vector<8x8xf32>
    %c3_236 = arith.constant 3 : index
    %c0_237 = arith.constant 0 : index
    %c0_238 = arith.constant 0 : index
    %352 = vector.load %arg8[%c3_236, %c0_237, %c0_238] : memref<4x1x8xf32, #tpu.memory_space<vmem>>, vector<1x1x8xf32>
    %353 = vector.shape_cast %352 : vector<1x1x8xf32> to vector<1x8xf32>
    %354 = vector.broadcast %353 : vector<1x8xf32> to vector<8x8xf32>
    %355 = arith.addf %351, %354 : vector<8x8xf32>
    %c3_239 = arith.constant 3 : index
    %c0_240 = arith.constant 0 : index
    %c0_241 = arith.constant 0 : index
    %356 = vector.load %arg9[%c3_239, %c0_240, %c0_241] : memref<4x32x8xbf16, #tpu.memory_space<vmem>>, vector<1x32x8xbf16>
    %357 = vector.shape_cast %356 : vector<1x32x8xbf16> to vector<32x8xbf16>
    %cst_242 = arith.constant dense<0.000000e+00> : vector<8x8xf32>
    %358 = tpu.matmul %210, %357, %cst_242 {dimension_numbers = #tpu.dot_dimension_numbers<[1], [0], [0], [1], [0, 0, 1, 1], [], []>} : vector<8x32xbf16>, vector<32x8xbf16>, vector<8x8xf32> -> vector<8x8xf32>
    %c3_243 = arith.constant 3 : index
    %c0_244 = arith.constant 0 : index
    %c0_245 = arith.constant 0 : index
    %359 = vector.load %arg10[%c3_243, %c0_244, %c0_245] : memref<4x1x8xf32, #tpu.memory_space<vmem>>, vector<1x1x8xf32>
    %360 = vector.shape_cast %359 : vector<1x1x8xf32> to vector<1x8xf32>
    %361 = vector.broadcast %360 : vector<1x8xf32> to vector<8x8xf32>
    %362 = arith.addf %358, %361 : vector<8x8xf32>
    %cst_246 = arith.constant 0.353553385 : f32
    %363 = vector.broadcast %cst_246 : f32 to vector<16x8xf32>
    %364 = arith.mulf %348, %363 : vector<16x8xf32>
    %365 = arith.truncf %364 : vector<16x8xf32> to vector<16x8xbf16>
    %366 = arith.truncf %355 : vector<8x8xf32> to vector<8x8xbf16>
    %cst_247 = arith.constant dense<0.000000e+00> : vector<16x8xf32>
    %367 = tpu.matmul %365, %366, %cst_247 {dimension_numbers = #tpu.dot_dimension_numbers<[1], [1], [0], [0], [0, 0, 1, 0], [], []>} : vector<16x8xbf16>, vector<8x8xbf16>, vector<16x8xf32> -> vector<16x8xf32>
    %cst_248 = arith.constant dense<0xFF800000> : vector<16xf32>
    %368 = vector.multi_reduction <maximumf>, %367, %cst_248 [1] : vector<16x8xf32> to vector<16xf32>
    %369 = vector.shape_cast %368 : vector<16xf32> to vector<16x1xf32>
    %370 = vector.broadcast %369 : vector<16x1xf32> to vector<16x8xf32>
    %371 = arith.subf %367, %370 : vector<16x8xf32>
    %372 = math.exp %371 : vector<16x8xf32>
    %cst_249 = arith.constant dense<0.000000e+00> : vector<16xf32>
    %373 = vector.multi_reduction <add>, %372, %cst_249 [1] : vector<16x8xf32> to vector<16xf32>
    %374 = vector.shape_cast %373 : vector<16xf32> to vector<16x1xf32>
    %375 = tpu.reciprocal %374 {approx = true} : vector<16x1xf32> -> vector<16x1xf32>
    %376 = vector.broadcast %375 : vector<16x1xf32> to vector<16x8xf32>
    %377 = arith.mulf %372, %376 : vector<16x8xf32>
    %378 = arith.truncf %377 : vector<16x8xf32> to vector<16x8xbf16>
    %379 = arith.truncf %362 : vector<8x8xf32> to vector<8x8xbf16>
    %cst_250 = arith.constant dense<0.000000e+00> : vector<16x8xf32>
    %380 = tpu.matmul %378, %379, %cst_250 {dimension_numbers = #tpu.dot_dimension_numbers<[1], [0], [0], [1], [0, 0, 1, 1], [], []>} : vector<16x8xbf16>, vector<8x8xbf16>, vector<16x8xf32> -> vector<16x8xf32>
    %381 = arith.truncf %380 : vector<16x8xf32> to vector<16x8xbf16>
    %c3_251 = arith.constant 3 : index
    %c0_252 = arith.constant 0 : index
    %c0_253 = arith.constant 0 : index
    %382 = vector.load %arg11[%c3_251, %c0_252, %c0_253] : memref<4x8x32xbf16, #tpu.memory_space<vmem>>, vector<1x8x32xbf16>
    %383 = vector.shape_cast %382 : vector<1x8x32xbf16> to vector<8x32xbf16>
    %cst_254 = arith.constant dense<0.000000e+00> : vector<16x32xf32>
    %384 = tpu.matmul %381, %383, %cst_254 {dimension_numbers = #tpu.dot_dimension_numbers<[1], [0], [0], [1], [0, 0, 1, 1], [], []>} : vector<16x8xbf16>, vector<8x32xbf16>, vector<16x32xf32> -> vector<16x32xf32>
    %385 = arith.addf %341, %384 : vector<16x32xf32>
    %c0_255 = arith.constant 0 : index
    %c0_256 = arith.constant 0 : index
    %386 = vector.load %arg12[%c0_255, %c0_256] : memref<1x32xf32, #tpu.memory_space<vmem>>, vector<1x32xf32>
    %387 = vector.broadcast %386 : vector<1x32xf32> to vector<16x32xf32>
    %388 = arith.addf %385, %387 : vector<16x32xf32>
    %cst_257 = arith.constant 2.000000e+00 : f32
    %389 = vector.broadcast %cst_257 : f32 to vector<16x32xf32>
    %390 = arith.mulf %389, %388 : vector<16x32xf32>
    %c0_258 = arith.constant 0 : index
    %c0_259 = arith.constant 0 : index
    %c0_260 = arith.constant 0 : index
    %391 = vector.load %arg13[%c0_258, %c0_259, %c0_260] : memref<1x16x32xf32, #tpu.memory_space<vmem>>, vector<1x16x32xf32>
    %392 = vector.shape_cast %391 : vector<1x16x32xf32> to vector<16x32xf32>
    %393 = vector.shape_cast %390 : vector<16x32xf32> to vector<1x16x32xf32>
    tpu.vector_store %arg13[%c0_258, %c0_259, %c0_260], %393 {strides = array<i32>} : memref<1x16x32xf32, #tpu.memory_space<vmem>>, vector<1x16x32xf32>,
    return
  }
  func.func @transform_0(%arg0: i32) -> (i32, i32, i32) {
    %c0_i32 = arith.constant 0 : i32
    %c0_i32_0 = arith.constant 0 : i32
    %c0_i32_1 = arith.constant 0 : i32
    return %arg0, %c0_i32, %c0_i32_0 : i32, i32, i32
  }
  func.func @transform_1(%arg0: i32) -> (i32, i32, i32) {
    %c0_i32 = arith.constant 0 : i32
    %c0_i32_0 = arith.constant 0 : i32
    %c0_i32_1 = arith.constant 0 : i32
    return %arg0, %c0_i32, %c0_i32_0 : i32, i32, i32
  }
  func.func @transform_2(%arg0: i32) -> (i32, i32) {
    %c0_i32 = arith.constant 0 : i32
    %c0_i32_0 = arith.constant 0 : i32
    %c0_i32_1 = arith.constant 0 : i32
    return %c0_i32, %c0_i32_0 : i32, i32
  }
  func.func @transform_3(%arg0: i32) -> (i32, i32) {
    %c0_i32 = arith.constant 0 : i32
    %c0_i32_0 = arith.constant 0 : i32
    %c0_i32_1 = arith.constant 0 : i32
    return %c0_i32, %c0_i32_0 : i32, i32
  }
  func.func @transform_4(%arg0: i32) -> (i32, i32, i32) {
    %c0_i32 = arith.constant 0 : i32
    %c0_i32_0 = arith.constant 0 : i32
    %c0_i32_1 = arith.constant 0 : i32
    %c0_i32_2 = arith.constant 0 : i32
    return %c0_i32, %c0_i32_0, %c0_i32_1 : i32, i32, i32
  }
  func.func @transform_5(%arg0: i32) -> (i32, i32, i32) {
    %c0_i32 = arith.constant 0 : i32
    %c0_i32_0 = arith.constant 0 : i32
    %c0_i32_1 = arith.constant 0 : i32
    %c0_i32_2 = arith.constant 0 : i32
    return %c0_i32, %c0_i32_0, %c0_i32_1 : i32, i32, i32
  }
  func.func @transform_6(%arg0: i32) -> (i32, i32, i32) {
    %c0_i32 = arith.constant 0 : i32
    %c0_i32_0 = arith.constant 0 : i32
    %c0_i32_1 = arith.constant 0 : i32
    %c0_i32_2 = arith.constant 0 : i32
    return %c0_i32, %c0_i32_0, %c0_i32_1 : i32, i32, i32
  }
  func.func @transform_7(%arg0: i32) -> (i32, i32, i32) {
    %c0_i32 = arith.constant 0 : i32
    %c0_i32_0 = arith.constant 0 : i32
    %c0_i32_1 = arith.constant 0 : i32
    %c0_i32_2 = arith.constant 0 : i32
    return %c0_i32, %c0_i32_0, %c0_i32_1 : i32, i32, i32
  }
  func.func @transform_8(%arg0: i32) -> (i32, i32, i32) {
    %c0_i32 = arith.constant 0 : i32
    %c0_i32_0 = arith.constant 0 : i32
    %c0_i32_1 = arith.constant 0 : i32
    %c0_i32_2 = arith.constant 0 : i32
    return %c0_i32, %c0_i32_0, %c0_i32_1 : i32, i32, i32
  }
  func.func @transform_9(%arg0: i32) -> (i32, i32, i32) {
    %c0_i32 = arith.constant 0 : i32
    %c0_i32_0 = arith.constant 0 : i32
    %c0_i32_1 = arith.constant 0 : i32
    %c0_i32_2 = arith.constant 0 : i32
    return %c0_i32, %c0_i32_0, %c0_i32_1 : i32, i32, i32
  }
  func.func @transform_10(%arg0: i32) -> (i32, i32, i32) {
    %c0_i32 = arith.constant 0 : i32
    %c0_i32_0 = arith.constant 0 : i32
    %c0_i32_1 = arith.constant 0 : i32
    %c0_i32_2 = arith.constant 0 : i32
    return %c0_i32, %c0_i32_0, %c0_i32_1 : i32, i32, i32
  }
  func.func @transform_11(%arg0: i32) -> (i32, i32) {
    %c0_i32 = arith.constant 0 : i32
    %c0_i32_0 = arith.constant 0 : i32
    %c0_i32_1 = arith.constant 0 : i32
    return %c0_i32, %c0_i32_0 : i32, i32
  }
  func.func @transform_12(%arg0: i32) -> (i32, i32, i32) {
    %c0_i32 = arith.constant 0 : i32
    %c0_i32_0 = arith.constant 0 : i32
    %c0_i32_1 = arith.constant 0 : i32
    return %arg0, %c0_i32, %c0_i32_0 : i32, i32, i32
  }
  func.func @transform_13(%arg0: i32) -> (i32, i32, i32) {
    %c0_i32 = arith.constant 0 : i32
    %c0_i32_0 = arith.constant 0 : i32
    %c0_i32_1 = arith.constant 0 : i32
    return %arg0, %c0_i32, %c0_i32_0 : i32, i32, i32
  }
}

module attributes {stable_mosaic.version = 11 : i64} {
  func.func @_ff_kernel(%arg0: i32, %arg1: memref<1x16x32xf32, #tpu.memory_space<vmem>>, %arg2: memref<1x32xf32, #tpu.memory_space<vmem>>, %arg3: memref<1x32xf32, #tpu.memory_space<vmem>>, %arg4: memref<96x64xbf16, #tpu.memory_space<vmem>>, %arg5: memref<1x64xf32, #tpu.memory_space<vmem>>, %arg6: memref<3x64x32xbf16, #tpu.memory_space<vmem>>, %arg7: memref<1x32xf32, #tpu.memory_space<vmem>>, %arg8: memref<1x16x32xf32, #tpu.memory_space<vmem>>) attributes {dimension_semantics = [#tpu.dimension_semantics<parallel>], iteration_bounds = array<i64: 2>, scalar_prefetch = 0 : i64, scratch_operands = 0 : i64, tpu.core_type = #tpu.core_type<tc>, window_params = [{transform_indices = @transform_0, window_bounds = array<i64: 1, 16, 32>}, {pipeline_mode = #tpu.pipeline_mode<synchronous>, transform_indices = @transform_1, window_bounds = array<i64: 1, 32>}, {pipeline_mode = #tpu.pipeline_mode<synchronous>, transform_indices = @transform_2, window_bounds = array<i64: 1, 32>}, {pipeline_mode = #tpu.pipeline_mode<synchronous>, transform_indices = @transform_3, window_bounds = array<i64: 96, 64>}, {pipeline_mode = #tpu.pipeline_mode<synchronous>, transform_indices = @transform_4, window_bounds = array<i64: 1, 64>}, {pipeline_mode = #tpu.pipeline_mode<synchronous>, transform_indices = @transform_5, window_bounds = array<i64: 3, 64, 32>}, {pipeline_mode = #tpu.pipeline_mode<synchronous>, transform_indices = @transform_6, window_bounds = array<i64: 1, 32>}, {transform_indices = @transform_7, window_bounds = array<i64: 1, 16, 32>}]} {
    %c0 = arith.constant 0 : index
    %c0_0 = arith.constant 0 : index
    %c0_1 = arith.constant 0 : index
    %0 = vector.load %arg1[%c0, %c0_0, %c0_1] : memref<1x16x32xf32, #tpu.memory_space<vmem>>, vector<1x16x32xf32>
    %1 = vector.shape_cast %0 : vector<1x16x32xf32> to vector<16x32xf32>
    %c0_2 = arith.constant 0 : index
    %c0_3 = arith.constant 0 : index
    %2 = vector.load %arg2[%c0_2, %c0_3] : memref<1x32xf32, #tpu.memory_space<vmem>>, vector<1x32xf32>
    %c0_4 = arith.constant 0 : index
    %c0_5 = arith.constant 0 : index
    %3 = vector.load %arg3[%c0_4, %c0_5] : memref<1x32xf32, #tpu.memory_space<vmem>>, vector<1x32xf32>
    %cst = arith.constant dense<0.000000e+00> : vector<16xf32>
    %4 = vector.multi_reduction <add>, %1, %cst [1] : vector<16x32xf32> to vector<16xf32>
    %5 = vector.shape_cast %4 : vector<16xf32> to vector<16x1xf32>
    %cst_6 = arith.constant 3.200000e+01 : f32
    %6 = vector.broadcast %cst_6 : f32 to vector<16x1xf32>
    %7 = arith.divf %5, %6 : vector<16x1xf32>
    %8 = vector.broadcast %7 : vector<16x1xf32> to vector<16x32xf32>
    %9 = arith.subf %1, %8 : vector<16x32xf32>
    %10 = arith.mulf %9, %9 : vector<16x32xf32>
    %cst_7 = arith.constant dense<0.000000e+00> : vector<16xf32>
    %11 = vector.multi_reduction <add>, %10, %cst_7 [1] : vector<16x32xf32> to vector<16xf32>
    %12 = vector.shape_cast %11 : vector<16xf32> to vector<16x1xf32>
    %cst_8 = arith.constant 3.100000e+01 : f32
    %13 = vector.broadcast %cst_8 : f32 to vector<16x1xf32>
    %14 = arith.divf %12, %13 : vector<16x1xf32>
    %15 = vector.broadcast %2 : vector<1x32xf32> to vector<16x32xf32>
    %16 = arith.mulf %15, %9 : vector<16x32xf32>
    %17 = math.sqrt %14 : vector<16x1xf32>
    %cst_9 = arith.constant 9.99999997E-7 : f32
    %18 = vector.broadcast %cst_9 : f32 to vector<16x1xf32>
    %19 = arith.addf %17, %18 : vector<16x1xf32>
    %20 = vector.broadcast %19 : vector<16x1xf32> to vector<16x32xf32>
    %21 = arith.divf %16, %20 : vector<16x32xf32>
    %22 = vector.broadcast %3 : vector<1x32xf32> to vector<16x32xf32>
    %23 = arith.addf %21, %22 : vector<16x32xf32>
    %24 = tpu.iota {dimensions = array<i32: 0>} : vector<16x1xi32>
    %c0_i32 = arith.constant 0 : i32
    %25 = vector.broadcast %c0_i32 : i32 to vector<16x1xi32>
    %26 = arith.cmpi eq, %24, %25 : vector<16x1xi32>
    %c15_i32 = arith.constant 15 : i32
    %27 = vector.broadcast %c15_i32 : i32 to vector<16x1xi32>
    %28 = arith.cmpi eq, %24, %27 : vector<16x1xi32>
    %c1_i32 = arith.constant 1 : i32
    %29 = tpu.dynamic_rotate %23 by %c1_i32 dim 0 : vector<16x32xf32>, i32 -> vector<16x32xf32>
    %cst_10 = arith.constant 0.000000e+00 : f32
    %30 = vector.shape_cast %26 : vector<16x1xi1> to vector<16x1xi1>
    %31 = vector.broadcast %30 : vector<16x1xi1> to vector<16x32xi1>
    %32 = vector.broadcast %cst_10 : f32 to vector<16x32xf32>
    %33 = arith.select %31, %32, %29 : vector<16x32xi1>, vector<16x32xf32>
    %c15_i32_11 = arith.constant 15 : i32
    %34 = tpu.dynamic_rotate %23 by %c15_i32_11 dim 0 : vector<16x32xf32>, i32 -> vector<16x32xf32>
    %cst_12 = arith.constant 0.000000e+00 : f32
    %35 = vector.shape_cast %28 : vector<16x1xi1> to vector<16x1xi1>
    %36 = vector.broadcast %35 : vector<16x1xi1> to vector<16x32xi1>
    %37 = vector.broadcast %cst_12 : f32 to vector<16x32xf32>
    %38 = arith.select %36, %37, %34 : vector<16x32xi1>, vector<16x32xf32>
    %39 = arith.truncf %33 : vector<16x32xf32> to vector<16x32xbf16>
    %40 = arith.truncf %23 : vector<16x32xf32> to vector<16x32xbf16>
    %41 = arith.truncf %38 : vector<16x32xf32> to vector<16x32xbf16>
    %42 = tpu.concatenate %39, %40, %41 in 1 : vector<16x32xbf16>, vector<16x32xbf16>, vector<16x32xbf16> -> vector<16x96xbf16>
    %c0_13 = arith.constant 0 : index
    %c0_14 = arith.constant 0 : index
    %43 = vector.load %arg4[%c0_13, %c0_14] : memref<96x64xbf16, #tpu.memory_space<vmem>>, vector<96x64xbf16>
    %cst_15 = arith.constant dense<0.000000e+00> : vector<16x64xf32>
    %44 = tpu.matmul %42, %43, %cst_15 {dimension_numbers = #tpu.dot_dimension_numbers<[1], [0], [0], [1], [0, 0, 1, 1], [], []>} : vector<16x96xbf16>, vector<96x64xbf16>, vector<16x64xf32> -> vector<16x64xf32>
    %c0_16 = arith.constant 0 : index
    %c0_17 = arith.constant 0 : index
    %45 = vector.load %arg5[%c0_16, %c0_17] : memref<1x64xf32, #tpu.memory_space<vmem>>, vector<1x64xf32>
    %46 = vector.broadcast %45 : vector<1x64xf32> to vector<16x64xf32>
    %47 = arith.addf %44, %46 : vector<16x64xf32>
    %cst_18 = arith.constant 0.000000e+00 : f32
    %48 = vector.broadcast %cst_18 : f32 to vector<16x64xf32>
    %49 = arith.maximumf %47, %48 : vector<16x64xf32>
    %50 = arith.truncf %49 : vector<16x64xf32> to vector<16x64xbf16>
    %c0_19 = arith.constant 0 : index
    %c0_20 = arith.constant 0 : index
    %c0_21 = arith.constant 0 : index
    %51 = vector.load %arg6[%c0_19, %c0_20, %c0_21] : memref<3x64x32xbf16, #tpu.memory_space<vmem>>, vector<1x64x32xbf16>
    %52 = vector.shape_cast %51 : vector<1x64x32xbf16> to vector<64x32xbf16>
    %cst_22 = arith.constant dense<0.000000e+00> : vector<16x32xf32>
    %53 = tpu.matmul %50, %52, %cst_22 {dimension_numbers = #tpu.dot_dimension_numbers<[1], [0], [0], [1], [0, 0, 1, 1], [], []>} : vector<16x64xbf16>, vector<64x32xbf16>, vector<16x32xf32> -> vector<16x32xf32>
    %c1 = arith.constant 1 : index
    %c0_23 = arith.constant 0 : index
    %c0_24 = arith.constant 0 : index
    %54 = vector.load %arg6[%c1, %c0_23, %c0_24] : memref<3x64x32xbf16, #tpu.memory_space<vmem>>, vector<1x64x32xbf16>
    %55 = vector.shape_cast %54 : vector<1x64x32xbf16> to vector<64x32xbf16>
    %cst_25 = arith.constant dense<0.000000e+00> : vector<16x32xf32>
    %56 = tpu.matmul %50, %55, %cst_25 {dimension_numbers = #tpu.dot_dimension_numbers<[1], [0], [0], [1], [0, 0, 1, 1], [], []>} : vector<16x64xbf16>, vector<64x32xbf16>, vector<16x32xf32> -> vector<16x32xf32>
    %c2 = arith.constant 2 : index
    %c0_26 = arith.constant 0 : index
    %c0_27 = arith.constant 0 : index
    %57 = vector.load %arg6[%c2, %c0_26, %c0_27] : memref<3x64x32xbf16, #tpu.memory_space<vmem>>, vector<1x64x32xbf16>
    %58 = vector.shape_cast %57 : vector<1x64x32xbf16> to vector<64x32xbf16>
    %cst_28 = arith.constant dense<0.000000e+00> : vector<16x32xf32>
    %59 = tpu.matmul %50, %58, %cst_28 {dimension_numbers = #tpu.dot_dimension_numbers<[1], [0], [0], [1], [0, 0, 1, 1], [], []>} : vector<16x64xbf16>, vector<64x32xbf16>, vector<16x32xf32> -> vector<16x32xf32>
    %c1_i32_29 = arith.constant 1 : i32
    %60 = tpu.dynamic_rotate %53 by %c1_i32_29 dim 0 : vector<16x32xf32>, i32 -> vector<16x32xf32>
    %cst_30 = arith.constant 0.000000e+00 : f32
    %61 = vector.shape_cast %26 : vector<16x1xi1> to vector<16x1xi1>
    %62 = vector.broadcast %61 : vector<16x1xi1> to vector<16x32xi1>
    %63 = vector.broadcast %cst_30 : f32 to vector<16x32xf32>
    %64 = arith.select %62, %63, %60 : vector<16x32xi1>, vector<16x32xf32>
    %c15_i32_31 = arith.constant 15 : i32
    %65 = tpu.dynamic_rotate %59 by %c15_i32_31 dim 0 : vector<16x32xf32>, i32 -> vector<16x32xf32>
    %cst_32 = arith.constant 0.000000e+00 : f32
    %66 = vector.shape_cast %28 : vector<16x1xi1> to vector<16x1xi1>
    %67 = vector.broadcast %66 : vector<16x1xi1> to vector<16x32xi1>
    %68 = vector.broadcast %cst_32 : f32 to vector<16x32xf32>
    %69 = arith.select %67, %68, %65 : vector<16x32xi1>, vector<16x32xf32>
    %70 = arith.addf %64, %56 : vector<16x32xf32>
    %71 = arith.addf %70, %69 : vector<16x32xf32>
    %c0_33 = arith.constant 0 : index
    %c0_34 = arith.constant 0 : index
    %72 = vector.load %arg7[%c0_33, %c0_34] : memref<1x32xf32, #tpu.memory_space<vmem>>, vector<1x32xf32>
    %73 = vector.broadcast %72 : vector<1x32xf32> to vector<16x32xf32>
    %74 = arith.addf %71, %73 : vector<16x32xf32>
    %75 = arith.addf %1, %74 : vector<16x32xf32>
    %c0_35 = arith.constant 0 : index
    %c0_36 = arith.constant 0 : index
    %c0_37 = arith.constant 0 : index
    %76 = vector.load %arg8[%c0_35, %c0_36, %c0_37] : memref<1x16x32xf32, #tpu.memory_space<vmem>>, vector<1x16x32xf32>
    %77 = vector.shape_cast %76 : vector<1x16x32xf32> to vector<16x32xf32>
    %78 = vector.shape_cast %75 : vector<16x32xf32> to vector<1x16x32xf32>
    tpu.vector_store %arg8[%c0_35, %c0_36, %c0_37], %78 {strides = array<i32>} : memref<1x16x32xf32, #tpu.memory_space<vmem>>, vector<1x16x32xf32>,
    return
  }
  func.func @transform_0(%arg0: i32) -> (i32, i32, i32) {
    %c0_i32 = arith.constant 0 : i32
    %c0_i32_0 = arith.constant 0 : i32
    %c0_i32_1 = arith.constant 0 : i32
    return %arg0, %c0_i32, %c0_i32_0 : i32, i32, i32
  }
  func.func @transform_1(%arg0: i32) -> (i32, i32) {
    %c0_i32 = arith.constant 0 : i32
    %c0_i32_0 = arith.constant 0 : i32
    %c0_i32_1 = arith.constant 0 : i32
    return %c0_i32, %c0_i32_0 : i32, i32
  }
  func.func @transform_2(%arg0: i32) -> (i32, i32) {
    %c0_i32 = arith.constant 0 : i32
    %c0_i32_0 = arith.constant 0 : i32
    %c0_i32_1 = arith.constant 0 : i32
    return %c0_i32, %c0_i32_0 : i32, i32
  }
  func.func @transform_3(%arg0: i32) -> (i32, i32) {
    %c0_i32 = arith.constant 0 : i32
    %c0_i32_0 = arith.constant 0 : i32
    %c0_i32_1 = arith.constant 0 : i32
    return %c0_i32, %c0_i32_0 : i32, i32
  }
  func.func @transform_4(%arg0: i32) -> (i32, i32) {
    %c0_i32 = arith.constant 0 : i32
    %c0_i32_0 = arith.constant 0 : i32
    %c0_i32_1 = arith.constant 0 : i32
    return %c0_i32, %c0_i32_0 : i32, i32
  }
  func.func @transform_5(%arg0: i32) -> (i32, i32, i32) {
    %c0_i32 = arith.constant 0 : i32
    %c0_i32_0 = arith.constant 0 : i32
    %c0_i32_1 = arith.constant 0 : i32
    %c0_i32_2 = arith.constant 0 : i32
    return %c0_i32, %c0_i32_0, %c0_i32_1 : i32, i32, i32
  }
  func.func @transform_6(%arg0: i32) -> (i32, i32) {
    %c0_i32 = arith.constant 0 : i32
    %c0_i32_0 = arith.constant 0 : i32
    %c0_i32_1 = arith.constant 0 : i32
    return %c0_i32, %c0_i32_0 : i32, i32
  }
  func.func @transform_7(%arg0: i32) -> (i32, i32, i32) {
    %c0_i32 = arith.constant 0 : i32
    %c0_i32_0 = arith.constant 0 : i32
    %c0_i32_1 = arith.constant 0 : i32
    return %arg0, %c0_i32, %c0_i32_0 : i32, i32, i32
  }
}

</mosaic_0001>

<llo_original>
// kernel: duplex_encoder_layer_conv.3
$region0: #{duplex_encoder_layer_conv.3}
  #allocation0 [shape = 'u32[]', space=smem, size = 0x4, offset = 0x4, fixed_abs, tag = 'smem constant byte address 0x4 - core index']
  #allocation1 [shape = 'u32[144,128]{1,0:T(1,128)}', space=vmem, size = 0x12000, scoped, tag = 'internal scratch']
  %s0 = inlined_call_operand.vmem [shape: f32[2,16,32], index: 0, kind: input, shape index: {}]
  %s1 = inlined_call_operand.vmem [shape: f32[1,32], index: 1, kind: input, shape index: {}]
  %s2 = inlined_call_operand.vmem [shape: f32[1,32], index: 2, kind: input, shape index: {}]
  %s3 = inlined_call_operand.vmem [shape: bf16[96,64], index: 3, kind: input, shape index: {}]
  %s4 = inlined_call_operand.vmem [shape: f32[1,64], index: 4, kind: input, shape index: {}]
  %s5 = inlined_call_operand.vmem [shape: bf16[3,64,32], index: 5, kind: input, shape index: {}]
  %s6 = inlined_call_operand.vmem [shape: f32[1,32], index: 6, kind: input, shape index: {}]
  %s7 = inlined_call_operand.hbm [shape: f32[2,16,32], index: 7, kind: output, shape index: {}]
  %s8 = sld [smem:[#allocation0]]
  $region61: #{duplex_encoder_layer_conv.3} parent=0
    _
  %s10 = ssub.s32 1, %s8
  %s11 = scalar_select 0, %s10, %s8
  $region1: #{duplex_encoder_layer_conv.3} parent=0
    #allocation2 [shape = 'u8[16384]{0}', space=vmem, size = 0x4000, scoped, tag = 'output window, operand 0']
    #allocation3 [shape = 's32[2]{0}', space=sflag, size = 0x8, scoped, tag = 'scoped memory for duplex_encoder_layer_conv.3']
    %12 = vsyncpa [#allocation3], 0
    %s13 = scalar_lea.sflag [#allocation3], 1
    %14 = vsyncpa %s13, 0
    loop: start=0, step=1, limit=4
    $region2: #{duplex_encoder_layer_conv.3} parent=1 // loop_pre_header
      _
    $region3: #{duplex_encoder_layer_conv.3} parent=1 // loop_header
      %s16 = sphi 0, %s20
      %p17 = scmp.ge.s32.totalorder %s16, 4
      %s26 = sphi 0, %s28
      %s29 = sphi 0, %s26
      %s30 = sphi 0, %s29
      %s46 = sphi 0, %s30
      %s50 = sphi 0, %s50
      %s52 = sphi 0, %s50
      %s53 = sphi 0, %s52
      %s67 = sphi 0, %s53
      %s71 = sphi 0, %s71
      %s73 = sphi 0, %s71
      %s74 = sphi 0, %s73
      %s88 = sphi 0, %s74
      %s92 = sphi 0, %s92
      %s94 = sphi 0, %s92
      %s95 = sphi 0, %s94
      %s109 = sphi 0, %s95
      %s113 = sphi 0, %s113
      %s115 = sphi 0, %s113
      %s116 = sphi 0, %s115
      %s130 = sphi 0, %s116
      %s134 = sphi 0, %s134
      %s136 = sphi 0, %s134
      %s137 = sphi 0, %s136
      %s151 = sphi 0, %s137
      %s155 = sphi 0, %s155
      %s157 = sphi 0, %s155
      %s158 = sphi 0, %s157
      %s172 = sphi 0, %s158
      %s178 = sphi 0, %s180
      %s181 = sphi 0, %s178
      %s182 = sphi 0, %s181
      %s198 = sphi 0, %s182
    $region4: #{duplex_encoder_layer_conv.3} parent=1 // loop_header_branch
      %19 = sbr.rel (%p17) target = $region8
    $region5: #{duplex_encoder_layer_conv.3} parent=1 // loop_body
      %s21 = ssub.s32 %s16, 1
      %s22 = ssub.s32 %s16, 2
      %s23 = sadd.s32 %s16, 1
      %s24 = ssub.s32 %s16, %s23
      %p25 = scmp.eq.s32.totalorder %s24, 0
      %s27 = sadd.s32 %s26, 1
      %s28 = scalar_select %p25, %s26, %s27
      %p31 = pneg %p25
      %p32 = scmp.eq.s32.totalorder %s16, 1
      %p33 = por %p31, %p32
      %p34 = scmp.ne.s32.totalorder %s26, %s29
      %p35 = scmp.eq.s32.totalorder %s16, 0
      %p36 = por %p34, %p35
      %p37 = scmp.ne.s32.totalorder %s26, %s29
      %p38 = scmp.eq.s32.totalorder %s21, 1
      %p39 = por %p37, %p38
      %p40 = scmp.ne.s32.totalorder %s29, %s30
      %p41 = scmp.eq.s32.totalorder %s21, 0
      %p42 = por %p40, %p41
      %p43 = scmp.ne.s32.totalorder %s29, %s30
      %p44 = scmp.eq.s32.totalorder %s22, 1
      %p45 = por %p43, %p44
      %p47 = scmp.ne.s32.totalorder %s30, %s46
      %p48 = scmp.eq.s32.totalorder %s22, 0
      %p49 = por %p47, %p48
      %s51 = sadd.s32 %s50, 1
      %p54 = scmp.eq.s32.totalorder %s16, 1
      %p55 = scmp.ne.s32.totalorder %s50, %s52
      %p56 = scmp.eq.s32.totalorder %s16, 0
      %p57 = por %p55, %p56
      %p58 = scmp.ne.s32.totalorder %s50, %s52
      %p59 = scmp.eq.s32.totalorder %s21, 1
      %p60 = por %p58, %p59
      %p61 = scmp.ne.s32.totalorder %s52, %s53
      %p62 = scmp.eq.s32.totalorder %s21, 0
      %p63 = por %p61, %p62
      %p64 = scmp.ne.s32.totalorder %s52, %s53
      %p65 = scmp.eq.s32.totalorder %s22, 1
      %p66 = por %p64, %p65
      %p68 = scmp.ne.s32.totalorder %s53, %s67
      %p69 = scmp.eq.s32.totalorder %s22, 0
      %p70 = por %p68, %p69
      %s72 = sadd.s32 %s71, 1
      %p75 = scmp.eq.s32.totalorder %s16, 1
      %p76 = scmp.ne.s32.totalorder %s71, %s73
      %p77 = scmp.eq.s32.totalorder %s16, 0
      %p78 = por %p76, %p77
      %p79 = scmp.ne.s32.totalorder %s71, %s73
      %p80 = scmp.eq.s32.totalorder %s21, 1
      %p81 = por %p79, %p80
      %p82 = scmp.ne.s32.totalorder %s73, %s74
      %p83 = scmp.eq.s32.totalorder %s21, 0
      %p84 = por %p82, %p83
      %p85 = scmp.ne.s32.totalorder %s73, %s74
      %p86 = scmp.eq.s32.totalorder %s22, 1
      %p87 = por %p85, %p86
      %p89 = scmp.ne.s32.totalorder %s74, %s88
      %p90 = scmp.eq.s32.totalorder %s22, 0
      %p91 = por %p89, %p90
      %s93 = sadd.s32 %s92, 1
      %p96 = scmp.eq.s32.totalorder %s16, 1
      %p97 = scmp.ne.s32.totalorder %s92, %s94
      %p98 = scmp.eq.s32.totalorder %s16, 0
      %p99 = por %p97, %p98
      %p100 = scmp.ne.s32.totalorder %s92, %s94
      %p101 = scmp.eq.s32.totalorder %s21, 1
      %p102 = por %p100, %p101
      %p103 = scmp.ne.s32.totalorder %s94, %s95
      %p104 = scmp.eq.s32.totalorder %s21, 0
      %p105 = por %p103, %p104
      %p106 = scmp.ne.s32.totalorder %s94, %s95
      %p107 = scmp.eq.s32.totalorder %s22, 1
      %p108 = por %p106, %p107
      %p110 = scmp.ne.s32.totalorder %s95, %s109
      %p111 = scmp.eq.s32.totalorder %s22, 0
      %p112 = por %p110, %p111
      %s114 = sadd.s32 %s113, 1
      %p117 = scmp.eq.s32.totalorder %s16, 1
      %p118 = scmp.ne.s32.totalorder %s113, %s115
      %p119 = scmp.eq.s32.totalorder %s16, 0
      %p120 = por %p118, %p119
      %p121 = scmp.ne.s32.totalorder %s113, %s115
      %p122 = scmp.eq.s32.totalorder %s21, 1
      %p123 = por %p121, %p122
      %p124 = scmp.ne.s32.totalorder %s115, %s116
      %p125 = scmp.eq.s32.totalorder %s21, 0
      %p126 = por %p124, %p125
      %p127 = scmp.ne.s32.totalorder %s115, %s116
      %p128 = scmp.eq.s32.totalorder %s22, 1
      %p129 = por %p127, %p128
      %p131 = scmp.ne.s32.totalorder %s116, %s130
      %p132 = scmp.eq.s32.totalorder %s22, 0
      %p133 = por %p131, %p132
      %s135 = sadd.s32 %s134, 1
      %p138 = scmp.eq.s32.totalorder %s16, 1
      %p139 = scmp.ne.s32.totalorder %s134, %s136
      %p140 = scmp.eq.s32.totalorder %s16, 0
      %p141 = por %p139, %p140
      %p142 = scmp.ne.s32.totalorder %s134, %s136
      %p143 = scmp.eq.s32.totalorder %s21, 1
      %p144 = por %p142, %p143
      %p145 = scmp.ne.s32.totalorder %s136, %s137
      %p146 = scmp.eq.s32.totalorder %s21, 0
      %p147 = por %p145, %p146
      %p148 = scmp.ne.s32.totalorder %s136, %s137
      %p149 = scmp.eq.s32.totalorder %s22, 1
      %p150 = por %p148, %p149
      %p152 = scmp.ne.s32.totalorder %s137, %s151
      %p153 = scmp.eq.s32.totalorder %s22, 0
      %p154 = por %p152, %p153
      %s156 = sadd.s32 %s155, 1
      %p159 = scmp.eq.s32.totalorder %s16, 1
      %p160 = scmp.ne.s32.totalorder %s155, %s157
      %p161 = scmp.eq.s32.totalorder %s16, 0
      %p162 = por %p160, %p161
      %p163 = scmp.ne.s32.totalorder %s155, %s157
      %p164 = scmp.eq.s32.totalorder %s21, 1
      %p165 = por %p163, %p164
      %p166 = scmp.ne.s32.totalorder %s157, %s158
      %p167 = scmp.eq.s32.totalorder %s21, 0
      %p168 = por %p166, %p167
      %p169 = scmp.ne.s32.totalorder %s157, %s158
      %p170 = scmp.eq.s32.totalorder %s22, 1
      %p171 = por %p169, %p170
      %p173 = scmp.ne.s32.totalorder %s158, %s172
      %p174 = scmp.eq.s32.totalorder %s22, 0
      %p175 = por %p173, %p174
      %s176 = ssub.s32 %s16, %s23
      %p177 = scmp.eq.s32.totalorder %s176, 0
      %s179 = sadd.s32 %s178, 1
      %s180 = scalar_select %p177, %s178, %s179
      %p183 = pneg %p177
      %p184 = scmp.eq.s32.totalorder %s16, 1
      %p185 = por %p183, %p184
      %p186 = scmp.ne.s32.totalorder %s178, %s181
      %p187 = scmp.eq.s32.totalorder %s16, 0
      %p188 = por %p186, %p187
      %p189 = scmp.ne.s32.totalorder %s178, %s181
      %p190 = scmp.eq.s32.totalorder %s21, 1
      %p191 = por %p189, %p190
      %p192 = scmp.ne.s32.totalorder %s181, %s182
      %p193 = scmp.eq.s32.totalorder %s21, 0
      %p194 = por %p192, %p193
      %p195 = scmp.ne.s32.totalorder %s181, %s182
      %p196 = scmp.eq.s32.totalorder %s22, 1
      %p197 = por %p195, %p196
      %p199 = scmp.ne.s32.totalorder %s182, %s198
      %p200 = scmp.eq.s32.totalorder %s22, 0
      %p201 = por %p199, %p200
      %p202 = scmp.le.s32.totalorder 1, %s16
      %p203 = scmp.lt.s32.totalorder %s16, 3
      %p204 = pnand %p202, %p203
      %p205 = pneg %p204
      // Predicated region
      $region9: #{duplex_encoder_layer_conv.3} parent=5 // pred_check
        _
      $region10: #{duplex_encoder_layer_conv.3} parent=5 // pred_check_branch
        %207 = sbr.rel (%p204) target = $region12
      $region11: #{duplex_encoder_layer_conv.3} parent=5 // pred_region
        %s208 = ssub.s32 %s16, 1
        // Predicated region
        $region13: #{duplex_encoder_layer_conv.3} parent=11 // pred_check
          %p209 = pneg %p63
        $region14: #{duplex_encoder_layer_conv.3} parent=11 // pred_check_branch
          %211 = sbr.rel (%p209) target = $region16
        $region15: #{duplex_encoder_layer_conv.3} parent=11 // pred_region
          _
        $region16: #{duplex_encoder_layer_conv.3} parent=11 // pred_fallthru
          _
        // Predicated region
        $region17: #{duplex_encoder_layer_conv.3} parent=11 // pred_check
          %p212 = pneg %p84
        $region18: #{duplex_encoder_layer_conv.3} parent=11 // pred_check_branch
          %214 = sbr.rel (%p212) target = $region20
        $region19: #{duplex_encoder_layer_conv.3} parent=11 // pred_region
          _
        $region20: #{duplex_encoder_layer_conv.3} parent=11 // pred_fallthru
          _
        // Predicated region
        $region21: #{duplex_encoder_layer_conv.3} parent=11 // pred_check
          %p215 = pneg %p105
        $region22: #{duplex_encoder_layer_conv.3} parent=11 // pred_check_branch
          %217 = sbr.rel (%p215) target = $region24
        $region23: #{duplex_encoder_layer_conv.3} parent=11 // pred_region
          _
        $region24: #{duplex_encoder_layer_conv.3} parent=11 // pred_fallthru
          _
        // Predicated region
        $region25: #{duplex_encoder_layer_conv.3} parent=11 // pred_check
          %p218 = pneg %p126
        $region26: #{duplex_encoder_layer_conv.3} parent=11 // pred_check_branch
          %220 = sbr.rel (%p218) target = $region28
        $region27: #{duplex_encoder_layer_conv.3} parent=11 // pred_region
          _
        $region28: #{duplex_encoder_layer_conv.3} parent=11 // pred_fallthru
          _
        // Predicated region
        $region29: #{duplex_encoder_layer_conv.3} parent=11 // pred_check
          %p221 = pneg %p147
        $region30: #{duplex_encoder_layer_conv.3} parent=11 // pred_check_branch
          %223 = sbr.rel (%p221) target = $region32
        $region31: #{duplex_encoder_layer_conv.3} parent=11 // pred_region
          _
        $region32: #{duplex_encoder_layer_conv.3} parent=11 // pred_fallthru
          _
        // Predicated region
        $region33: #{duplex_encoder_layer_conv.3} parent=11 // pred_check
          %p224 = pneg %p168
        $region34: #{duplex_encoder_layer_conv.3} parent=11 // pred_check_branch
          %226 = sbr.rel (%p224) target = $region36
        $region35: #{duplex_encoder_layer_conv.3} parent=11 // pred_region
          _
        $region36: #{duplex_encoder_layer_conv.3} parent=11 // pred_fallthru
          _
      $region12: #{duplex_encoder_layer_conv.3} parent=5 // pred_fallthru
        _
      %p227 = scmp.lt.s32.totalorder %s16, 2
      // Predicated region
      $region37: #{duplex_encoder_layer_conv.3} parent=5 // pred_check
        %p228 = pneg %p227
      $region38: #{duplex_encoder_layer_conv.3} parent=5 // pred_check_branch
        %230 = sbr.rel (%p228) target = $region40
      $region39: #{duplex_encoder_layer_conv.3} parent=5 // pred_region
        // Predicated region
        $region41: #{duplex_encoder_layer_conv.3} parent=39 // pred_check
          %p231 = pneg %p36
        $region42: #{duplex_encoder_layer_conv.3} parent=39 // pred_check_branch
          %233 = sbr.rel (%p231) target = $region44
        $region43: #{duplex_encoder_layer_conv.3} parent=39 // pred_region
          %p234 = scmp.lt.s32.totalorder %s16, 1
          %s235 = scalar_select %p234, %s16, 1
          %s236 = smul.addr %s235, 2
          %s237 = smul.addr %s236, 8
          %s238 = scalar_lea.vmem %s0, %s237
        $region44: #{duplex_encoder_layer_conv.3} parent=39 // pred_fallthru
          _
      $region40: #{duplex_encoder_layer_conv.3} parent=5 // pred_fallthru
        _
      %p239 = scmp.le.s32.totalorder 1, %s16
      %p240 = scmp.lt.s32.totalorder %s16, 3
      %p241 = pnand %p239, %p240
      %p242 = pneg %p241
      // Predicated region
      $region45: #{duplex_encoder_layer_conv.3} parent=5 // pred_check
        _
      $region46: #{duplex_encoder_layer_conv.3} parent=5 // pred_check_branch
        %244 = sbr.rel (%p241) target = $region48
      $region47: #{duplex_encoder_layer_conv.3} parent=5 // pred_region
        %s245 = ssub.s32 %s16, 1
        %p246 = scmp.lt.s32.totalorder %s21, 1
        %s247 = scalar_select %p246, %s21, 1
        %s248 = smul.addr %s247, 2
        %s249 = smul.addr %s248, 8
        %s250 = scalar_lea.vmem %s0, %s249
        %p251 = pneg %p42
        %p252 = pneg %p39
        %p253 = pneg %p63
        %p254 = pneg %p60
        %p255 = pneg %p84
        %p256 = pneg %p81
        %p257 = pneg %p105
        %p258 = pneg %p102
        %p259 = pneg %p126
        %p260 = pneg %p123
        %p261 = pneg %p147
        %p262 = pneg %p144
        %p263 = pneg %p168
        %p264 = pneg %p165
        %p265 = pneg %p194
        %p266 = pneg %p191
        %s267 = sand.u32 %s181, 1
        %s268 = scalar_lea.sflag [#allocation3], %s267
        %s269 = sand.u32 %s181, 1
        %s270 = smul.addr %s269, 16
        %s271 = scalar_lea.vmem [#allocation2], %s270
        %p272 = scmp.lt.s32.totalorder %s21, 1
        %s273 = scalar_select %p272, %s21, 1
        %s274 = smul.addr %s273, 2
        %s275 = smul.addr %s274, 8
        %s276 = scalar_lea.vmem %s0, %s275
        %v278 = vld [vmem:[%s276] sm:$0xff]
        %v279 = vld [vmem:[%s276 + $0x8] sm:$0xff]
        %v280 = vld [vmem:[%s1] sm:$0x1]
        %v281 = vld [vmem:[%s2] sm:$0x1]
        %vm282 = vcmask 261120
        %v283 = vsel %vm282, %v278, 0.0
        %284 = vadd.xlane.f32.xlu0 %v283
        %v285 = vpop.xlane.xlu0 %284
        %v286 = vsel %vm282, %v279, 0.0
        %287 = vadd.xlane.f32.xlu0 %v286
        %v288 = vpop.xlane.xlu0 %287
        %v289 = vrcp.pop 32.0
        %v290 = vmul.f32 %v285, %v289
        %v291 = vmul.f32 %v288, %v289
        %v292 = vsub.f32 %v278, %v290
        %v293 = vsub.f32 %v279, %v291
        %v294 = vmul.f32 %v292, %v292
        %v295 = vmul.f32 %v293, %v293
        %v296 = vsel %vm282, %v294, 0.0
        %297 = vadd.xlane.f32.xlu0 %v296
        %v298 = vpop.xlane.xlu0 %297
        %v299 = vsel %vm282, %v295, 0.0
        %300 = vadd.xlane.f32.xlu0 %v299
        %v301 = vpop.xlane.xlu0 %300
        %v302 = vrcp.pop 31.0
        %v303 = vmul.f32 %v298, %v302
        %v304 = vmul.f32 %v301, %v302
        %v306 = vlaneseq
        %v307 = vshrl.u32 %v306, 7
        %v308 = vsub.s32 0, %v307
        %v309 = vrot.slane %v280, %v308
        %v311 = vmul.f32 %v309, %v292
        %v312 = vmul.f32 %v309, %v293
        %v313 = vrsqrt.pop %v303
        %v314 = vmul.f32 %v303, %v313
        %vm315 = vcmp.eq.f32.partialorder %v303, inf
        %v316 = vsel %vm315, %v303, %v314
        %vm317 = vcmp.eq.f32.partialorder %v303, 0.0
        %v318 = vand.u32 %v303, 2147483648
        %v319 = vsel %vm317, %v318, %v316
        %v320 = vrsqrt.pop %v304
        %v321 = vmul.f32 %v304, %v320
        %vm322 = vcmp.eq.f32.partialorder %v304, inf
        %v323 = vsel %vm322, %v304, %v321
        %vm324 = vcmp.eq.f32.partialorder %v304, 0.0
        %v325 = vand.u32 %v304, 2147483648
        %v326 = vsel %vm324, %v325, %v323
        %v327 = vadd.f32 %v319, 1e-06
        %v328 = vadd.f32 %v326, 1e-06
        %v329 = vrcp.pop %v327
        %v330 = vmul.f32 %v311, %v329
        %v331 = vrcp.pop %v328
        %v332 = vmul.f32 %v312, %v331
        %v334 = vlaneseq
        %v335 = vshrl.u32 %v334, 7
        %v336 = vsub.s32 0, %v335
        %v337 = vrot.slane %v281, %v336
        %v339 = vadd.f32 %v330, %v337
        %v340 = vadd.f32 %v332, %v337
        %v341 = vlaneseq
        %v342 = vshrl.u32 %v341, 7
        %v343 = vadd.s32 %v342, 8
        %vm344 = vcmp.eq.s32.totalorder %v342, 0
        %vm345 = vcmp.eq.s32.totalorder %v343, 0
        %vm346 = vcmp.eq.s32.totalorder %v342, 15
        %vm347 = vcmp.eq.s32.totalorder %v343, 15
        %v348 = vrot.slane %v339, 7
        %v349 = vrot.slane %v340, 7
        %vm350 = vcmp.lt.s32.totalorder %v342, 1
        %v351 = vsel %vm350, %v348, %v349
        %v352 = vsel %vm350, %v349, %v348
        %v353 = vsel %vm344, 1, 0
        %v354 = vsel %vm345, 1, 0
        %vm355 = vcmp.eq.s32.totalorder %v353, 1
        %vm356 = vcmp.eq.s32.totalorder %v354, 1
        %v357 = vsel %vm355, 0.0, %v352
        %v358 = vsel %vm356, 0.0, %v351
        %v359 = vrot.slane %v339, 1
        %v360 = vrot.slane %v340, 1
        %vm361 = vcmp.lt.s32.totalorder %v342, 7
        %v362 = vsel %vm361, %v359, %v360
        %v363 = vsel %vm361, %v360, %v359
        %v364 = vsel %vm346, 1, 0
        %v365 = vsel %vm347, 1, 0
        %vm366 = vcmp.eq.s32.totalorder %v364, 1
        %vm367 = vcmp.eq.s32.totalorder %v365, 1
        %v368 = vsel %vm366, 0.0, %v362
        %v369 = vsel %vm367, 0.0, %v363
        %v370 = vpack.c.bf16 %v358, %v357
        %v371 = vpack.c.bf16 %v340, %v339
        %v372 = vpack.c.bf16 %v369, %v368
        %374 = vrot.lane.b32.xlu0 %v371, 32
        %v375 = vpop.permute.xlu0 %374
        %377 = vrot.lane.b32.xlu0 %v372, 64
        %v378 = vpop.permute.xlu0 %377
        %v381 = vsel %vm282, %v370, %v375
        %vm382 = vcmask 523264
        %v384 = vsel %vm382, %v381, %v378
        %v385 = vld [vmem:[%s3] sm:$0xf]
        %v386 = vld [vmem:[%s3 + $0x4] sm:$0xf]
        %v387 = vld [vmem:[%s3 + $0x8] sm:$0xf]
        %v388 = vld [vmem:[%s3 + $0xc] sm:$0xf]
        %v389 = vld [vmem:[%s3 + $0x10] sm:$0xf]
        %v390 = vld [vmem:[%s3 + $0x14] sm:$0xf]
        %v391 = vld [vmem:[%s3 + $0x18] sm:$0xf]
        %v392 = vld [vmem:[%s3 + $0x1c] sm:$0xf]
        %v393 = vld [vmem:[%s3 + $0x20] sm:$0xf]
        %v394 = vld [vmem:[%s3 + $0x24] sm:$0xf]
        %v395 = vld [vmem:[%s3 + $0x28] sm:$0xf]
        %v396 = vld [vmem:[%s3 + $0x2c] sm:$0xf]
        %v397 = vld [vmem:[%s4] sm:$0x1]
        %v399 = vlaneseq
        %v400 = vshrl.u32 %v399, 7
        %v401 = vsub.s32 0, %v400
        %v402 = vrot.slane %v397, %v401
        %v416 = vunpack.c.l.b16 %v385
        %v417 = vunpack.c.l.b16 %v386
        %v418 = vunpack.c.l.b16 %v387
        %v419 = vunpack.c.l.b16 %v388
        %v420 = vunpack.c.l.b16 %v389
        %v421 = vunpack.c.l.b16 %v390
        %v422 = vunpack.c.l.b16 %v391
        %v423 = vunpack.c.l.b16 %v392
        %v424 = vunpack.c.l.b16 %v393
        %v425 = vunpack.c.l.b16 %v394
        %v426 = vunpack.c.l.b16 %v395
        %v427 = vunpack.c.l.b16 %v396
        %v428 = vpack.c.b16 %v417, %v416
        %v429 = vpack.c.b16 %v419, %v418
        %v430 = vpack.c.b16 %v421, %v420
        %v431 = vpack.c.b16 %v423, %v422
        %v432 = vpack.c.b16 %v425, %v424
        %v433 = vpack.c.b16 %v427, %v426
        %vm440 = vcmask 785408
        %v441 = vsel %vm440, %v384, 0
        %443 = vmatprep.subr.bf16.mxu0 0
        %444 = vmatpush1.bf16.msra.mxu0 0
        %445 = vmatprep.subr.bf16.mxu0 0
        %446 = vmatpush1.bf16.msra.mxu0 0
        %447 = vmatprep.subr.bf16.mxu0 0
        %448 = vmatpush1.bf16.msra.mxu0 %v433
        %449 = vmatprep.subr.bf16.mxu0 0
        %450 = vmatpush1.bf16.msra.mxu0 %v432
        %451 = vmatprep.subr.bf16.mxu0 0
        %452 = vmatpush1.bf16.msra.mxu0 %v431
        %453 = vmatprep.subr.bf16.mxu0 0
        %454 = vmatpush1.bf16.msra.mxu0 %v430
        %455 = vmatprep.subr.bf16.mxu0 0
        %456 = vmatpush1.bf16.msra.mxu0 %v429
        %457 = vmatprep.subr.bf16.mxu0 0
        %458 = vmatpush1.bf16.msra.mxu0 %v428
        %459 = vmatprep.subr.bf16.mxu0 0
        %460 = vmatpush2.bf16.msra.mxu0 0
        %461 = vmatprep.subr.bf16.mxu0 0
        %462 = vmatpush2.bf16.msra.mxu0 0
        %463 = vmatprep.subr.bf16.mxu0 0
        %464 = vmatpush2.bf16.msra.mxu0 0
        %465 = vmatprep.subr.bf16.mxu0 0
        %466 = vmatpush2.bf16.msra.mxu0 0
        %467 = vmatprep.subr.bf16.mxu0 0
        %468 = vmatpush2.bf16.msra.mxu0 0
        %469 = vmatprep.subr.bf16.mxu0 0
        %470 = vmatpush2.bf16.msra.mxu0 0
        %471 = vmatprep.subr.bf16.mxu0 0
        %472 = vmatpush2.bf16.msra.mxu0 0
        %473 = vmatprep.subr.bf16.mxu0 0
        %474 = vmatpush2.bf16.msra.mxu0 0
        %475 = vmatprep.mubr.bf16.mxu0 0
        %476 = vmatmul.mubr.bf16.gmra.mxu0 %v441
        %v477 = vpop.f32.mrf.mxu0
        %v478 = vadd.f32 %v402, %v477
        %v479 = vpop.f32.mrf.mxu0
        %v480 = vpop.f32.mrf.mxu0
        %v481 = vadd.f32 %v402, %v480
        %v482 = vpop.f32.mrf.mxu0
        %483 = vdwg.mxu0
        %v484 = vmax.f32 %v478, 0.0
        %v485 = vmax.f32 %v481, 0.0
        %v486 = vpack.c.bf16 %v485, %v484
        %v487 = vld [vmem:[%s5] sm:$0xf]
        %v488 = vld [vmem:[%s5 + $0x4] sm:$0xf]
        %v489 = vld [vmem:[%s5 + $0x8] sm:$0xf]
        %v490 = vld [vmem:[%s5 + $0xc] sm:$0xf]
        %v491 = vld [vmem:[%s5 + $0x10] sm:$0xf]
        %v492 = vld [vmem:[%s5 + $0x14] sm:$0xf]
        %v493 = vld [vmem:[%s5 + $0x18] sm:$0xf]
        %v494 = vld [vmem:[%s5 + $0x1c] sm:$0xf]
        %v503 = vunpack.c.l.b16 %v487
        %v504 = vunpack.c.l.b16 %v488
        %v505 = vunpack.c.l.b16 %v489
        %v506 = vunpack.c.l.b16 %v490
        %v507 = vunpack.c.l.b16 %v491
        %v508 = vunpack.c.l.b16 %v492
        %v509 = vunpack.c.l.b16 %v493
        %v510 = vunpack.c.l.b16 %v494
        %v511 = vpack.c.b16 %v504, %v503
        %v512 = vpack.c.b16 %v506, %v505
        %v513 = vpack.c.b16 %v508, %v507
        %v514 = vpack.c.b16 %v510, %v509
        %v520 = vsel %vm382, %v486, 0
        %522 = vmatprep.subr.bf16.mxu0 0
        %523 = vmatpush1.bf16.msra.mxu0 0
        %524 = vmatprep.subr.bf16.mxu0 0
        %525 = vmatpush1.bf16.msra.mxu0 0
        %526 = vmatprep.subr.bf16.mxu0 0
        %527 = vmatpush1.bf16.msra.mxu0 0
        %528 = vmatprep.subr.bf16.mxu0 0
        %529 = vmatpush1.bf16.msra.mxu0 0
        %530 = vmatprep.subr.bf16.mxu0 0
        %531 = vmatpush1.bf16.msra.mxu0 %v514
        %532 = vmatprep.subr.bf16.mxu0 0
        %533 = vmatpush1.bf16.msra.mxu0 %v513
        %534 = vmatprep.subr.bf16.mxu0 0
        %535 = vmatpush1.bf16.msra.mxu0 %v512
        %536 = vmatprep.subr.bf16.mxu0 0
        %537 = vmatpush1.bf16.msra.mxu0 %v511
        %538 = vmatprep.subr.bf16.mxu0 0
        %539 = vmatpush2.bf16.msra.mxu0 0
        %540 = vmatprep.subr.bf16.mxu0 0
        %541 = vmatpush2.bf16.msra.mxu0 0
        %542 = vmatprep.subr.bf16.mxu0 0
        %543 = vmatpush2.bf16.msra.mxu0 0
        %544 = vmatprep.subr.bf16.mxu0 0
        %545 = vmatpush2.bf16.msra.mxu0 0
        %546 = vmatprep.subr.bf16.mxu0 0
        %547 = vmatpush2.bf16.msra.mxu0 0
        %548 = vmatprep.subr.bf16.mxu0 0
        %549 = vmatpush2.bf16.msra.mxu0 0
        %550 = vmatprep.subr.bf16.mxu0 0
        %551 = vmatpush2.bf16.msra.mxu0 0
        %552 = vmatprep.subr.bf16.mxu0 0
        %553 = vmatpush2.bf16.msra.mxu0 0
        %554 = vmatprep.mubr.bf16.mxu0 0
        %555 = vmatmul.mubr.bf16.gmra.mxu0 %v520
        %v556 = vpop.f32.mrf.mxu0
        %v557 = vadd.f32 0.0, %v556
        %v558 = vpop.f32.mrf.mxu0
        %v559 = vpop.f32.mrf.mxu0
        %v560 = vadd.f32 0.0, %v559
        %v561 = vpop.f32.mrf.mxu0
        %562 = vdwg.mxu0
        %s563 = scalar_lea.vmem %s5, 32
        %v564 = vld [vmem:[%s563] sm:$0xf]
        %v565 = vld [vmem:[%s563 + $0x4] sm:$0xf]
        %v566 = vld [vmem:[%s563 + $0x8] sm:$0xf]
        %v567 = vld [vmem:[%s563 + $0xc] sm:$0xf]
        %v568 = vld [vmem:[%s563 + $0x10] sm:$0xf]
        %v569 = vld [vmem:[%s563 + $0x14] sm:$0xf]
        %v570 = vld [vmem:[%s563 + $0x18] sm:$0xf]
        %v571 = vld [vmem:[%s563 + $0x1c] sm:$0xf]
        %v580 = vunpack.c.l.b16 %v564
        %v581 = vunpack.c.l.b16 %v565
        %v582 = vunpack.c.l.b16 %v566
        %v583 = vunpack.c.l.b16 %v567
        %v584 = vunpack.c.l.b16 %v568
        %v585 = vunpack.c.l.b16 %v569
        %v586 = vunpack.c.l.b16 %v570
        %v587 = vunpack.c.l.b16 %v571
        %v588 = vpack.c.b16 %v581, %v580
        %v589 = vpack.c.b16 %v583, %v582
        %v590 = vpack.c.b16 %v585, %v584
        %v591 = vpack.c.b16 %v587, %v586
        %596 = vmatprep.subr.bf16.mxu0 0
        %597 = vmatpush1.bf16.msra.mxu0 0
        %598 = vmatprep.subr.bf16.mxu0 0
        %599 = vmatpush1.bf16.msra.mxu0 0
        %600 = vmatprep.subr.bf16.mxu0 0
        %601 = vmatpush1.bf16.msra.mxu0 0
        %602 = vmatprep.subr.bf16.mxu0 0
        %603 = vmatpush1.bf16.msra.mxu0 0
        %604 = vmatprep.subr.bf16.mxu0 0
        %605 = vmatpush1.bf16.msra.mxu0 %v591
        %606 = vmatprep.subr.bf16.mxu0 0
        %607 = vmatpush1.bf16.msra.mxu0 %v590
        %608 = vmatprep.subr.bf16.mxu0 0
        %609 = vmatpush1.bf16.msra.mxu0 %v589
        %610 = vmatprep.subr.bf16.mxu0 0
        %611 = vmatpush1.bf16.msra.mxu0 %v588
        %612 = vmatprep.subr.bf16.mxu0 0
        %613 = vmatpush2.bf16.msra.mxu0 0
        %614 = vmatprep.subr.bf16.mxu0 0
        %615 = vmatpush2.bf16.msra.mxu0 0
        %616 = vmatprep.subr.bf16.mxu0 0
        %617 = vmatpush2.bf16.msra.mxu0 0
        %618 = vmatprep.subr.bf16.mxu0 0
        %619 = vmatpush2.bf16.msra.mxu0 0
        %620 = vmatprep.subr.bf16.mxu0 0
        %621 = vmatpush2.bf16.msra.mxu0 0
        %622 = vmatprep.subr.bf16.mxu0 0
        %623 = vmatpush2.bf16.msra.mxu0 0
        %624 = vmatprep.subr.bf16.mxu0 0
        %625 = vmatpush2.bf16.msra.mxu0 0
        %626 = vmatprep.subr.bf16.mxu0 0
        %627 = vmatpush2.bf16.msra.mxu0 0
        %628 = vmatprep.mubr.bf16.mxu0 0
        %629 = vmatmul.mubr.bf16.gmra.mxu0 %v520
        %v630 = vpop.f32.mrf.mxu0
        %v631 = vadd.f32 0.0, %v630
        %v632 = vpop.f32.mrf.mxu0
        %v633 = vpop.f32.mrf.mxu0
        %v634 = vadd.f32 0.0, %v633
        %v635 = vpop.f32.mrf.mxu0
        %636 = vdwg.mxu0
        %s637 = scalar_lea.vmem %s5, 64
        %v638 = vld [vmem:[%s637] sm:$0xf]
        %v639 = vld [vmem:[%s637 + $0x4] sm:$0xf]
        %v640 = vld [vmem:[%s637 + $0x8] sm:$0xf]
        %v641 = vld [vmem:[%s637 + $0xc] sm:$0xf]
        %v642 = vld [vmem:[%s637 + $0x10] sm:$0xf]
        %v643 = vld [vmem:[%s637 + $0x14] sm:$0xf]
        %v644 = vld [vmem:[%s637 + $0x18] sm:$0xf]
        %v645 = vld [vmem:[%s637 + $0x1c] sm:$0xf]
        %v654 = vunpack.c.l.b16 %v638
        %v655 = vunpack.c.l.b16 %v639
        %v656 = vunpack.c.l.b16 %v640
        %v657 = vunpack.c.l.b16 %v641
        %v658 = vunpack.c.l.b16 %v642
        %v659 = vunpack.c.l.b16 %v643
        %v660 = vunpack.c.l.b16 %v644
        %v661 = vunpack.c.l.b16 %v645
        %v662 = vpack.c.b16 %v655, %v654
        %v663 = vpack.c.b16 %v657, %v656
        %v664 = vpack.c.b16 %v659, %v658
        %v665 = vpack.c.b16 %v661, %v660
        %670 = vmatprep.subr.bf16.mxu0 0
        %671 = vmatpush1.bf16.msra.mxu0 0
        %672 = vmatprep.subr.bf16.mxu0 0
        %673 = vmatpush1.bf16.msra.mxu0 0
        %674 = vmatprep.subr.bf16.mxu0 0
        %675 = vmatpush1.bf16.msra.mxu0 0
        %676 = vmatprep.subr.bf16.mxu0 0
        %677 = vmatpush1.bf16.msra.mxu0 0
        %678 = vmatprep.subr.bf16.mxu0 0
        %679 = vmatpush1.bf16.msra.mxu0 %v665
        %680 = vmatprep.subr.bf16.mxu0 0
        %681 = vmatpush1.bf16.msra.mxu0 %v664
        %682 = vmatprep.subr.bf16.mxu0 0
        %683 = vmatpush1.bf16.msra.mxu0 %v663
        %684 = vmatprep.subr.bf16.mxu0 0
        %685 = vmatpush1.bf16.msra.mxu0 %v662
        %686 = vmatprep.subr.bf16.mxu0 0
        %687 = vmatpush2.bf16.msra.mxu0 0
        %688 = vmatprep.subr.bf16.mxu0 0
        %689 = vmatpush2.bf16.msra.mxu0 0
        %690 = vmatprep.subr.bf16.mxu0 0
        %691 = vmatpush2.bf16.msra.mxu0 0
        %692 = vmatprep.subr.bf16.mxu0 0
        %693 = vmatpush2.bf16.msra.mxu0 0
        %694 = vmatprep.subr.bf16.mxu0 0
        %695 = vmatpush2.bf16.msra.mxu0 0
        %696 = vmatprep.subr.bf16.mxu0 0
        %697 = vmatpush2.bf16.msra.mxu0 0
        %698 = vmatprep.subr.bf16.mxu0 0
        %699 = vmatpush2.bf16.msra.mxu0 0
        %700 = vmatprep.subr.bf16.mxu0 0
        %701 = vmatpush2.bf16.msra.mxu0 0
        %702 = vmatprep.mubr.bf16.mxu0 0
        %703 = vmatmul.mubr.bf16.gmra.mxu0 %v520
        %v704 = vpop.f32.mrf.mxu0
        %v705 = vadd.f32 0.0, %v704
        %v706 = vpop.f32.mrf.mxu0
        %v707 = vpop.f32.mrf.mxu0
        %v708 = vadd.f32 0.0, %v707
        %v709 = vpop.f32.mrf.mxu0
        %710 = vdwg.mxu0
        %v711 = vrot.slane %v557, 7
        %v712 = vrot.slane %v560, 7
        %v713 = vsel %vm350, %v711, %v712
        %v714 = vsel %vm350, %v712, %v711
        %v715 = vsel %vm355, 0.0, %v714
        %v716 = vsel %vm356, 0.0, %v713
        %v717 = vrot.slane %v705, 1
        %v718 = vrot.slane %v708, 1
        %v719 = vsel %vm361, %v717, %v718
        %v720 = vsel %vm361, %v718, %v717
        %v721 = vsel %vm366, 0.0, %v719
        %v722 = vsel %vm367, 0.0, %v720
        %v723 = vadd.f32 %v715, %v631
        %v724 = vadd.f32 %v716, %v634
        %v725 = vadd.f32 %v723, %v721
        %v726 = vadd.f32 %v724, %v722
        %v727 = vld [vmem:[%s6] sm:$0x1]
        %v729 = vlaneseq
        %v730 = vshrl.u32 %v729, 7
        %v731 = vsub.s32 0, %v730
        %v732 = vrot.slane %v727, %v731
        %v734 = vadd.f32 %v725, %v732
        %v735 = vadd.f32 %v726, %v732
        %v736 = vadd.f32 %v278, %v734
        %v737 = vadd.f32 %v279, %v735
        %738 = vst.msk [vmem:[%s271] sm:$0xff] %vm282, %v736
        %739 = vst.msk [vmem:[%s271 + $0x8] sm:$0xff] %vm282, %v737
        %s740 = sand.u32 %s181, 1
        %s741 = scalar_lea.sflag [#allocation3], %s740
        %s742 = sand.u32 %s181, 1
        %s743 = smul.addr %s742, 16
        %s744 = scalar_lea.vmem [#allocation2], %s743
        // Predicated region
        $region49: #{duplex_encoder_layer_conv.3} parent=47 // pred_check
          %p745 = pneg %p191
        $region50: #{duplex_encoder_layer_conv.3} parent=47 // pred_check_branch
          %747 = sbr.rel (%p745) target = $region52
        $region51: #{duplex_encoder_layer_conv.3} parent=47 // pred_region
          %s749 = ssub.s32 256, 256
          %750 = vsyncadd %s741, %s749
          %s751 = smul.addr %s21, 2
          %s752 = smul.addr %s751, 128
          %s753 = scalar_lea.hbm %s7, %s752
          %s754 = sshll.u32 %s744, 4
          %s755 = int_to_ptr.vmem [resolvable:$true] %s754
          %760 = dma.vmem_to_hbm [thread:$0]  %s755, 256, %s753, %s741, 128, 128, 8
        $region52: #{duplex_encoder_layer_conv.3} parent=47 // pred_fallthru
          _
      $region48: #{duplex_encoder_layer_conv.3} parent=5 // pred_fallthru
        _
      %p761 = scmp.le.s32.totalorder 2, %s16
      // Predicated region
      $region53: #{duplex_encoder_layer_conv.3} parent=5 // pred_check
        %p762 = pneg %p761
      $region54: #{duplex_encoder_layer_conv.3} parent=5 // pred_check_branch
        %764 = sbr.rel (%p762) target = $region56
      $region55: #{duplex_encoder_layer_conv.3} parent=5 // pred_region
        %s765 = ssub.s32 %s16, 2
        // Predicated region
        $region57: #{duplex_encoder_layer_conv.3} parent=55 // pred_check
          %p766 = pneg %p197
        $region58: #{duplex_encoder_layer_conv.3} parent=55 // pred_check_branch
          %768 = sbr.rel (%p766) target = $region60
        $region59: #{duplex_encoder_layer_conv.3} parent=55 // pred_region
          %s769 = sand.u32 %s182, 1
          %s770 = scalar_lea.sflag [#allocation3], %s769
          %s771 = sand.u32 %s182, 1
          %s772 = smul.addr %s771, 16
          %s773 = scalar_lea.vmem [#allocation2], %s772
          %774 = dma.done %s770, 256
        $region60: #{duplex_encoder_layer_conv.3} parent=55 // pred_fallthru
          _
      $region56: #{duplex_encoder_layer_conv.3} parent=5 // pred_fallthru
        _
    $region6: #{duplex_encoder_layer_conv.3} parent=1 // loop_footer
      %s20 = sadd.s32 1, %s16
    $region7: #{duplex_encoder_layer_conv.3} parent=1 // loop_footer_branch
      %15 = sbr.rel target = $region3
    $region8: #{duplex_encoder_layer_conv.3} parent=1 // loop_exit
      _
    %775 = vsyncpa [#allocation3], 1
    %s776 = scalar_lea.sflag [#allocation3], 1
    %777 = vsyncpa %s776, 1

// kernel: duplex_encoder_layer_conv.2
$region0: #{duplex_encoder_layer_conv.2}
  #allocation0 [shape = 'u32[]', space=smem, size = 0x4, offset = 0x4, fixed_abs, tag = 'smem constant byte address 0x4 - core index']
  #allocation1 [shape = 'u32[144,128]{1,0:T(1,128)}', space=vmem, size = 0x12000, scoped, tag = 'internal scratch']
  %s0 = inlined_call_operand.vmem [shape: f32[2,16,32], index: 0, kind: input, shape index: {}]
  %s1 = inlined_call_operand.vmem [shape: f32[2,8,32], index: 1, kind: input, shape index: {}]
  %s2 = inlined_call_operand.vmem [shape: f32[1,32], index: 2, kind: input, shape index: {}]
  %s3 = inlined_call_operand.vmem [shape: f32[1,32], index: 3, kind: input, shape index: {}]
  %s4 = inlined_call_operand.vmem [shape: bf16[4,32,8], index: 4, kind: input, shape index: {}]
  %s5 = inlined_call_operand.vmem [shape: f32[4,1,8], index: 5, kind: input, shape index: {}]
  %s6 = inlined_call_operand.vmem [shape: bf16[4,32,8], index: 6, kind: input, shape index: {}]
  %s7 = inlined_call_operand.vmem [shape: f32[4,1,8], index: 7, kind: input, shape index: {}]
  %s8 = inlined_call_operand.vmem [shape: bf16[4,32,8], index: 8, kind: input, shape index: {}]
  %s9 = inlined_call_operand.vmem [shape: f32[4,1,8], index: 9, kind: input, shape index: {}]
  %s10 = inlined_call_operand.vmem [shape: bf16[4,8,32], index: 10, kind: input, shape index: {}]
  %s11 = inlined_call_operand.vmem [shape: f32[1,32], index: 11, kind: input, shape index: {}]
  %s12 = inlined_call_operand.vmem [shape: f32[2,16,32], index: 12, kind: output, shape index: {0}]
  %s13 = inlined_call_operand.hbm [shape: f32[2,8,32], index: 13, kind: output, shape index: {1}]
  %14 = xla_tuple %s12, %s13
  %s15 = sld [smem:[#allocation0]]
  $region89: #{duplex_encoder_layer_conv.2} parent=0
    _
  %s17 = ssub.s32 1, %s15
  %s18 = scalar_select 0, %s17, %s15
  $region1: #{duplex_encoder_layer_conv.2} parent=0
    #allocation2 [shape = 'u8[8192]{0}', space=vmem, size = 0x2000, scoped, tag = 'output window, operand 1']
    #allocation3 [shape = 's32[2]{0}', space=sflag, size = 0x8, scoped, tag = 'scoped memory for duplex_encoder_layer_conv.2']
    %19 = vsyncpa [#allocation3], 0
    %s20 = scalar_lea.sflag [#allocation3], 1
    %21 = vsyncpa %s20, 0
    loop: start=0, step=1, limit=4
    $region2: #{duplex_encoder_layer_conv.2} parent=1 // loop_pre_header
      _
    $region3: #{duplex_encoder_layer_conv.2} parent=1 // loop_header
      %s23 = sphi 0, %s27
      %p24 = scmp.ge.s32.totalorder %s23, 4
      %s33 = sphi 0, %s35
      %s36 = sphi 0, %s33
      %s37 = sphi 0, %s36
      %s53 = sphi 0, %s37
      %s59 = sphi 0, %s61
      %s62 = sphi 0, %s59
      %s63 = sphi 0, %s62
      %s79 = sphi 0, %s63
      %s83 = sphi 0, %s83
      %s85 = sphi 0, %s83
      %s86 = sphi 0, %s85
      %s100 = sphi 0, %s86
      %s104 = sphi 0, %s104
      %s106 = sphi 0, %s104
      %s107 = sphi 0, %s106
      %s121 = sphi 0, %s107
      %s125 = sphi 0, %s125
      %s127 = sphi 0, %s125
      %s128 = sphi 0, %s127
      %s142 = sphi 0, %s128
      %s146 = sphi 0, %s146
      %s148 = sphi 0, %s146
      %s149 = sphi 0, %s148
      %s163 = sphi 0, %s149
      %s167 = sphi 0, %s167
      %s169 = sphi 0, %s167
      %s170 = sphi 0, %s169
      %s184 = sphi 0, %s170
      %s188 = sphi 0, %s188
      %s190 = sphi 0, %s188
      %s191 = sphi 0, %s190
      %s205 = sphi 0, %s191
      %s209 = sphi 0, %s209
      %s211 = sphi 0, %s209
      %s212 = sphi 0, %s211
      %s226 = sphi 0, %s212
      %s230 = sphi 0, %s230
      %s232 = sphi 0, %s230
      %s233 = sphi 0, %s232
      %s247 = sphi 0, %s233
      %s251 = sphi 0, %s251
      %s253 = sphi 0, %s251
      %s254 = sphi 0, %s253
      %s268 = sphi 0, %s254
      %s272 = sphi 0, %s272
      %s274 = sphi 0, %s272
      %s275 = sphi 0, %s274
      %s289 = sphi 0, %s275
      %s295 = sphi 0, %s297
      %s298 = sphi 0, %s295
      %s299 = sphi 0, %s298
      %s315 = sphi 0, %s299
      %s321 = sphi 0, %s323
      %s324 = sphi 0, %s321
      %s325 = sphi 0, %s324
      %s341 = sphi 0, %s325
    $region4: #{duplex_encoder_layer_conv.2} parent=1 // loop_header_branch
      %26 = sbr.rel (%p24) target = $region8
    $region5: #{duplex_encoder_layer_conv.2} parent=1 // loop_body
      %s28 = ssub.s32 %s23, 1
      %s29 = ssub.s32 %s23, 2
      %s30 = sadd.s32 %s23, 1
      %s31 = ssub.s32 %s23, %s30
      %p32 = scmp.eq.s32.totalorder %s31, 0
      %s34 = sadd.s32 %s33, 1
      %s35 = scalar_select %p32, %s33, %s34
      %p38 = pneg %p32
      %p39 = scmp.eq.s32.totalorder %s23, 1
      %p40 = por %p38, %p39
      %p41 = scmp.ne.s32.totalorder %s33, %s36
      %p42 = scmp.eq.s32.totalorder %s23, 0
      %p43 = por %p41, %p42
      %p44 = scmp.ne.s32.totalorder %s33, %s36
      %p45 = scmp.eq.s32.totalorder %s28, 1
      %p46 = por %p44, %p45
      %p47 = scmp.ne.s32.totalorder %s36, %s37
      %p48 = scmp.eq.s32.totalorder %s28, 0
      %p49 = por %p47, %p48
      %p50 = scmp.ne.s32.totalorder %s36, %s37
      %p51 = scmp.eq.s32.totalorder %s29, 1
      %p52 = por %p50, %p51
      %p54 = scmp.ne.s32.totalorder %s37, %s53
      %p55 = scmp.eq.s32.totalorder %s29, 0
      %p56 = por %p54, %p55
      %s57 = ssub.s32 %s23, %s30
      %p58 = scmp.eq.s32.totalorder %s57, 0
      %s60 = sadd.s32 %s59, 1
      %s61 = scalar_select %p58, %s59, %s60
      %p64 = pneg %p58
      %p65 = scmp.eq.s32.totalorder %s23, 1
      %p66 = por %p64, %p65
      %p67 = scmp.ne.s32.totalorder %s59, %s62
      %p68 = scmp.eq.s32.totalorder %s23, 0
      %p69 = por %p67, %p68
      %p70 = scmp.ne.s32.totalorder %s59, %s62
      %p71 = scmp.eq.s32.totalorder %s28, 1
      %p72 = por %p70, %p71
      %p73 = scmp.ne.s32.totalorder %s62, %s63
      %p74 = scmp.eq.s32.totalorder %s28, 0
      %p75 = por %p73, %p74
      %p76 = scmp.ne.s32.totalorder %s62, %s63
      %p77 = scmp.eq.s32.totalorder %s29, 1
      %p78 = por %p76, %p77
      %p80 = scmp.ne.s32.totalorder %s63, %s79
      %p81 = scmp.eq.s32.totalorder %s29, 0
      %p82 = por %p80, %p81
      %s84 = sadd.s32 %s83, 1
      %p87 = scmp.eq.s32.totalorder %s23, 1
      %p88 = scmp.ne.s32.totalorder %s83, %s85
      %p89 = scmp.eq.s32.totalorder %s23, 0
      %p90 = por %p88, %p89
      %p91 = scmp.ne.s32.totalorder %s83, %s85
      %p92 = scmp.eq.s32.totalorder %s28, 1
      %p93 = por %p91, %p92
      %p94 = scmp.ne.s32.totalorder %s85, %s86
      %p95 = scmp.eq.s32.totalorder %s28, 0
      %p96 = por %p94, %p95
      %p97 = scmp.ne.s32.totalorder %s85, %s86
      %p98 = scmp.eq.s32.totalorder %s29, 1
      %p99 = por %p97, %p98
      %p101 = scmp.ne.s32.totalorder %s86, %s100
      %p102 = scmp.eq.s32.totalorder %s29, 0
      %p103 = por %p101, %p102
      %s105 = sadd.s32 %s104, 1
      %p108 = scmp.eq.s32.totalorder %s23, 1
      %p109 = scmp.ne.s32.totalorder %s104, %s106
      %p110 = scmp.eq.s32.totalorder %s23, 0
      %p111 = por %p109, %p110
      %p112 = scmp.ne.s32.totalorder %s104, %s106
      %p113 = scmp.eq.s32.totalorder %s28, 1
      %p114 = por %p112, %p113
      %p115 = scmp.ne.s32.totalorder %s106, %s107
      %p116 = scmp.eq.s32.totalorder %s28, 0
      %p117 = por %p115, %p116
      %p118 = scmp.ne.s32.totalorder %s106, %s107
      %p119 = scmp.eq.s32.totalorder %s29, 1
      %p120 = por %p118, %p119
      %p122 = scmp.ne.s32.totalorder %s107, %s121
      %p123 = scmp.eq.s32.totalorder %s29, 0
      %p124 = por %p122, %p123
      %s126 = sadd.s32 %s125, 1
      %p129 = scmp.eq.s32.totalorder %s23, 1
      %p130 = scmp.ne.s32.totalorder %s125, %s127
      %p131 = scmp.eq.s32.totalorder %s23, 0
      %p132 = por %p130, %p131
      %p133 = scmp.ne.s32.totalorder %s125, %s127
      %p134 = scmp.eq.s32.totalorder %s28, 1
      %p135 = por %p133, %p134
      %p136 = scmp.ne.s32.totalorder %s127, %s128
      %p137 = scmp.eq.s32.totalorder %s28, 0
      %p138 = por %p136, %p137
      %p139 = scmp.ne.s32.totalorder %s127, %s128
      %p140 = scmp.eq.s32.totalorder %s29, 1
      %p141 = por %p139, %p140
      %p143 = scmp.ne.s32.totalorder %s128, %s142
      %p144 = scmp.eq.s32.totalorder %s29, 0
      %p145 = por %p143, %p144
      %s147 = sadd.s32 %s146, 1
      %p150 = scmp.eq.s32.totalorder %s23, 1
      %p151 = scmp.ne.s32.totalorder %s146, %s148
      %p152 = scmp.eq.s32.totalorder %s23, 0
      %p153 = por %p151, %p152
      %p154 = scmp.ne.s32.totalorder %s146, %s148
      %p155 = scmp.eq.s32.totalorder %s28, 1
      %p156 = por %p154, %p155
      %p157 = scmp.ne.s32.totalorder %s148, %s149
      %p158 = scmp.eq.s32.totalorder %s28, 0
      %p159 = por %p157, %p158
      %p160 = scmp.ne.s32.totalorder %s148, %s149
      %p161 = scmp.eq.s32.totalorder %s29, 1
      %p162 = por %p160, %p161
      %p164 = scmp.ne.s32.totalorder %s149, %s163
      %p165 = scmp.eq.s32.totalorder %s29, 0
      %p166 = por %p164, %p165
      %s168 = sadd.s32 %s167, 1
      %p171 = scmp.eq.s32.totalorder %s23, 1
      %p172 = scmp.ne.s32.totalorder %s167, %s169
      %p173 = scmp.eq.s32.totalorder %s23, 0
      %p174 = por %p172, %p173
      %p175 = scmp.ne.s32.totalorder %s167, %s169
      %p176 = scmp.eq.s32.totalorder %s28, 1
      %p177 = por %p175, %p176
      %p178 = scmp.ne.s32.totalorder %s169, %s170
      %p179 = scmp.eq.s32.totalorder %s28, 0
      %p180 = por %p178, %p179
      %p181 = scmp.ne.s32.totalorder %s169, %s170
      %p182 = scmp.eq.s32.totalorder %s29, 1
      %p183 = por %p181, %p182
      %p185 = scmp.ne.s32.totalorder %s170, %s184
      %p186 = scmp.eq.s32.totalorder %s29, 0
      %p187 = por %p185, %p186
      %s189 = sadd.s32 %s188, 1
      %p192 = scmp.eq.s32.totalorder %s23, 1
      %p193 = scmp.ne.s32.totalorder %s188, %s190
      %p194 = scmp.eq.s32.totalorder %s23, 0
      %p195 = por %p193, %p194
      %p196 = scmp.ne.s32.totalorder %s188, %s190
      %p197 = scmp.eq.s32.totalorder %s28, 1
      %p198 = por %p196, %p197
      %p199 = scmp.ne.s32.totalorder %s190, %s191
      %p200 = scmp.eq.s32.totalorder %s28, 0
      %p201 = por %p199, %p200
      %p202 = scmp.ne.s32.totalorder %s190, %s191
      %p203 = scmp.eq.s32.totalorder %s29, 1
      %p204 = por %p202, %p203
      %p206 = scmp.ne.s32.totalorder %s191, %s205
      %p207 = scmp.eq.s32.totalorder %s29, 0
      %p208 = por %p206, %p207
      %s210 = sadd.s32 %s209, 1
      %p213 = scmp.eq.s32.totalorder %s23, 1
      %p214 = scmp.ne.s32.totalorder %s209, %s211
      %p215 = scmp.eq.s32.totalorder %s23, 0
      %p216 = por %p214, %p215
      %p217 = scmp.ne.s32.totalorder %s209, %s211
      %p218 = scmp.eq.s32.totalorder %s28, 1
      %p219 = por %p217, %p218
      %p220 = scmp.ne.s32.totalorder %s211, %s212
      %p221 = scmp.eq.s32.totalorder %s28, 0
      %p222 = por %p220, %p221
      %p223 = scmp.ne.s32.totalorder %s211, %s212
      %p224 = scmp.eq.s32.totalorder %s29, 1
      %p225 = por %p223, %p224
      %p227 = scmp.ne.s32.totalorder %s212, %s226
      %p228 = scmp.eq.s32.totalorder %s29, 0
      %p229 = por %p227, %p228
      %s231 = sadd.s32 %s230, 1
      %p234 = scmp.eq.s32.totalorder %s23, 1
      %p235 = scmp.ne.s32.totalorder %s230, %s232
      %p236 = scmp.eq.s32.totalorder %s23, 0
      %p237 = por %p235, %p236
      %p238 = scmp.ne.s32.totalorder %s230, %s232
      %p239 = scmp.eq.s32.totalorder %s28, 1
      %p240 = por %p238, %p239
      %p241 = scmp.ne.s32.totalorder %s232, %s233
      %p242 = scmp.eq.s32.totalorder %s28, 0
      %p243 = por %p241, %p242
      %p244 = scmp.ne.s32.totalorder %s232, %s233
      %p245 = scmp.eq.s32.totalorder %s29, 1
      %p246 = por %p244, %p245
      %p248 = scmp.ne.s32.totalorder %s233, %s247
      %p249 = scmp.eq.s32.totalorder %s29, 0
      %p250 = por %p248, %p249
      %s252 = sadd.s32 %s251, 1
      %p255 = scmp.eq.s32.totalorder %s23, 1
      %p256 = scmp.ne.s32.totalorder %s251, %s253
      %p257 = scmp.eq.s32.totalorder %s23, 0
      %p258 = por %p256, %p257
      %p259 = scmp.ne.s32.totalorder %s251, %s253
      %p260 = scmp.eq.s32.totalorder %s28, 1
      %p261 = por %p259, %p260
      %p262 = scmp.ne.s32.totalorder %s253, %s254
      %p263 = scmp.eq.s32.totalorder %s28, 0
      %p264 = por %p262, %p263
      %p265 = scmp.ne.s32.totalorder %s253, %s254
      %p266 = scmp.eq.s32.totalorder %s29, 1
      %p267 = por %p265, %p266
      %p269 = scmp.ne.s32.totalorder %s254, %s268
      %p270 = scmp.eq.s32.totalorder %s29, 0
      %p271 = por %p269, %p270
      %s273 = sadd.s32 %s272, 1
      %p276 = scmp.eq.s32.totalorder %s23, 1
      %p277 = scmp.ne.s32.totalorder %s272, %s274
      %p278 = scmp.eq.s32.totalorder %s23, 0
      %p279 = por %p277, %p278
      %p280 = scmp.ne.s32.totalorder %s272, %s274
      %p281 = scmp.eq.s32.totalorder %s28, 1
      %p282 = por %p280, %p281
      %p283 = scmp.ne.s32.totalorder %s274, %s275
      %p284 = scmp.eq.s32.totalorder %s28, 0
      %p285 = por %p283, %p284
      %p286 = scmp.ne.s32.totalorder %s274, %s275
      %p287 = scmp.eq.s32.totalorder %s29, 1
      %p288 = por %p286, %p287
      %p290 = scmp.ne.s32.totalorder %s275, %s289
      %p291 = scmp.eq.s32.totalorder %s29, 0
      %p292 = por %p290, %p291
      %s293 = ssub.s32 %s23, %s30
      %p294 = scmp.eq.s32.totalorder %s293, 0
      %s296 = sadd.s32 %s295, 1
      %s297 = scalar_select %p294, %s295, %s296
      %p300 = pneg %p294
      %p301 = scmp.eq.s32.totalorder %s23, 1
      %p302 = por %p300, %p301
      %p303 = scmp.ne.s32.totalorder %s295, %s298
      %p304 = scmp.eq.s32.totalorder %s23, 0
      %p305 = por %p303, %p304
      %p306 = scmp.ne.s32.totalorder %s295, %s298
      %p307 = scmp.eq.s32.totalorder %s28, 1
      %p308 = por %p306, %p307
      %p309 = scmp.ne.s32.totalorder %s298, %s299
      %p310 = scmp.eq.s32.totalorder %s28, 0
      %p311 = por %p309, %p310
      %p312 = scmp.ne.s32.totalorder %s298, %s299
      %p313 = scmp.eq.s32.totalorder %s29, 1
      %p314 = por %p312, %p313
      %p316 = scmp.ne.s32.totalorder %s299, %s315
      %p317 = scmp.eq.s32.totalorder %s29, 0
      %p318 = por %p316, %p317
      %s319 = ssub.s32 %s23, %s30
      %p320 = scmp.eq.s32.totalorder %s319, 0
      %s322 = sadd.s32 %s321, 1
      %s323 = scalar_select %p320, %s321, %s322
      %p326 = pneg %p320
      %p327 = scmp.eq.s32.totalorder %s23, 1
      %p328 = por %p326, %p327
      %p329 = scmp.ne.s32.totalorder %s321, %s324
      %p330 = scmp.eq.s32.totalorder %s23, 0
      %p331 = por %p329, %p330
      %p332 = scmp.ne.s32.totalorder %s321, %s324
      %p333 = scmp.eq.s32.totalorder %s28, 1
      %p334 = por %p332, %p333
      %p335 = scmp.ne.s32.totalorder %s324, %s325
      %p336 = scmp.eq.s32.totalorder %s28, 0
      %p337 = por %p335, %p336
      %p338 = scmp.ne.s32.totalorder %s324, %s325
      %p339 = scmp.eq.s32.totalorder %s29, 1
      %p340 = por %p338, %p339
      %p342 = scmp.ne.s32.totalorder %s325, %s341
      %p343 = scmp.eq.s32.totalorder %s29, 0
      %p344 = por %p342, %p343
      %p345 = scmp.le.s32.totalorder 1, %s23
      %p346 = scmp.lt.s32.totalorder %s23, 3
      %p347 = pnand %p345, %p346
      %p348 = pneg %p347
      // Predicated region
      $region9: #{duplex_encoder_layer_conv.2} parent=5 // pred_check
        _
      $region10: #{duplex_encoder_layer_conv.2} parent=5 // pred_check_branch
        %350 = sbr.rel (%p347) target = $region12
      $region11: #{duplex_encoder_layer_conv.2} parent=5 // pred_region
        %s351 = ssub.s32 %s23, 1
        // Predicated region
        $region13: #{duplex_encoder_layer_conv.2} parent=11 // pred_check
          %p352 = pneg %p96
        $region14: #{duplex_encoder_layer_conv.2} parent=11 // pred_check_branch
          %354 = sbr.rel (%p352) target = $region16
        $region15: #{duplex_encoder_layer_conv.2} parent=11 // pred_region
          _
        $region16: #{duplex_encoder_layer_conv.2} parent=11 // pred_fallthru
          _
        // Predicated region
        $region17: #{duplex_encoder_layer_conv.2} parent=11 // pred_check
          %p355 = pneg %p117
        $region18: #{duplex_encoder_layer_conv.2} parent=11 // pred_check_branch
          %357 = sbr.rel (%p355) target = $region20
        $region19: #{duplex_encoder_layer_conv.2} parent=11 // pred_region
          _
        $region20: #{duplex_encoder_layer_conv.2} parent=11 // pred_fallthru
          _
        // Predicated region
        $region21: #{duplex_encoder_layer_conv.2} parent=11 // pred_check
          %p358 = pneg %p138
        $region22: #{duplex_encoder_layer_conv.2} parent=11 // pred_check_branch
          %360 = sbr.rel (%p358) target = $region24
        $region23: #{duplex_encoder_layer_conv.2} parent=11 // pred_region
          _
        $region24: #{duplex_encoder_layer_conv.2} parent=11 // pred_fallthru
          _
        // Predicated region
        $region25: #{duplex_encoder_layer_conv.2} parent=11 // pred_check
          %p361 = pneg %p159
        $region26: #{duplex_encoder_layer_conv.2} parent=11 // pred_check_branch
          %363 = sbr.rel (%p361) target = $region28
        $region27: #{duplex_encoder_layer_conv.2} parent=11 // pred_region
          _
        $region28: #{duplex_encoder_layer_conv.2} parent=11 // pred_fallthru
          _
        // Predicated region
        $region29: #{duplex_encoder_layer_conv.2} parent=11 // pred_check
          %p364 = pneg %p180
        $region30: #{duplex_encoder_layer_conv.2} parent=11 // pred_check_branch
          %366 = sbr.rel (%p364) target = $region32
        $region31: #{duplex_encoder_layer_conv.2} parent=11 // pred_region
          _
        $region32: #{duplex_encoder_layer_conv.2} parent=11 // pred_fallthru
          _
        // Predicated region
        $region33: #{duplex_encoder_layer_conv.2} parent=11 // pred_check
          %p367 = pneg %p201
        $region34: #{duplex_encoder_layer_conv.2} parent=11 // pred_check_branch
          %369 = sbr.rel (%p367) target = $region36
        $region35: #{duplex_encoder_layer_conv.2} parent=11 // pred_region
          _
        $region36: #{duplex_encoder_layer_conv.2} parent=11 // pred_fallthru
          _
        // Predicated region
        $region37: #{duplex_encoder_layer_conv.2} parent=11 // pred_check
          %p370 = pneg %p222
        $region38: #{duplex_encoder_layer_conv.2} parent=11 // pred_check_branch
          %372 = sbr.rel (%p370) target = $region40
        $region39: #{duplex_encoder_layer_conv.2} parent=11 // pred_region
          _
        $region40: #{duplex_encoder_layer_conv.2} parent=11 // pred_fallthru
          _
        // Predicated region
        $region41: #{duplex_encoder_layer_conv.2} parent=11 // pred_check
          %p373 = pneg %p243
        $region42: #{duplex_encoder_layer_conv.2} parent=11 // pred_check_branch
          %375 = sbr.rel (%p373) target = $region44
        $region43: #{duplex_encoder_layer_conv.2} parent=11 // pred_region
          _
        $region44: #{duplex_encoder_layer_conv.2} parent=11 // pred_fallthru
          _
        // Predicated region
        $region45: #{duplex_encoder_layer_conv.2} parent=11 // pred_check
          %p376 = pneg %p264
        $region46: #{duplex_encoder_layer_conv.2} parent=11 // pred_check_branch
          %378 = sbr.rel (%p376) target = $region48
        $region47: #{duplex_encoder_layer_conv.2} parent=11 // pred_region
          _
        $region48: #{duplex_encoder_layer_conv.2} parent=11 // pred_fallthru
          _
        // Predicated region
        $region49: #{duplex_encoder_layer_conv.2} parent=11 // pred_check
          %p379 = pneg %p285
        $region50: #{duplex_encoder_layer_conv.2} parent=11 // pred_check_branch
          %381 = sbr.rel (%p379) target = $region52
        $region51: #{duplex_encoder_layer_conv.2} parent=11 // pred_region
          _
        $region52: #{duplex_encoder_layer_conv.2} parent=11 // pred_fallthru
          _
      $region12: #{duplex_encoder_layer_conv.2} parent=5 // pred_fallthru
        _
      %p382 = scmp.lt.s32.totalorder %s23, 2
      // Predicated region
      $region53: #{duplex_encoder_layer_conv.2} parent=5 // pred_check
        %p383 = pneg %p382
      $region54: #{duplex_encoder_layer_conv.2} parent=5 // pred_check_branch
        %385 = sbr.rel (%p383) target = $region56
      $region55: #{duplex_encoder_layer_conv.2} parent=5 // pred_region
        // Predicated region
        $region57: #{duplex_encoder_layer_conv.2} parent=55 // pred_check
          %p386 = pneg %p43
        $region58: #{duplex_encoder_layer_conv.2} parent=55 // pred_check_branch
          %388 = sbr.rel (%p386) target = $region60
        $region59: #{duplex_encoder_layer_conv.2} parent=55 // pred_region
          %p389 = scmp.lt.s32.totalorder %s23, 1
          %s390 = scalar_select %p389, %s23, 1
          %s391 = smul.addr %s390, 2
          %s392 = smul.addr %s391, 8
          %s393 = scalar_lea.vmem %s0, %s392
        $region60: #{duplex_encoder_layer_conv.2} parent=55 // pred_fallthru
          _
        // Predicated region
        $region61: #{duplex_encoder_layer_conv.2} parent=55 // pred_check
          %p394 = pneg %p69
        $region62: #{duplex_encoder_layer_conv.2} parent=55 // pred_check_branch
          %396 = sbr.rel (%p394) target = $region64
        $region63: #{duplex_encoder_layer_conv.2} parent=55 // pred_region
          %p397 = scmp.lt.s32.totalorder %s23, 1
          %s398 = scalar_select %p397, %s23, 1
          %s399 = smul.addr %s398, 8
          %s400 = scalar_lea.vmem %s1, %s399
        $region64: #{duplex_encoder_layer_conv.2} parent=55 // pred_fallthru
          _
      $region56: #{duplex_encoder_layer_conv.2} parent=5 // pred_fallthru
        _
      %p401 = scmp.le.s32.totalorder 1, %s23
      %p402 = scmp.lt.s32.totalorder %s23, 3
      %p403 = pnand %p401, %p402
      %p404 = pneg %p403
      // Predicated region
      $region65: #{duplex_encoder_layer_conv.2} parent=5 // pred_check
        _
      $region66: #{duplex_encoder_layer_conv.2} parent=5 // pred_check_branch
        %406 = sbr.rel (%p403) target = $region68
      $region67: #{duplex_encoder_layer_conv.2} parent=5 // pred_region
        %s407 = ssub.s32 %s23, 1
        %p408 = scmp.lt.s32.totalorder %s28, 1
        %s409 = scalar_select %p408, %s28, 1
        %s410 = smul.addr %s409, 2
        %s411 = smul.addr %s410, 8
        %s412 = scalar_lea.vmem %s0, %s411
        %p413 = pneg %p49
        %p414 = pneg %p46
        %p415 = scmp.lt.s32.totalorder %s28, 1
        %s416 = scalar_select %p415, %s28, 1
        %s417 = smul.addr %s416, 8
        %s418 = scalar_lea.vmem %s1, %s417
        %p419 = pneg %p75
        %p420 = pneg %p72
        %p421 = pneg %p96
        %p422 = pneg %p93
        %p423 = pneg %p117
        %p424 = pneg %p114
        %p425 = pneg %p138
        %p426 = pneg %p135
        %p427 = pneg %p159
        %p428 = pneg %p156
        %p429 = pneg %p180
        %p430 = pneg %p177
        %p431 = pneg %p201
        %p432 = pneg %p198
        %p433 = pneg %p222
        %p434 = pneg %p219
        %p435 = pneg %p243
        %p436 = pneg %p240
        %p437 = pneg %p264
        %p438 = pneg %p261
        %p439 = pneg %p285
        %p440 = pneg %p282
        %p441 = pneg %p311
        %p442 = pneg %p308
        %p443 = scmp.lt.s32.totalorder %s28, 1
        %s444 = scalar_select %p443, %s28, 1
        %s445 = smul.addr %s444, 2
        %s446 = smul.addr %s445, 8
        %s447 = scalar_lea.vmem %s12, %s446
        %p448 = pneg %p337
        %p449 = pneg %p334
        %s450 = sand.u32 %s324, 1
        %s451 = scalar_lea.sflag [#allocation3], %s450
        %s452 = sand.u32 %s324, 1
        %s453 = smul.addr %s452, 8
        %s454 = scalar_lea.vmem [#allocation2], %s453
        %p455 = scmp.lt.s32.totalorder %s28, 1
        %s456 = scalar_select %p455, %s28, 1
        %s457 = smul.addr %s456, 2
        %s458 = smul.addr %s457, 8
        %s459 = scalar_lea.vmem %s0, %s458
        %p460 = scmp.lt.s32.totalorder %s28, 1
        %s461 = scalar_select %p460, %s28, 1
        %s462 = smul.addr %s461, 8
        %s463 = scalar_lea.vmem %s1, %s462
        %p464 = scmp.lt.s32.totalorder %s28, 1
        %s465 = scalar_select %p464, %s28, 1
        %s466 = smul.addr %s465, 2
        %s467 = smul.addr %s466, 8
        %s468 = scalar_lea.vmem %s12, %s467
        %v470 = vld [vmem:[%s459] sm:$0xff]
        %v471 = vld [vmem:[%s459 + $0x8] sm:$0xff]
        %v472 = vld [vmem:[%s463] sm:$0xff]
        %v473 = vld [vmem:[%s2] sm:$0x1]
        %v474 = vld [vmem:[%s3] sm:$0x1]
        %vm475 = vcmask 261120
        %v476 = vsel %vm475, %v470, 0.0
        %477 = vadd.xlane.f32.xlu0 %v476
        %v478 = vpop.xlane.xlu0 %477
        %v479 = vsel %vm475, %v471, 0.0
        %480 = vadd.xlane.f32.xlu0 %v479
        %v481 = vpop.xlane.xlu0 %480
        %v482 = vrcp.pop 32.0
        %v483 = vmul.f32 %v478, %v482
        %v484 = vmul.f32 %v481, %v482
        %v485 = vsub.f32 %v470, %v483
        %v486 = vsub.f32 %v471, %v484
        %v487 = vmul.f32 %v485, %v485
        %v488 = vmul.f32 %v486, %v486
        %v489 = vsel %vm475, %v487, 0.0
        %490 = vadd.xlane.f32.xlu0 %v489
        %v491 = vpop.xlane.xlu0 %490
        %v492 = vsel %vm475, %v488, 0.0
        %493 = vadd.xlane.f32.xlu0 %v492
        %v494 = vpop.xlane.xlu0 %493
        %v495 = vrcp.pop 31.0
        %v496 = vmul.f32 %v491, %v495
        %v497 = vmul.f32 %v494, %v495
        %v499 = vlaneseq
        %v500 = vshrl.u32 %v499, 7
        %v501 = vsub.s32 0, %v500
        %v502 = vrot.slane %v473, %v501
        %v504 = vmul.f32 %v502, %v485
        %v505 = vmul.f32 %v502, %v486
        %v506 = vrsqrt.pop %v496
        %v507 = vmul.f32 %v496, %v506
        %vm508 = vcmp.eq.f32.partialorder %v496, inf
        %v509 = vsel %vm508, %v496, %v507
        %vm510 = vcmp.eq.f32.partialorder %v496, 0.0
        %v511 = vand.u32 %v496, 2147483648
        %v512 = vsel %vm510, %v511, %v509
        %v513 = vrsqrt.pop %v497
        %v514 = vmul.f32 %v497, %v513
        %vm515 = vcmp.eq.f32.partialorder %v497, inf
        %v516 = vsel %vm515, %v497, %v514
        %vm517 = vcmp.eq.f32.partialorder %v497, 0.0
        %v518 = vand.u32 %v497, 2147483648
        %v519 = vsel %vm517, %v518, %v516
        %v520 = vadd.f32 %v512, 1e-06
        %v521 = vadd.f32 %v519, 1e-06
        %v522 = vrcp.pop %v520
        %v523 = vmul.f32 %v504, %v522
        %v524 = vrcp.pop %v521
        %v525 = vmul.f32 %v505, %v524
        %v527 = vlaneseq
        %v528 = vshrl.u32 %v527, 7
        %v529 = vsub.s32 0, %v528
        %v530 = vrot.slane %v474, %v529
        %v532 = vadd.f32 %v523, %v530
        %v533 = vadd.f32 %v525, %v530
        %v534 = vpack.c.bf16 %v533, %v532
        %v535 = vpack.c.bf16 %v472, %v472
        %v536 = vld [vmem:[%s4] sm:$0xf]
        %v537 = vld [vmem:[%s4 + $0x4] sm:$0xf]
        %v538 = vld [vmem:[%s4 + $0x8] sm:$0xf]
        %v539 = vld [vmem:[%s4 + $0xc] sm:$0xf]
        %v540 = vld [vmem:[%s5] sm:$0x1]
        %v542 = vlaneseq
        %v543 = vshrl.u32 %v542, 7
        %v544 = vsub.s32 0, %v543
        %v545 = vrot.slane %v540, %v544
        %v551 = vunpack.c.l.b16 %v536
        %v552 = vunpack.c.l.b16 %v537
        %v553 = vunpack.c.l.b16 %v538
        %v554 = vunpack.c.l.b16 %v539
        %v555 = vpack.c.b16 %v552, %v551
        %v556 = vpack.c.b16 %v554, %v553
        %v560 = vsel %vm475, %v535, 0
        %562 = vmatprep.subr.bf16.mxu0 0
        %563 = vmatpush1.bf16.msra.mxu0 0
        %564 = vmatprep.subr.bf16.mxu0 0
        %565 = vmatpush1.bf16.msra.mxu0 0
        %566 = vmatprep.subr.bf16.mxu0 0
        %567 = vmatpush1.bf16.msra.mxu0 0
        %568 = vmatprep.subr.bf16.mxu0 0
        %569 = vmatpush1.bf16.msra.mxu0 0
        %570 = vmatprep.subr.bf16.mxu0 0
        %571 = vmatpush1.bf16.msra.mxu0 0
        %572 = vmatprep.subr.bf16.mxu0 0
        %573 = vmatpush1.bf16.msra.mxu0 0
        %574 = vmatprep.subr.bf16.mxu0 0
        %575 = vmatpush1.bf16.msra.mxu0 %v556
        %576 = vmatprep.subr.bf16.mxu0 0
        %577 = vmatpush1.bf16.msra.mxu0 %v555
        %578 = vmatprep.subr.bf16.mxu0 0
        %579 = vmatpush2.bf16.msra.mxu0 0
        %580 = vmatprep.subr.bf16.mxu0 0
        %581 = vmatpush2.bf16.msra.mxu0 0
        %582 = vmatprep.subr.bf16.mxu0 0
        %583 = vmatpush2.bf16.msra.mxu0 0
        %584 = vmatprep.subr.bf16.mxu0 0
        %585 = vmatpush2.bf16.msra.mxu0 0
        %586 = vmatprep.subr.bf16.mxu0 0
        %587 = vmatpush2.bf16.msra.mxu0 0
        %588 = vmatprep.subr.bf16.mxu0 0
        %589 = vmatpush2.bf16.msra.mxu0 0
        %590 = vmatprep.subr.bf16.mxu0 0
        %591 = vmatpush2.bf16.msra.mxu0 0
        %592 = vmatprep.subr.bf16.mxu0 0
        %593 = vmatpush2.bf16.msra.mxu0 0
        %594 = vmatprep.mubr.bf16.mxu0 0
        %595 = vmatmul.mubr.bf16.gmra.mxu0 %v560
        %v596 = vpop.f32.mrf.mxu0
        %v597 = vadd.f32 %v545, %v596
        %v598 = vpop.f32.mrf.mxu0
        %v599 = vpop.f32.mrf.mxu0
        %v600 = vpop.f32.mrf.mxu0
        %601 = vdwg.mxu0
        %v602 = vld [vmem:[%s6] sm:$0xf]
        %v603 = vld [vmem:[%s6 + $0x4] sm:$0xf]
        %v604 = vld [vmem:[%s6 + $0x8] sm:$0xf]
        %v605 = vld [vmem:[%s6 + $0xc] sm:$0xf]
        %v606 = vld [vmem:[%s7] sm:$0x1]
        %v608 = vlaneseq
        %v609 = vshrl.u32 %v608, 7
        %v610 = vsub.s32 0, %v609
        %v611 = vrot.slane %v606, %v610
        %v617 = vunpack.c.l.b16 %v602
        %v618 = vunpack.c.l.b16 %v603
        %v619 = vunpack.c.l.b16 %v604
        %v620 = vunpack.c.l.b16 %v605
        %v621 = vpack.c.b16 %v618, %v617
        %v622 = vpack.c.b16 %v620, %v619
        %v626 = vsel %vm475, %v534, 0
        %628 = vmatprep.subr.bf16.mxu0 0
        %629 = vmatpush1.bf16.msra.mxu0 0
        %630 = vmatprep.subr.bf16.mxu0 0
        %631 = vmatpush1.bf16.msra.mxu0 0
        %632 = vmatprep.subr.bf16.mxu0 0
        %633 = vmatpush1.bf16.msra.mxu0 0
        %634 = vmatprep.subr.bf16.mxu0 0
        %635 = vmatpush1.bf16.msra.mxu0 0
        %636 = vmatprep.subr.bf16.mxu0 0
        %637 = vmatpush1.bf16.msra.mxu0 0
        %638 = vmatprep.subr.bf16.mxu0 0
        %639 = vmatpush1.bf16.msra.mxu0 0
        %640 = vmatprep.subr.bf16.mxu0 0
        %641 = vmatpush1.bf16.msra.mxu0 %v622
        %642 = vmatprep.subr.bf16.mxu0 0
        %643 = vmatpush1.bf16.msra.mxu0 %v621
        %644 = vmatprep.subr.bf16.mxu0 0
        %645 = vmatpush2.bf16.msra.mxu0 0
        %646 = vmatprep.subr.bf16.mxu0 0
        %647 = vmatpush2.bf16.msra.mxu0 0
        %648 = vmatprep.subr.bf16.mxu0 0
        %649 = vmatpush2.bf16.msra.mxu0 0
        %650 = vmatprep.subr.bf16.mxu0 0
        %651 = vmatpush2.bf16.msra.mxu0 0
        %652 = vmatprep.subr.bf16.mxu0 0
        %653 = vmatpush2.bf16.msra.mxu0 0
        %654 = vmatprep.subr.bf16.mxu0 0
        %655 = vmatpush2.bf16.msra.mxu0 0
        %656 = vmatprep.subr.bf16.mxu0 0
        %657 = vmatpush2.bf16.msra.mxu0 0
        %658 = vmatprep.subr.bf16.mxu0 0
        %659 = vmatpush2.bf16.msra.mxu0 0
        %660 = vmatprep.mubr.bf16.mxu0 0
        %661 = vmatmul.mubr.bf16.gmra.mxu0 %v626
        %v662 = vpop.f32.mrf.mxu0
        %v663 = vadd.f32 %v611, %v662
        %v664 = vpop.f32.mrf.mxu0
        %v665 = vpop.f32.mrf.mxu0
        %v666 = vadd.f32 %v611, %v665
        %v667 = vpop.f32.mrf.mxu0
        %668 = vdwg.mxu0
        %v669 = vld [vmem:[%s8] sm:$0xf]
        %v670 = vld [vmem:[%s8 + $0x4] sm:$0xf]
        %v671 = vld [vmem:[%s8 + $0x8] sm:$0xf]
        %v672 = vld [vmem:[%s8 + $0xc] sm:$0xf]
        %v673 = vld [vmem:[%s9] sm:$0x1]
        %v675 = vlaneseq
        %v676 = vshrl.u32 %v675, 7
        %v677 = vsub.s32 0, %v676
        %v678 = vrot.slane %v673, %v677
        %v684 = vunpack.c.l.b16 %v669
        %v685 = vunpack.c.l.b16 %v670
        %v686 = vunpack.c.l.b16 %v671
        %v687 = vunpack.c.l.b16 %v672
        %v688 = vpack.c.b16 %v685, %v684
        %v689 = vpack.c.b16 %v687, %v686
        %692 = vmatprep.subr.bf16.mxu0 0
        %693 = vmatpush1.bf16.msra.mxu0 0
        %694 = vmatprep.subr.bf16.mxu0 0
        %695 = vmatpush1.bf16.msra.mxu0 0
        %696 = vmatprep.subr.bf16.mxu0 0
        %697 = vmatpush1.bf16.msra.mxu0 0
        %698 = vmatprep.subr.bf16.mxu0 0
        %699 = vmatpush1.bf16.msra.mxu0 0
        %700 = vmatprep.subr.bf16.mxu0 0
        %701 = vmatpush1.bf16.msra.mxu0 0
        %702 = vmatprep.subr.bf16.mxu0 0
        %703 = vmatpush1.bf16.msra.mxu0 0
        %704 = vmatprep.subr.bf16.mxu0 0
        %705 = vmatpush1.bf16.msra.mxu0 %v689
        %706 = vmatprep.subr.bf16.mxu0 0
        %707 = vmatpush1.bf16.msra.mxu0 %v688
        %708 = vmatprep.subr.bf16.mxu0 0
        %709 = vmatpush2.bf16.msra.mxu0 0
        %710 = vmatprep.subr.bf16.mxu0 0
        %711 = vmatpush2.bf16.msra.mxu0 0
        %712 = vmatprep.subr.bf16.mxu0 0
        %713 = vmatpush2.bf16.msra.mxu0 0
        %714 = vmatprep.subr.bf16.mxu0 0
        %715 = vmatpush2.bf16.msra.mxu0 0
        %716 = vmatprep.subr.bf16.mxu0 0
        %717 = vmatpush2.bf16.msra.mxu0 0
        %718 = vmatprep.subr.bf16.mxu0 0
        %719 = vmatpush2.bf16.msra.mxu0 0
        %720 = vmatprep.subr.bf16.mxu0 0
        %721 = vmatpush2.bf16.msra.mxu0 0
        %722 = vmatprep.subr.bf16.mxu0 0
        %723 = vmatpush2.bf16.msra.mxu0 0
        %724 = vmatprep.mubr.bf16.mxu0 0
        %725 = vmatmul.mubr.bf16.gmra.mxu0 %v626
        %v726 = vpop.f32.mrf.mxu0
        %v727 = vadd.f32 %v678, %v726
        %v728 = vpop.f32.mrf.mxu0
        %v729 = vpop.f32.mrf.mxu0
        %v730 = vadd.f32 %v678, %v729
        %v731 = vpop.f32.mrf.mxu0
        %732 = vdwg.mxu0
        %v733 = vmul.f32 %v597, 0.35355338
        %v734 = vpack.c.bf16 %v733, %v733
        %v735 = vpack.c.bf16 %v666, %v663
        %vm736 = vcmask 64512
        %v738 = vsel %vm736, %v734, 0
        %v741 = vsel %vm736, %v735, 0
        %743 = vmatprep.subr.bf16.mxu0 0
        %744 = vmatpush1.bf16.xpose.msra.mxu0 0
        %745 = vmatprep.subr.bf16.mxu0 0
        %746 = vmatpush1.bf16.xpose.msra.mxu0 0
        %747 = vmatprep.subr.bf16.mxu0 0
        %748 = vmatpush1.bf16.xpose.msra.mxu0 0
        %749 = vmatprep.subr.bf16.mxu0 0
        %750 = vmatpush1.bf16.xpose.msra.mxu0 0
        %751 = vmatprep.subr.bf16.mxu0 0
        %752 = vmatpush1.bf16.xpose.msra.mxu0 0
        %753 = vmatprep.subr.bf16.mxu0 0
        %754 = vmatpush1.bf16.xpose.msra.mxu0 0
        %755 = vmatprep.subr.bf16.mxu0 0
        %756 = vmatpush1.bf16.xpose.msra.mxu0 0
        %757 = vmatprep.subr.bf16.mxu0 0
        %758 = vmatpush1.bf16.xpose.msra.mxu0 %v741
        %759 = vmatprep.subr.bf16.mxu0 0
        %760 = vmatpush2.bf16.xpose.msra.mxu0 0
        %761 = vmatprep.subr.bf16.mxu0 0
        %762 = vmatpush2.bf16.xpose.msra.mxu0 0
        %763 = vmatprep.subr.bf16.mxu0 0
        %764 = vmatpush2.bf16.xpose.msra.mxu0 0
        %765 = vmatprep.subr.bf16.mxu0 0
        %766 = vmatpush2.bf16.xpose.msra.mxu0 0
        %767 = vmatprep.subr.bf16.mxu0 0
        %768 = vmatpush2.bf16.xpose.msra.mxu0 0
        %769 = vmatprep.subr.bf16.mxu0 0
        %770 = vmatpush2.bf16.xpose.msra.mxu0 0
        %771 = vmatprep.subr.bf16.mxu0 0
        %772 = vmatpush2.bf16.xpose.msra.mxu0 0
        %773 = vmatprep.subr.bf16.mxu0 0
        %774 = vmatpush2.bf16.xpose.msra.mxu0 0
        %775 = vmatprep.mubr.bf16.mxu0 0
        %776 = vmatmul.mubr.bf16.gmra.mxu0 %v738
        %v777 = vpop.f32.mrf.mxu0
        %v778 = vadd.f32 0.0, %v777
        %v779 = vpop.f32.mrf.mxu0
        %v780 = vpop.f32.mrf.mxu0
        %v781 = vpop.f32.mrf.mxu0
        %782 = vdwg.mxu0
        %vm783 = vcmask 130048
        %v784 = vsel %vm783, %v778, -inf
        %785 = vmax.xlane.f32.xlu0 %v784
        %v786 = vpop.xlane.xlu0 %785
        %v787 = vsub.f32 %v778, %v786
        %v788 = vmul.f32 %v787, 1.442695
        %v789 = vpow.pop %v788
        %v790 = vsel %vm783, %v789, 0.0
        %791 = vadd.xlane.f32.xlu0 %v790
        %v792 = vpop.xlane.xlu0 %791
        %v793 = vrcp.pop %v792
        %v794 = vmul.f32 %v789, %v793
        %v795 = vpack.c.bf16 %v794, %v794
        %v796 = vpack.c.bf16 %v730, %v727
        %v798 = vsel %vm783, %v795, 0
        %800 = vmatprep.subr.bf16.mxu0 0
        %801 = vmatpush1.bf16.msra.mxu0 0
        %802 = vmatprep.subr.bf16.mxu0 0
        %803 = vmatpush1.bf16.msra.mxu0 0
        %804 = vmatprep.subr.bf16.mxu0 0
        %805 = vmatpush1.bf16.msra.mxu0 0
        %806 = vmatprep.subr.bf16.mxu0 0
        %807 = vmatpush1.bf16.msra.mxu0 0
        %808 = vmatprep.subr.bf16.mxu0 0
        %809 = vmatpush1.bf16.msra.mxu0 0
        %810 = vmatprep.subr.bf16.mxu0 0
        %811 = vmatpush1.bf16.msra.mxu0 0
        %812 = vmatprep.subr.bf16.mxu0 0
        %813 = vmatpush1.bf16.msra.mxu0 0
        %814 = vmatprep.subr.bf16.mxu0 0
        %815 = vmatpush1.bf16.msra.mxu0 %v796
        %816 = vmatprep.subr.bf16.mxu0 0
        %817 = vmatpush2.bf16.msra.mxu0 0
        %818 = vmatprep.subr.bf16.mxu0 0
        %819 = vmatpush2.bf16.msra.mxu0 0
        %820 = vmatprep.subr.bf16.mxu0 0
        %821 = vmatpush2.bf16.msra.mxu0 0
        %822 = vmatprep.subr.bf16.mxu0 0
        %823 = vmatpush2.bf16.msra.mxu0 0
        %824 = vmatprep.subr.bf16.mxu0 0
        %825 = vmatpush2.bf16.msra.mxu0 0
        %826 = vmatprep.subr.bf16.mxu0 0
        %827 = vmatpush2.bf16.msra.mxu0 0
        %828 = vmatprep.subr.bf16.mxu0 0
        %829 = vmatpush2.bf16.msra.mxu0 0
        %830 = vmatprep.subr.bf16.mxu0 0
        %831 = vmatpush2.bf16.msra.mxu0 0
        %832 = vmatprep.mubr.bf16.mxu0 0
        %833 = vmatmul.mubr.bf16.gmra.mxu0 %v798
        %v834 = vpop.f32.mrf.mxu0
        %v835 = vadd.f32 0.0, %v834
        %v836 = vpop.f32.mrf.mxu0
        %v837 = vpop.f32.mrf.mxu0
        %v838 = vpop.f32.mrf.mxu0
        %839 = vdwg.mxu0
        %v840 = vpack.c.bf16 %v835, %v835
        %v841 = vld [vmem:[%s10] sm:$0xf]
        %s842 = scalar_lea.vmem %s4, 16
        %v843 = vld [vmem:[%s842] sm:$0xf]
        %v844 = vld [vmem:[%s842 + $0x4] sm:$0xf]
        %v845 = vld [vmem:[%s842 + $0x8] sm:$0xf]
        %v846 = vld [vmem:[%s842 + $0xc] sm:$0xf]
        %s847 = scalar_lea.vmem %s5, 1
        %v848 = vld [vmem:[%s847] sm:$0x1]
        %v850 = vlaneseq
        %v851 = vshrl.u32 %v850, 7
        %v852 = vsub.s32 0, %v851
        %v853 = vrot.slane %v848, %v852
        %v859 = vunpack.c.l.b16 %v843
        %v860 = vunpack.c.l.b16 %v844
        %v861 = vunpack.c.l.b16 %v845
        %v862 = vunpack.c.l.b16 %v846
        %v863 = vpack.c.b16 %v860, %v859
        %v864 = vpack.c.b16 %v862, %v861
        %867 = vmatprep.subr.bf16.mxu0 0
        %868 = vmatpush1.bf16.msra.mxu0 0
        %869 = vmatprep.subr.bf16.mxu0 0
        %870 = vmatpush1.bf16.msra.mxu0 0
        %871 = vmatprep.subr.bf16.mxu0 0
        %872 = vmatpush1.bf16.msra.mxu0 0
        %873 = vmatprep.subr.bf16.mxu0 0
        %874 = vmatpush1.bf16.msra.mxu0 0
        %875 = vmatprep.subr.bf16.mxu0 0
        %876 = vmatpush1.bf16.msra.mxu0 0
        %877 = vmatprep.subr.bf16.mxu0 0
        %878 = vmatpush1.bf16.msra.mxu0 0
        %879 = vmatprep.subr.bf16.mxu0 0
        %880 = vmatpush1.bf16.msra.mxu0 %v864
        %881 = vmatprep.subr.bf16.mxu0 0
        %882 = vmatpush1.bf16.msra.mxu0 %v863
        %883 = vmatprep.subr.bf16.mxu0 0
        %884 = vmatpush2.bf16.msra.mxu0 0
        %885 = vmatprep.subr.bf16.mxu0 0
        %886 = vmatpush2.bf16.msra.mxu0 0
        %887 = vmatprep.subr.bf16.mxu0 0
        %888 = vmatpush2.bf16.msra.mxu0 0
        %889 = vmatprep.subr.bf16.mxu0 0
        %890 = vmatpush2.bf16.msra.mxu0 0
        %891 = vmatprep.subr.bf16.mxu0 0
        %892 = vmatpush2.bf16.msra.mxu0 0
        %893 = vmatprep.subr.bf16.mxu0 0
        %894 = vmatpush2.bf16.msra.mxu0 0
        %895 = vmatprep.subr.bf16.mxu0 0
        %896 = vmatpush2.bf16.msra.mxu0 0
        %897 = vmatprep.subr.bf16.mxu0 0
        %898 = vmatpush2.bf16.msra.mxu0 0
        %899 = vmatprep.mubr.bf16.mxu0 0
        %900 = vmatmul.mubr.bf16.gmra.mxu0 %v560
        %v901 = vpop.f32.mrf.mxu0
        %v902 = vadd.f32 %v853, %v901
        %v903 = vpop.f32.mrf.mxu0
        %v904 = vpop.f32.mrf.mxu0
        %v905 = vpop.f32.mrf.mxu0
        %906 = vdwg.mxu0
        %s907 = scalar_lea.vmem %s6, 16
        %v908 = vld [vmem:[%s907] sm:$0xf]
        %v909 = vld [vmem:[%s907 + $0x4] sm:$0xf]
        %v910 = vld [vmem:[%s907 + $0x8] sm:$0xf]
        %v911 = vld [vmem:[%s907 + $0xc] sm:$0xf]
        %s912 = scalar_lea.vmem %s7, 1
        %v913 = vld [vmem:[%s912] sm:$0x1]
        %v915 = vlaneseq
        %v916 = vshrl.u32 %v915, 7
        %v917 = vsub.s32 0, %v916
        %v918 = vrot.slane %v913, %v917
        %v924 = vunpack.c.l.b16 %v908
        %v925 = vunpack.c.l.b16 %v909
        %v926 = vunpack.c.l.b16 %v910
        %v927 = vunpack.c.l.b16 %v911
        %v928 = vpack.c.b16 %v925, %v924
        %v929 = vpack.c.b16 %v927, %v926
        %932 = vmatprep.subr.bf16.mxu0 0
        %933 = vmatpush1.bf16.msra.mxu0 0
        %934 = vmatprep.subr.bf16.mxu0 0
        %935 = vmatpush1.bf16.msra.mxu0 0
        %936 = vmatprep.subr.bf16.mxu0 0
        %937 = vmatpush1.bf16.msra.mxu0 0
        %938 = vmatprep.subr.bf16.mxu0 0
        %939 = vmatpush1.bf16.msra.mxu0 0
        %940 = vmatprep.subr.bf16.mxu0 0
        %941 = vmatpush1.bf16.msra.mxu0 0
        %942 = vmatprep.subr.bf16.mxu0 0
        %943 = vmatpush1.bf16.msra.mxu0 0
        %944 = vmatprep.subr.bf16.mxu0 0
        %945 = vmatpush1.bf16.msra.mxu0 %v929
        %946 = vmatprep.subr.bf16.mxu0 0
        %947 = vmatpush1.bf16.msra.mxu0 %v928
        %948 = vmatprep.subr.bf16.mxu0 0
        %949 = vmatpush2.bf16.msra.mxu0 0
        %950 = vmatprep.subr.bf16.mxu0 0
        %951 = vmatpush2.bf16.msra.mxu0 0
        %952 = vmatprep.subr.bf16.mxu0 0
        %953 = vmatpush2.bf16.msra.mxu0 0
        %954 = vmatprep.subr.bf16.mxu0 0
        %955 = vmatpush2.bf16.msra.mxu0 0
        %956 = vmatprep.subr.bf16.mxu0 0
        %957 = vmatpush2.bf16.msra.mxu0 0
        %958 = vmatprep.subr.bf16.mxu0 0
        %959 = vmatpush2.bf16.msra.mxu0 0
        %960 = vmatprep.subr.bf16.mxu0 0
        %961 = vmatpush2.bf16.msra.mxu0 0
        %962 = vmatprep.subr.bf16.mxu0 0
        %963 = vmatpush2.bf16.msra.mxu0 0
        %964 = vmatprep.mubr.bf16.mxu0 0
        %965 = vmatmul.mubr.bf16.gmra.mxu0 %v626
        %v966 = vpop.f32.mrf.mxu0
        %v967 = vadd.f32 %v918, %v966
        %v968 = vpop.f32.mrf.mxu0
        %v969 = vpop.f32.mrf.mxu0
        %v970 = vadd.f32 %v918, %v969
        %v971 = vpop.f32.mrf.mxu0
        %972 = vdwg.mxu0
        %s973 = scalar_lea.vmem %s8, 16
        %v974 = vld [vmem:[%s973] sm:$0xf]
        %v975 = vld [vmem:[%s973 + $0x4] sm:$0xf]
        %v976 = vld [vmem:[%s973 + $0x8] sm:$0xf]
        %v977 = vld [vmem:[%s973 + $0xc] sm:$0xf]
        %s978 = scalar_lea.vmem %s9, 1
        %v979 = vld [vmem:[%s978] sm:$0x1]
        %v981 = vlaneseq
        %v982 = vshrl.u32 %v981, 7
        %v983 = vsub.s32 0, %v982
        %v984 = vrot.slane %v979, %v983
        %v990 = vunpack.c.l.b16 %v974
        %v991 = vunpack.c.l.b16 %v975
        %v992 = vunpack.c.l.b16 %v976
        %v993 = vunpack.c.l.b16 %v977
        %v994 = vpack.c.b16 %v991, %v990
        %v995 = vpack.c.b16 %v993, %v992
        %998 = vmatprep.subr.bf16.mxu0 0
        %999 = vmatpush1.bf16.msra.mxu0 0
        %1000 = vmatprep.subr.bf16.mxu0 0
        %1001 = vmatpush1.bf16.msra.mxu0 0
        %1002 = vmatprep.subr.bf16.mxu0 0
        %1003 = vmatpush1.bf16.msra.mxu0 0
        %1004 = vmatprep.subr.bf16.mxu0 0
        %1005 = vmatpush1.bf16.msra.mxu0 0
        %1006 = vmatprep.subr.bf16.mxu0 0
        %1007 = vmatpush1.bf16.msra.mxu0 0
        %1008 = vmatprep.subr.bf16.mxu0 0
        %1009 = vmatpush1.bf16.msra.mxu0 0
        %1010 = vmatprep.subr.bf16.mxu0 0
        %1011 = vmatpush1.bf16.msra.mxu0 %v995
        %1012 = vmatprep.subr.bf16.mxu0 0
        %1013 = vmatpush1.bf16.msra.mxu0 %v994
        %1014 = vmatprep.subr.bf16.mxu0 0
        %1015 = vmatpush2.bf16.msra.mxu0 0
        %1016 = vmatprep.subr.bf16.mxu0 0
        %1017 = vmatpush2.bf16.msra.mxu0 0
        %1018 = vmatprep.subr.bf16.mxu0 0
        %1019 = vmatpush2.bf16.msra.mxu0 0
        %1020 = vmatprep.subr.bf16.mxu0 0
        %1021 = vmatpush2.bf16.msra.mxu0 0
        %1022 = vmatprep.subr.bf16.mxu0 0
        %1023 = vmatpush2.bf16.msra.mxu0 0
        %1024 = vmatprep.subr.bf16.mxu0 0
        %1025 = vmatpush2.bf16.msra.mxu0 0
        %1026 = vmatprep.subr.bf16.mxu0 0
        %1027 = vmatpush2.bf16.msra.mxu0 0
        %1028 = vmatprep.subr.bf16.mxu0 0
        %1029 = vmatpush2.bf16.msra.mxu0 0
        %1030 = vmatprep.mubr.bf16.mxu0 0
        %1031 = vmatmul.mubr.bf16.gmra.mxu0 %v626
        %v1032 = vpop.f32.mrf.mxu0
        %v1033 = vadd.f32 %v984, %v1032
        %v1034 = vpop.f32.mrf.mxu0
        %v1035 = vpop.f32.mrf.mxu0
        %v1036 = vadd.f32 %v984, %v1035
        %v1037 = vpop.f32.mrf.mxu0
        %1038 = vdwg.mxu0
        %v1039 = vmul.f32 %v902, 0.35355338
        %v1040 = vpack.c.bf16 %v1039, %v1039
        %v1041 = vpack.c.bf16 %v970, %v967
        %v1043 = vsel %vm736, %v1040, 0
        %v1046 = vsel %vm736, %v1041, 0
        %1048 = vmatprep.subr.bf16.mxu0 0
        %1049 = vmatpush1.bf16.xpose.msra.mxu0 0
        %1050 = vmatprep.subr.bf16.mxu0 0
        %1051 = vmatpush1.bf16.xpose.msra.mxu0 0
        %1052 = vmatprep.subr.bf16.mxu0 0
        %1053 = vmatpush1.bf16.xpose.msra.mxu0 0
        %1054 = vmatprep.subr.bf16.mxu0 0
        %1055 = vmatpush1.bf16.xpose.msra.mxu0 0
        %1056 = vmatprep.subr.bf16.mxu0 0
        %1057 = vmatpush1.bf16.xpose.msra.mxu0 0
        %1058 = vmatprep.subr.bf16.mxu0 0
        %1059 = vmatpush1.bf16.xpose.msra.mxu0 0
        %1060 = vmatprep.subr.bf16.mxu0 0
        %1061 = vmatpush1.bf16.xpose.msra.mxu0 0
        %1062 = vmatprep.subr.bf16.mxu0 0
        %1063 = vmatpush1.bf16.xpose.msra.mxu0 %v1046
        %1064 = vmatprep.subr.bf16.mxu0 0
        %1065 = vmatpush2.bf16.xpose.msra.mxu0 0
        %1066 = vmatprep.subr.bf16.mxu0 0
        %1067 = vmatpush2.bf16.xpose.msra.mxu0 0
        %1068 = vmatprep.subr.bf16.mxu0 0
        %1069 = vmatpush2.bf16.xpose.msra.mxu0 0
        %1070 = vmatprep.subr.bf16.mxu0 0
        %1071 = vmatpush2.bf16.xpose.msra.mxu0 0
        %1072 = vmatprep.subr.bf16.mxu0 0
        %1073 = vmatpush2.bf16.xpose.msra.mxu0 0
        %1074 = vmatprep.subr.bf16.mxu0 0
        %1075 = vmatpush2.bf16.xpose.msra.mxu0 0
        %1076 = vmatprep.subr.bf16.mxu0 0
        %1077 = vmatpush2.bf16.xpose.msra.mxu0 0
        %1078 = vmatprep.subr.bf16.mxu0 0
        %1079 = vmatpush2.bf16.xpose.msra.mxu0 0
        %1080 = vmatprep.mubr.bf16.mxu0 0
        %1081 = vmatmul.mubr.bf16.gmra.mxu0 %v1043
        %v1082 = vpop.f32.mrf.mxu0
        %v1083 = vadd.f32 0.0, %v1082
        %v1084 = vpop.f32.mrf.mxu0
        %v1085 = vpop.f32.mrf.mxu0
        %v1086 = vpop.f32.mrf.mxu0
        %1087 = vdwg.mxu0
        %v1088 = vsel %vm783, %v1083, -inf
        %1089 = vmax.xlane.f32.xlu0 %v1088
        %v1090 = vpop.xlane.xlu0 %1089
        %v1091 = vsub.f32 %v1083, %v1090
        %v1092 = vmul.f32 %v1091, 1.442695
        %v1093 = vpow.pop %v1092
        %v1094 = vsel %vm783, %v1093, 0.0
        %1095 = vadd.xlane.f32.xlu0 %v1094
        %v1096 = vpop.xlane.xlu0 %1095
        %v1097 = vrcp.pop %v1096
        %v1098 = vmul.f32 %v1093, %v1097
        %v1099 = vpack.c.bf16 %v1098, %v1098
        %v1100 = vpack.c.bf16 %v1036, %v1033
        %v1102 = vsel %vm783, %v1099, 0
        %1104 = vmatprep.subr.bf16.mxu0 0
        %1105 = vmatpush1.bf16.msra.mxu0 0
        %1106 = vmatprep.subr.bf16.mxu0 0
        %1107 = vmatpush1.bf16.msra.mxu0 0
        %1108 = vmatprep.subr.bf16.mxu0 0
        %1109 = vmatpush1.bf16.msra.mxu0 0
        %1110 = vmatprep.subr.bf16.mxu0 0
        %1111 = vmatpush1.bf16.msra.mxu0 0
        %1112 = vmatprep.subr.bf16.mxu0 0
        %1113 = vmatpush1.bf16.msra.mxu0 0
        %1114 = vmatprep.subr.bf16.mxu0 0
        %1115 = vmatpush1.bf16.msra.mxu0 0
        %1116 = vmatprep.subr.bf16.mxu0 0
        %1117 = vmatpush1.bf16.msra.mxu0 0
        %1118 = vmatprep.subr.bf16.mxu0 0
        %1119 = vmatpush1.bf16.msra.mxu0 %v1100
        %1120 = vmatprep.subr.bf16.mxu0 0
        %1121 = vmatpush2.bf16.msra.mxu0 0
        %1122 = vmatprep.subr.bf16.mxu0 0
        %1123 = vmatpush2.bf16.msra.mxu0 0
        %1124 = vmatprep.subr.bf16.mxu0 0
        %1125 = vmatpush2.bf16.msra.mxu0 0
        %1126 = vmatprep.subr.bf16.mxu0 0
        %1127 = vmatpush2.bf16.msra.mxu0 0
        %1128 = vmatprep.subr.bf16.mxu0 0
        %1129 = vmatpush2.bf16.msra.mxu0 0
        %1130 = vmatprep.subr.bf16.mxu0 0
        %1131 = vmatpush2.bf16.msra.mxu0 0
        %1132 = vmatprep.subr.bf16.mxu0 0
        %1133 = vmatpush2.bf16.msra.mxu0 0
        %1134 = vmatprep.subr.bf16.mxu0 0
        %1135 = vmatpush2.bf16.msra.mxu0 0
        %1136 = vmatprep.mubr.bf16.mxu0 0
        %1137 = vmatmul.mubr.bf16.gmra.mxu0 %v1102
        %v1138 = vpop.f32.mrf.mxu0
        %v1139 = vadd.f32 0.0, %v1138
        %v1140 = vpop.f32.mrf.mxu0
        %v1141 = vpop.f32.mrf.mxu0
        %v1142 = vpop.f32.mrf.mxu0
        %1143 = vdwg.mxu0
        %v1144 = vpack.c.bf16 %v1139, %v1139
        %s1145 = scalar_lea.vmem %s10, 4
        %v1146 = vld [vmem:[%s1145] sm:$0xf]
        %v1148 = vsel %vm736, %v1144, 0
        %vm1150 = vcmask 1043456
        %v1152 = vsel %vm1150, %v1146, 0
        %1154 = vmatprep.subr.bf16.mxu0 0
        %1155 = vmatpush1.bf16.msra.mxu0 0
        %1156 = vmatprep.subr.bf16.mxu0 0
        %1157 = vmatpush1.bf16.msra.mxu0 0
        %1158 = vmatprep.subr.bf16.mxu0 0
        %1159 = vmatpush1.bf16.msra.mxu0 0
        %1160 = vmatprep.subr.bf16.mxu0 0
        %1161 = vmatpush1.bf16.msra.mxu0 0
        %1162 = vmatprep.subr.bf16.mxu0 0
        %1163 = vmatpush1.bf16.msra.mxu0 0
        %1164 = vmatprep.subr.bf16.mxu0 0
        %1165 = vmatpush1.bf16.msra.mxu0 0
        %1166 = vmatprep.subr.bf16.mxu0 0
        %1167 = vmatpush1.bf16.msra.mxu0 0
        %1168 = vmatprep.subr.bf16.mxu0 0
        %1169 = vmatpush1.bf16.msra.mxu0 %v1152
        %1170 = vmatprep.subr.bf16.mxu0 0
        %1171 = vmatpush2.bf16.msra.mxu0 0
        %1172 = vmatprep.subr.bf16.mxu0 0
        %1173 = vmatpush2.bf16.msra.mxu0 0
        %1174 = vmatprep.subr.bf16.mxu0 0
        %1175 = vmatpush2.bf16.msra.mxu0 0
        %1176 = vmatprep.subr.bf16.mxu0 0
        %1177 = vmatpush2.bf16.msra.mxu0 0
        %1178 = vmatprep.subr.bf16.mxu0 0
        %1179 = vmatpush2.bf16.msra.mxu0 0
        %1180 = vmatprep.subr.bf16.mxu0 0
        %1181 = vmatpush2.bf16.msra.mxu0 0
        %1182 = vmatprep.subr.bf16.mxu0 0
        %1183 = vmatpush2.bf16.msra.mxu0 0
        %1184 = vmatprep.subr.bf16.mxu0 0
        %1185 = vmatpush2.bf16.msra.mxu0 0
        %1186 = vmatprep.mubr.bf16.mxu0 0
        %1187 = vmatmul.mubr.bf16.gmra.mxu0 %v1148
        %v1188 = vpop.f32.mrf.mxu0
        %v1189 = vadd.f32 0.0, %v1188
        %v1190 = vpop.f32.mrf.mxu0
        %v1191 = vpop.f32.mrf.mxu0
        %v1192 = vpop.f32.mrf.mxu0
        %1193 = vdwg.mxu0
        %v1195 = vsel %vm736, %v840, 0
        %v1198 = vsel %vm1150, %v841, 0
        %1200 = vmatprep.subr.bf16.mxu0 0
        %1201 = vmatpush1.bf16.msra.mxu0 0
        %1202 = vmatprep.subr.bf16.mxu0 0
        %1203 = vmatpush1.bf16.msra.mxu0 0
        %1204 = vmatprep.subr.bf16.mxu0 0
        %1205 = vmatpush1.bf16.msra.mxu0 0
        %1206 = vmatprep.subr.bf16.mxu0 0
        %1207 = vmatpush1.bf16.msra.mxu0 0
        %1208 = vmatprep.subr.bf16.mxu0 0
        %1209 = vmatpush1.bf16.msra.mxu0 0
        %1210 = vmatprep.subr.bf16.mxu0 0
        %1211 = vmatpush1.bf16.msra.mxu0 0
        %1212 = vmatprep.subr.bf16.mxu0 0
        %1213 = vmatpush1.bf16.msra.mxu0 0
        %1214 = vmatprep.subr.bf16.mxu0 0
        %1215 = vmatpush1.bf16.msra.mxu0 %v1198
        %1216 = vmatprep.subr.bf16.mxu0 0
        %1217 = vmatpush2.bf16.msra.mxu0 0
        %1218 = vmatprep.subr.bf16.mxu0 0
        %1219 = vmatpush2.bf16.msra.mxu0 0
        %1220 = vmatprep.subr.bf16.mxu0 0
        %1221 = vmatpush2.bf16.msra.mxu0 0
        %1222 = vmatprep.subr.bf16.mxu0 0
        %1223 = vmatpush2.bf16.msra.mxu0 0
        %1224 = vmatprep.subr.bf16.mxu0 0
        %1225 = vmatpush2.bf16.msra.mxu0 0
        %1226 = vmatprep.subr.bf16.mxu0 0
        %1227 = vmatpush2.bf16.msra.mxu0 0
        %1228 = vmatprep.subr.bf16.mxu0 0
        %1229 = vmatpush2.bf16.msra.mxu0 0
        %1230 = vmatprep.subr.bf16.mxu0 0
        %1231 = vmatpush2.bf16.msra.mxu0 0
        %1232 = vmatprep.mubr.bf16.mxu0 0
        %1233 = vmatmul.mubr.bf16.gmra.mxu0 %v1195
        %v1234 = vpop.f32.mrf.mxu0
        %v1235 = vadd.f32 %v1189, %v1234
        %v1236 = vpop.f32.mrf.mxu0
        %v1237 = vpop.f32.mrf.mxu0
        %v1238 = vpop.f32.mrf.mxu0
        %1239 = vdwg.mxu0
        %s1240 = scalar_lea.vmem %s4, 32
        %v1241 = vld [vmem:[%s1240] sm:$0xf]
        %v1242 = vld [vmem:[%s1240 + $0x4] sm:$0xf]
        %v1243 = vld [vmem:[%s1240 + $0x8] sm:$0xf]
        %v1244 = vld [vmem:[%s1240 + $0xc] sm:$0xf]
        %s1245 = scalar_lea.vmem %s5, 2
        %v1246 = vld [vmem:[%s1245] sm:$0x1]
        %v1248 = vlaneseq
        %v1249 = vshrl.u32 %v1248, 7
        %v1250 = vsub.s32 0, %v1249
        %v1251 = vrot.slane %v1246, %v1250
        %v1257 = vunpack.c.l.b16 %v1241
        %v1258 = vunpack.c.l.b16 %v1242
        %v1259 = vunpack.c.l.b16 %v1243
        %v1260 = vunpack.c.l.b16 %v1244
        %v1261 = vpack.c.b16 %v1258, %v1257
        %v1262 = vpack.c.b16 %v1260, %v1259
        %1265 = vmatprep.subr.bf16.mxu0 0
        %1266 = vmatpush1.bf16.msra.mxu0 0
        %1267 = vmatprep.subr.bf16.mxu0 0
        %1268 = vmatpush1.bf16.msra.mxu0 0
        %1269 = vmatprep.subr.bf16.mxu0 0
        %1270 = vmatpush1.bf16.msra.mxu0 0
        %1271 = vmatprep.subr.bf16.mxu0 0
        %1272 = vmatpush1.bf16.msra.mxu0 0
        %1273 = vmatprep.subr.bf16.mxu0 0
        %1274 = vmatpush1.bf16.msra.mxu0 0
        %1275 = vmatprep.subr.bf16.mxu0 0
        %1276 = vmatpush1.bf16.msra.mxu0 0
        %1277 = vmatprep.subr.bf16.mxu0 0
        %1278 = vmatpush1.bf16.msra.mxu0 %v1262
        %1279 = vmatprep.subr.bf16.mxu0 0
        %1280 = vmatpush1.bf16.msra.mxu0 %v1261
        %1281 = vmatprep.subr.bf16.mxu0 0
        %1282 = vmatpush2.bf16.msra.mxu0 0
        %1283 = vmatprep.subr.bf16.mxu0 0
        %1284 = vmatpush2.bf16.msra.mxu0 0
        %1285 = vmatprep.subr.bf16.mxu0 0
        %1286 = vmatpush2.bf16.msra.mxu0 0
        %1287 = vmatprep.subr.bf16.mxu0 0
        %1288 = vmatpush2.bf16.msra.mxu0 0
        %1289 = vmatprep.subr.bf16.mxu0 0
        %1290 = vmatpush2.bf16.msra.mxu0 0
        %1291 = vmatprep.subr.bf16.mxu0 0
        %1292 = vmatpush2.bf16.msra.mxu0 0
        %1293 = vmatprep.subr.bf16.mxu0 0
        %1294 = vmatpush2.bf16.msra.mxu0 0
        %1295 = vmatprep.subr.bf16.mxu0 0
        %1296 = vmatpush2.bf16.msra.mxu0 0
        %1297 = vmatprep.mubr.bf16.mxu0 0
        %1298 = vmatmul.mubr.bf16.gmra.mxu0 %v560
        %v1299 = vpop.f32.mrf.mxu0
        %v1300 = vadd.f32 %v1251, %v1299
        %v1301 = vpop.f32.mrf.mxu0
        %v1302 = vpop.f32.mrf.mxu0
        %v1303 = vpop.f32.mrf.mxu0
        %1304 = vdwg.mxu0
        %s1305 = scalar_lea.vmem %s6, 32
        %v1306 = vld [vmem:[%s1305] sm:$0xf]
        %v1307 = vld [vmem:[%s1305 + $0x4] sm:$0xf]
        %v1308 = vld [vmem:[%s1305 + $0x8] sm:$0xf]
        %v1309 = vld [vmem:[%s1305 + $0xc] sm:$0xf]
        %s1310 = scalar_lea.vmem %s7, 2
        %v1311 = vld [vmem:[%s1310] sm:$0x1]
        %v1313 = vlaneseq
        %v1314 = vshrl.u32 %v1313, 7
        %v1315 = vsub.s32 0, %v1314
        %v1316 = vrot.slane %v1311, %v1315
        %v1322 = vunpack.c.l.b16 %v1306
        %v1323 = vunpack.c.l.b16 %v1307
        %v1324 = vunpack.c.l.b16 %v1308
        %v1325 = vunpack.c.l.b16 %v1309
        %v1326 = vpack.c.b16 %v1323, %v1322
        %v1327 = vpack.c.b16 %v1325, %v1324
        %1330 = vmatprep.subr.bf16.mxu0 0
        %1331 = vmatpush1.bf16.msra.mxu0 0
        %1332 = vmatprep.subr.bf16.mxu0 0
        %1333 = vmatpush1.bf16.msra.mxu0 0
        %1334 = vmatprep.subr.bf16.mxu0 0
        %1335 = vmatpush1.bf16.msra.mxu0 0
        %1336 = vmatprep.subr.bf16.mxu0 0
        %1337 = vmatpush1.bf16.msra.mxu0 0
        %1338 = vmatprep.subr.bf16.mxu0 0
        %1339 = vmatpush1.bf16.msra.mxu0 0
        %1340 = vmatprep.subr.bf16.mxu0 0
        %1341 = vmatpush1.bf16.msra.mxu0 0
        %1342 = vmatprep.subr.bf16.mxu0 0
        %1343 = vmatpush1.bf16.msra.mxu0 %v1327
        %1344 = vmatprep.subr.bf16.mxu0 0
        %1345 = vmatpush1.bf16.msra.mxu0 %v1326
        %1346 = vmatprep.subr.bf16.mxu0 0
        %1347 = vmatpush2.bf16.msra.mxu0 0
        %1348 = vmatprep.subr.bf16.mxu0 0
        %1349 = vmatpush2.bf16.msra.mxu0 0
        %1350 = vmatprep.subr.bf16.mxu0 0
        %1351 = vmatpush2.bf16.msra.mxu0 0
        %1352 = vmatprep.subr.bf16.mxu0 0
        %1353 = vmatpush2.bf16.msra.mxu0 0
        %1354 = vmatprep.subr.bf16.mxu0 0
        %1355 = vmatpush2.bf16.msra.mxu0 0
        %1356 = vmatprep.subr.bf16.mxu0 0
        %1357 = vmatpush2.bf16.msra.mxu0 0
        %1358 = vmatprep.subr.bf16.mxu0 0
        %1359 = vmatpush2.bf16.msra.mxu0 0
        %1360 = vmatprep.subr.bf16.mxu0 0
        %1361 = vmatpush2.bf16.msra.mxu0 0
        %1362 = vmatprep.mubr.bf16.mxu0 0
        %1363 = vmatmul.mubr.bf16.gmra.mxu0 %v626
        %v1364 = vpop.f32.mrf.mxu0
        %v1365 = vadd.f32 %v1316, %v1364
        %v1366 = vpop.f32.mrf.mxu0
        %v1367 = vpop.f32.mrf.mxu0
        %v1368 = vadd.f32 %v1316, %v1367
        %v1369 = vpop.f32.mrf.mxu0
        %1370 = vdwg.mxu0
        %s1371 = scalar_lea.vmem %s8, 32
        %v1372 = vld [vmem:[%s1371] sm:$0xf]
        %v1373 = vld [vmem:[%s1371 + $0x4] sm:$0xf]
        %v1374 = vld [vmem:[%s1371 + $0x8] sm:$0xf]
        %v1375 = vld [vmem:[%s1371 + $0xc] sm:$0xf]
        %s1376 = scalar_lea.vmem %s9, 2
        %v1377 = vld [vmem:[%s1376] sm:$0x1]
        %v1379 = vlaneseq
        %v1380 = vshrl.u32 %v1379, 7
        %v1381 = vsub.s32 0, %v1380
        %v1382 = vrot.slane %v1377, %v1381
        %v1388 = vunpack.c.l.b16 %v1372
        %v1389 = vunpack.c.l.b16 %v1373
        %v1390 = vunpack.c.l.b16 %v1374
        %v1391 = vunpack.c.l.b16 %v1375
        %v1392 = vpack.c.b16 %v1389, %v1388
        %v1393 = vpack.c.b16 %v1391, %v1390
        %1396 = vmatprep.subr.bf16.mxu0 0
        %1397 = vmatpush1.bf16.msra.mxu0 0
        %1398 = vmatprep.subr.bf16.mxu0 0
        %1399 = vmatpush1.bf16.msra.mxu0 0
        %1400 = vmatprep.subr.bf16.mxu0 0
        %1401 = vmatpush1.bf16.msra.mxu0 0
        %1402 = vmatprep.subr.bf16.mxu0 0
        %1403 = vmatpush1.bf16.msra.mxu0 0
        %1404 = vmatprep.subr.bf16.mxu0 0
        %1405 = vmatpush1.bf16.msra.mxu0 0
        %1406 = vmatprep.subr.bf16.mxu0 0
        %1407 = vmatpush1.bf16.msra.mxu0 0
        %1408 = vmatprep.subr.bf16.mxu0 0
        %1409 = vmatpush1.bf16.msra.mxu0 %v1393
        %1410 = vmatprep.subr.bf16.mxu0 0
        %1411 = vmatpush1.bf16.msra.mxu0 %v1392
        %1412 = vmatprep.subr.bf16.mxu0 0
        %1413 = vmatpush2.bf16.msra.mxu0 0
        %1414 = vmatprep.subr.bf16.mxu0 0
        %1415 = vmatpush2.bf16.msra.mxu0 0
        %1416 = vmatprep.subr.bf16.mxu0 0
        %1417 = vmatpush2.bf16.msra.mxu0 0
        %1418 = vmatprep.subr.bf16.mxu0 0
        %1419 = vmatpush2.bf16.msra.mxu0 0
        %1420 = vmatprep.subr.bf16.mxu0 0
        %1421 = vmatpush2.bf16.msra.mxu0 0
        %1422 = vmatprep.subr.bf16.mxu0 0
        %1423 = vmatpush2.bf16.msra.mxu0 0
        %1424 = vmatprep.subr.bf16.mxu0 0
        %1425 = vmatpush2.bf16.msra.mxu0 0
        %1426 = vmatprep.subr.bf16.mxu0 0
        %1427 = vmatpush2.bf16.msra.mxu0 0
        %1428 = vmatprep.mubr.bf16.mxu0 0
        %1429 = vmatmul.mubr.bf16.gmra.mxu0 %v626
        %v1430 = vpop.f32.mrf.mxu0
        %v1431 = vadd.f32 %v1382, %v1430
        %v1432 = vpop.f32.mrf.mxu0
        %v1433 = vpop.f32.mrf.mxu0
        %v1434 = vadd.f32 %v1382, %v1433
        %v1435 = vpop.f32.mrf.mxu0
        %1436 = vdwg.mxu0
        %v1437 = vmul.f32 %v1300, 0.35355338
        %v1438 = vpack.c.bf16 %v1437, %v1437
        %v1439 = vpack.c.bf16 %v1368, %v1365
        %v1441 = vsel %vm736, %v1438, 0
        %v1444 = vsel %vm736, %v1439, 0
        %1446 = vmatprep.subr.bf16.mxu0 0
        %1447 = vmatpush1.bf16.xpose.msra.mxu0 0
        %1448 = vmatprep.subr.bf16.mxu0 0
        %1449 = vmatpush1.bf16.xpose.msra.mxu0 0
        %1450 = vmatprep.subr.bf16.mxu0 0
        %1451 = vmatpush1.bf16.xpose.msra.mxu0 0
        %1452 = vmatprep.subr.bf16.mxu0 0
        %1453 = vmatpush1.bf16.xpose.msra.mxu0 0
        %1454 = vmatprep.subr.bf16.mxu0 0
        %1455 = vmatpush1.bf16.xpose.msra.mxu0 0
        %1456 = vmatprep.subr.bf16.mxu0 0
        %1457 = vmatpush1.bf16.xpose.msra.mxu0 0
        %1458 = vmatprep.subr.bf16.mxu0 0
        %1459 = vmatpush1.bf16.xpose.msra.mxu0 0
        %1460 = vmatprep.subr.bf16.mxu0 0
        %1461 = vmatpush1.bf16.xpose.msra.mxu0 %v1444
        %1462 = vmatprep.subr.bf16.mxu0 0
        %1463 = vmatpush2.bf16.xpose.msra.mxu0 0
        %1464 = vmatprep.subr.bf16.mxu0 0
        %1465 = vmatpush2.bf16.xpose.msra.mxu0 0
        %1466 = vmatprep.subr.bf16.mxu0 0
        %1467 = vmatpush2.bf16.xpose.msra.mxu0 0
        %1468 = vmatprep.subr.bf16.mxu0 0
        %1469 = vmatpush2.bf16.xpose.msra.mxu0 0
        %1470 = vmatprep.subr.bf16.mxu0 0
        %1471 = vmatpush2.bf16.xpose.msra.mxu0 0
        %1472 = vmatprep.subr.bf16.mxu0 0
        %1473 = vmatpush2.bf16.xpose.msra.mxu0 0
        %1474 = vmatprep.subr.bf16.mxu0 0
        %1475 = vmatpush2.bf16.xpose.msra.mxu0 0
        %1476 = vmatprep.subr.bf16.mxu0 0
        %1477 = vmatpush2.bf16.xpose.msra.mxu0 0
        %1478 = vmatprep.mubr.bf16.mxu0 0
        %1479 = vmatmul.mubr.bf16.gmra.mxu0 %v1441
        %v1480 = vpop.f32.mrf.mxu0
        %v1481 = vadd.f32 0.0, %v1480
        %v1482 = vpop.f32.mrf.mxu0
        %v1483 = vpop.f32.mrf.mxu0
        %v1484 = vpop.f32.mrf.mxu0
        %1485 = vdwg.mxu0
        %v1486 = vsel %vm783, %v1481, -inf
        %1487 = vmax.xlane.f32.xlu0 %v1486
        %v1488 = vpop.xlane.xlu0 %1487
        %v1489 = vsub.f32 %v1481, %v1488
        %v1490 = vmul.f32 %v1489, 1.442695
        %v1491 = vpow.pop %v1490
        %v1492 = vsel %vm783, %v1491, 0.0
        %1493 = vadd.xlane.f32.xlu0 %v1492
        %v1494 = vpop.xlane.xlu0 %1493
        %v1495 = vrcp.pop %v1494
        %v1496 = vmul.f32 %v1491, %v1495
        %v1497 = vpack.c.bf16 %v1496, %v1496
        %v1498 = vpack.c.bf16 %v1434, %v1431
        %v1500 = vsel %vm783, %v1497, 0
        %1502 = vmatprep.subr.bf16.mxu0 0
        %1503 = vmatpush1.bf16.msra.mxu0 0
        %1504 = vmatprep.subr.bf16.mxu0 0
        %1505 = vmatpush1.bf16.msra.mxu0 0
        %1506 = vmatprep.subr.bf16.mxu0 0
        %1507 = vmatpush1.bf16.msra.mxu0 0
        %1508 = vmatprep.subr.bf16.mxu0 0
        %1509 = vmatpush1.bf16.msra.mxu0 0
        %1510 = vmatprep.subr.bf16.mxu0 0
        %1511 = vmatpush1.bf16.msra.mxu0 0
        %1512 = vmatprep.subr.bf16.mxu0 0
        %1513 = vmatpush1.bf16.msra.mxu0 0
        %1514 = vmatprep.subr.bf16.mxu0 0
        %1515 = vmatpush1.bf16.msra.mxu0 0
        %1516 = vmatprep.subr.bf16.mxu0 0
        %1517 = vmatpush1.bf16.msra.mxu0 %v1498
        %1518 = vmatprep.subr.bf16.mxu0 0
        %1519 = vmatpush2.bf16.msra.mxu0 0
        %1520 = vmatprep.subr.bf16.mxu0 0
        %1521 = vmatpush2.bf16.msra.mxu0 0
        %1522 = vmatprep.subr.bf16.mxu0 0
        %1523 = vmatpush2.bf16.msra.mxu0 0
        %1524 = vmatprep.subr.bf16.mxu0 0
        %1525 = vmatpush2.bf16.msra.mxu0 0
        %1526 = vmatprep.subr.bf16.mxu0 0
        %1527 = vmatpush2.bf16.msra.mxu0 0
        %1528 = vmatprep.subr.bf16.mxu0 0
        %1529 = vmatpush2.bf16.msra.mxu0 0
        %1530 = vmatprep.subr.bf16.mxu0 0
        %1531 = vmatpush2.bf16.msra.mxu0 0
        %1532 = vmatprep.subr.bf16.mxu0 0
        %1533 = vmatpush2.bf16.msra.mxu0 0
        %1534 = vmatprep.mubr.bf16.mxu0 0
        %1535 = vmatmul.mubr.bf16.gmra.mxu0 %v1500
        %v1536 = vpop.f32.mrf.mxu0
        %v1537 = vadd.f32 0.0, %v1536
        %v1538 = vpop.f32.mrf.mxu0
        %v1539 = vpop.f32.mrf.mxu0
        %v1540 = vpop.f32.mrf.mxu0
        %1541 = vdwg.mxu0
        %v1542 = vpack.c.bf16 %v1537, %v1537
        %s1543 = scalar_lea.vmem %s10, 8
        %v1544 = vld [vmem:[%s1543] sm:$0xf]
        %v1546 = vsel %vm736, %v1542, 0
        %v1549 = vsel %vm1150, %v1544, 0
        %1551 = vmatprep.subr.bf16.mxu0 0
        %1552 = vmatpush1.bf16.msra.mxu0 0
        %1553 = vmatprep.subr.bf16.mxu0 0
        %1554 = vmatpush1.bf16.msra.mxu0 0
        %1555 = vmatprep.subr.bf16.mxu0 0
        %1556 = vmatpush1.bf16.msra.mxu0 0
        %1557 = vmatprep.subr.bf16.mxu0 0
        %1558 = vmatpush1.bf16.msra.mxu0 0
        %1559 = vmatprep.subr.bf16.mxu0 0
        %1560 = vmatpush1.bf16.msra.mxu0 0
        %1561 = vmatprep.subr.bf16.mxu0 0
        %1562 = vmatpush1.bf16.msra.mxu0 0
        %1563 = vmatprep.subr.bf16.mxu0 0
        %1564 = vmatpush1.bf16.msra.mxu0 0
        %1565 = vmatprep.subr.bf16.mxu0 0
        %1566 = vmatpush1.bf16.msra.mxu0 %v1549
        %1567 = vmatprep.subr.bf16.mxu0 0
        %1568 = vmatpush2.bf16.msra.mxu0 0
        %1569 = vmatprep.subr.bf16.mxu0 0
        %1570 = vmatpush2.bf16.msra.mxu0 0
        %1571 = vmatprep.subr.bf16.mxu0 0
        %1572 = vmatpush2.bf16.msra.mxu0 0
        %1573 = vmatprep.subr.bf16.mxu0 0
        %1574 = vmatpush2.bf16.msra.mxu0 0
        %1575 = vmatprep.subr.bf16.mxu0 0
        %1576 = vmatpush2.bf16.msra.mxu0 0
        %1577 = vmatprep.subr.bf16.mxu0 0
        %1578 = vmatpush2.bf16.msra.mxu0 0
        %1579 = vmatprep.subr.bf16.mxu0 0
        %1580 = vmatpush2.bf16.msra.mxu0 0
        %1581 = vmatprep.subr.bf16.mxu0 0
        %1582 = vmatpush2.bf16.msra.mxu0 0
        %1583 = vmatprep.mubr.bf16.mxu0 0
        %1584 = vmatmul.mubr.bf16.gmra.mxu0 %v1546
        %v1585 = vpop.f32.mrf.mxu0
        %v1586 = vadd.f32 0.0, %v1585
        %v1587 = vpop.f32.mrf.mxu0
        %v1588 = vpop.f32.mrf.mxu0
        %v1589 = vpop.f32.mrf.mxu0
        %1590 = vdwg.mxu0
        %v1591 = vadd.f32 %v1235, %v1586
        %s1592 = scalar_lea.vmem %s4, 48
        %v1593 = vld [vmem:[%s1592] sm:$0xf]
        %v1594 = vld [vmem:[%s1592 + $0x4] sm:$0xf]
        %v1595 = vld [vmem:[%s1592 + $0x8] sm:$0xf]
        %v1596 = vld [vmem:[%s1592 + $0xc] sm:$0xf]
        %s1597 = scalar_lea.vmem %s5, 3
        %v1598 = vld [vmem:[%s1597] sm:$0x1]
        %v1600 = vlaneseq
        %v1601 = vshrl.u32 %v1600, 7
        %v1602 = vsub.s32 0, %v1601
        %v1603 = vrot.slane %v1598, %v1602
        %v1609 = vunpack.c.l.b16 %v1593
        %v1610 = vunpack.c.l.b16 %v1594
        %v1611 = vunpack.c.l.b16 %v1595
        %v1612 = vunpack.c.l.b16 %v1596
        %v1613 = vpack.c.b16 %v1610, %v1609
        %v1614 = vpack.c.b16 %v1612, %v1611
        %1617 = vmatprep.subr.bf16.mxu0 0
        %1618 = vmatpush1.bf16.msra.mxu0 0
        %1619 = vmatprep.subr.bf16.mxu0 0
        %1620 = vmatpush1.bf16.msra.mxu0 0
        %1621 = vmatprep.subr.bf16.mxu0 0
        %1622 = vmatpush1.bf16.msra.mxu0 0
        %1623 = vmatprep.subr.bf16.mxu0 0
        %1624 = vmatpush1.bf16.msra.mxu0 0
        %1625 = vmatprep.subr.bf16.mxu0 0
        %1626 = vmatpush1.bf16.msra.mxu0 0
        %1627 = vmatprep.subr.bf16.mxu0 0
        %1628 = vmatpush1.bf16.msra.mxu0 0
        %1629 = vmatprep.subr.bf16.mxu0 0
        %1630 = vmatpush1.bf16.msra.mxu0 %v1614
        %1631 = vmatprep.subr.bf16.mxu0 0
        %1632 = vmatpush1.bf16.msra.mxu0 %v1613
        %1633 = vmatprep.subr.bf16.mxu0 0
        %1634 = vmatpush2.bf16.msra.mxu0 0
        %1635 = vmatprep.subr.bf16.mxu0 0
        %1636 = vmatpush2.bf16.msra.mxu0 0
        %1637 = vmatprep.subr.bf16.mxu0 0
        %1638 = vmatpush2.bf16.msra.mxu0 0
        %1639 = vmatprep.subr.bf16.mxu0 0
        %1640 = vmatpush2.bf16.msra.mxu0 0
        %1641 = vmatprep.subr.bf16.mxu0 0
        %1642 = vmatpush2.bf16.msra.mxu0 0
        %1643 = vmatprep.subr.bf16.mxu0 0
        %1644 = vmatpush2.bf16.msra.mxu0 0
        %1645 = vmatprep.subr.bf16.mxu0 0
        %1646 = vmatpush2.bf16.msra.mxu0 0
        %1647 = vmatprep.subr.bf16.mxu0 0
        %1648 = vmatpush2.bf16.msra.mxu0 0
        %1649 = vmatprep.mubr.bf16.mxu0 0
        %1650 = vmatmul.mubr.bf16.gmra.mxu0 %v560
        %v1651 = vpop.f32.mrf.mxu0
        %v1652 = vadd.f32 %v1603, %v1651
        %v1653 = vpop.f32.mrf.mxu0
        %v1654 = vpop.f32.mrf.mxu0
        %v1655 = vpop.f32.mrf.mxu0
        %1656 = vdwg.mxu0
        %s1657 = scalar_lea.vmem %s6, 48
        %v1658 = vld [vmem:[%s1657] sm:$0xf]
        %v1659 = vld [vmem:[%s1657 + $0x4] sm:$0xf]
        %v1660 = vld [vmem:[%s1657 + $0x8] sm:$0xf]
        %v1661 = vld [vmem:[%s1657 + $0xc] sm:$0xf]
        %s1662 = scalar_lea.vmem %s7, 3
        %v1663 = vld [vmem:[%s1662] sm:$0x1]
        %v1665 = vlaneseq
        %v1666 = vshrl.u32 %v1665, 7
        %v1667 = vsub.s32 0, %v1666
        %v1668 = vrot.slane %v1663, %v1667
        %v1674 = vunpack.c.l.b16 %v1658
        %v1675 = vunpack.c.l.b16 %v1659
        %v1676 = vunpack.c.l.b16 %v1660
        %v1677 = vunpack.c.l.b16 %v1661
        %v1678 = vpack.c.b16 %v1675, %v1674
        %v1679 = vpack.c.b16 %v1677, %v1676
        %1682 = vmatprep.subr.bf16.mxu0 0
        %1683 = vmatpush1.bf16.msra.mxu0 0
        %1684 = vmatprep.subr.bf16.mxu0 0
        %1685 = vmatpush1.bf16.msra.mxu0 0
        %1686 = vmatprep.subr.bf16.mxu0 0
        %1687 = vmatpush1.bf16.msra.mxu0 0
        %1688 = vmatprep.subr.bf16.mxu0 0
        %1689 = vmatpush1.bf16.msra.mxu0 0
        %1690 = vmatprep.subr.bf16.mxu0 0
        %1691 = vmatpush1.bf16.msra.mxu0 0
        %1692 = vmatprep.subr.bf16.mxu0 0
        %1693 = vmatpush1.bf16.msra.mxu0 0
        %1694 = vmatprep.subr.bf16.mxu0 0
        %1695 = vmatpush1.bf16.msra.mxu0 %v1679
        %1696 = vmatprep.subr.bf16.mxu0 0
        %1697 = vmatpush1.bf16.msra.mxu0 %v1678
        %1698 = vmatprep.subr.bf16.mxu0 0
        %1699 = vmatpush2.bf16.msra.mxu0 0
        %1700 = vmatprep.subr.bf16.mxu0 0
        %1701 = vmatpush2.bf16.msra.mxu0 0
        %1702 = vmatprep.subr.bf16.mxu0 0
        %1703 = vmatpush2.bf16.msra.mxu0 0
        %1704 = vmatprep.subr.bf16.mxu0 0
        %1705 = vmatpush2.bf16.msra.mxu0 0
        %1706 = vmatprep.subr.bf16.mxu0 0
        %1707 = vmatpush2.bf16.msra.mxu0 0
        %1708 = vmatprep.subr.bf16.mxu0 0
        %1709 = vmatpush2.bf16.msra.mxu0 0
        %1710 = vmatprep.subr.bf16.mxu0 0
        %1711 = vmatpush2.bf16.msra.mxu0 0
        %1712 = vmatprep.subr.bf16.mxu0 0
        %1713 = vmatpush2.bf16.msra.mxu0 0
        %1714 = vmatprep.mubr.bf16.mxu0 0
        %1715 = vmatmul.mubr.bf16.gmra.mxu0 %v626
        %v1716 = vpop.f32.mrf.mxu0
        %v1717 = vadd.f32 %v1668, %v1716
        %v1718 = vpop.f32.mrf.mxu0
        %v1719 = vpop.f32.mrf.mxu0
        %v1720 = vadd.f32 %v1668, %v1719
        %v1721 = vpop.f32.mrf.mxu0
        %1722 = vdwg.mxu0
        %s1723 = scalar_lea.vmem %s8, 48
        %v1724 = vld [vmem:[%s1723] sm:$0xf]
        %v1725 = vld [vmem:[%s1723 + $0x4] sm:$0xf]
        %v1726 = vld [vmem:[%s1723 + $0x8] sm:$0xf]
        %v1727 = vld [vmem:[%s1723 + $0xc] sm:$0xf]
        %s1728 = scalar_lea.vmem %s9, 3
        %v1729 = vld [vmem:[%s1728] sm:$0x1]
        %v1731 = vlaneseq
        %v1732 = vshrl.u32 %v1731, 7
        %v1733 = vsub.s32 0, %v1732
        %v1734 = vrot.slane %v1729, %v1733
        %v1740 = vunpack.c.l.b16 %v1724
        %v1741 = vunpack.c.l.b16 %v1725
        %v1742 = vunpack.c.l.b16 %v1726
        %v1743 = vunpack.c.l.b16 %v1727
        %v1744 = vpack.c.b16 %v1741, %v1740
        %v1745 = vpack.c.b16 %v1743, %v1742
        %1748 = vmatprep.subr.bf16.mxu0 0
        %1749 = vmatpush1.bf16.msra.mxu0 0
        %1750 = vmatprep.subr.bf16.mxu0 0
        %1751 = vmatpush1.bf16.msra.mxu0 0
        %1752 = vmatprep.subr.bf16.mxu0 0
        %1753 = vmatpush1.bf16.msra.mxu0 0
        %1754 = vmatprep.subr.bf16.mxu0 0
        %1755 = vmatpush1.bf16.msra.mxu0 0
        %1756 = vmatprep.subr.bf16.mxu0 0
        %1757 = vmatpush1.bf16.msra.mxu0 0
        %1758 = vmatprep.subr.bf16.mxu0 0
        %1759 = vmatpush1.bf16.msra.mxu0 0
        %1760 = vmatprep.subr.bf16.mxu0 0
        %1761 = vmatpush1.bf16.msra.mxu0 %v1745
        %1762 = vmatprep.subr.bf16.mxu0 0
        %1763 = vmatpush1.bf16.msra.mxu0 %v1744
        %1764 = vmatprep.subr.bf16.mxu0 0
        %1765 = vmatpush2.bf16.msra.mxu0 0
        %1766 = vmatprep.subr.bf16.mxu0 0
        %1767 = vmatpush2.bf16.msra.mxu0 0
        %1768 = vmatprep.subr.bf16.mxu0 0
        %1769 = vmatpush2.bf16.msra.mxu0 0
        %1770 = vmatprep.subr.bf16.mxu0 0
        %1771 = vmatpush2.bf16.msra.mxu0 0
        %1772 = vmatprep.subr.bf16.mxu0 0
        %1773 = vmatpush2.bf16.msra.mxu0 0
        %1774 = vmatprep.subr.bf16.mxu0 0
        %1775 = vmatpush2.bf16.msra.mxu0 0
        %1776 = vmatprep.subr.bf16.mxu0 0
        %1777 = vmatpush2.bf16.msra.mxu0 0
        %1778 = vmatprep.subr.bf16.mxu0 0
        %1779 = vmatpush2.bf16.msra.mxu0 0
        %1780 = vmatprep.mubr.bf16.mxu0 0
        %1781 = vmatmul.mubr.bf16.gmra.mxu0 %v626
        %v1782 = vpop.f32.mrf.mxu0
        %v1783 = vadd.f32 %v1734, %v1782
        %v1784 = vpop.f32.mrf.mxu0
        %v1785 = vpop.f32.mrf.mxu0
        %v1786 = vadd.f32 %v1734, %v1785
        %v1787 = vpop.f32.mrf.mxu0
        %1788 = vdwg.mxu0
        %v1789 = vmul.f32 %v1652, 0.35355338
        %v1790 = vpack.c.bf16 %v1789, %v1789
        %v1791 = vpack.c.bf16 %v1720, %v1717
        %v1793 = vsel %vm736, %v1790, 0
        %v1796 = vsel %vm736, %v1791, 0
        %1798 = vmatprep.subr.bf16.mxu0 0
        %1799 = vmatpush1.bf16.xpose.msra.mxu0 0
        %1800 = vmatprep.subr.bf16.mxu0 0
        %1801 = vmatpush1.bf16.xpose.msra.mxu0 0
        %1802 = vmatprep.subr.bf16.mxu0 0
        %1803 = vmatpush1.bf16.xpose.msra.mxu0 0
        %1804 = vmatprep.subr.bf16.mxu0 0
        %1805 = vmatpush1.bf16.xpose.msra.mxu0 0
        %1806 = vmatprep.subr.bf16.mxu0 0
        %1807 = vmatpush1.bf16.xpose.msra.mxu0 0
        %1808 = vmatprep.subr.bf16.mxu0 0
        %1809 = vmatpush1.bf16.xpose.msra.mxu0 0
        %1810 = vmatprep.subr.bf16.mxu0 0
        %1811 = vmatpush1.bf16.xpose.msra.mxu0 0
        %1812 = vmatprep.subr.bf16.mxu0 0
        %1813 = vmatpush1.bf16.xpose.msra.mxu0 %v1796
        %1814 = vmatprep.subr.bf16.mxu0 0
        %1815 = vmatpush2.bf16.xpose.msra.mxu0 0
        %1816 = vmatprep.subr.bf16.mxu0 0
        %1817 = vmatpush2.bf16.xpose.msra.mxu0 0
        %1818 = vmatprep.subr.bf16.mxu0 0
        %1819 = vmatpush2.bf16.xpose.msra.mxu0 0
        %1820 = vmatprep.subr.bf16.mxu0 0
        %1821 = vmatpush2.bf16.xpose.msra.mxu0 0
        %1822 = vmatprep.subr.bf16.mxu0 0
        %1823 = vmatpush2.bf16.xpose.msra.mxu0 0
        %1824 = vmatprep.subr.bf16.mxu0 0
        %1825 = vmatpush2.bf16.xpose.msra.mxu0 0
        %1826 = vmatprep.subr.bf16.mxu0 0
        %1827 = vmatpush2.bf16.xpose.msra.mxu0 0
        %1828 = vmatprep.subr.bf16.mxu0 0
        %1829 = vmatpush2.bf16.xpose.msra.mxu0 0
        %1830 = vmatprep.mubr.bf16.mxu0 0
        %1831 = vmatmul.mubr.bf16.gmra.mxu0 %v1793
        %v1832 = vpop.f32.mrf.mxu0
        %v1833 = vadd.f32 0.0, %v1832
        %v1834 = vpop.f32.mrf.mxu0
        %v1835 = vpop.f32.mrf.mxu0
        %v1836 = vpop.f32.mrf.mxu0
        %1837 = vdwg.mxu0
        %v1838 = vsel %vm783, %v1833, -inf
        %1839 = vmax.xlane.f32.xlu0 %v1838
        %v1840 = vpop.xlane.xlu0 %1839
        %v1841 = vsub.f32 %v1833, %v1840
        %v1842 = vmul.f32 %v1841, 1.442695
        %v1843 = vpow.pop %v1842
        %v1844 = vsel %vm783, %v1843, 0.0
        %1845 = vadd.xlane.f32.xlu0 %v1844
        %v1846 = vpop.xlane.xlu0 %1845
        %v1847 = vrcp.pop %v1846
        %v1848 = vmul.f32 %v1843, %v1847
        %v1849 = vpack.c.bf16 %v1848, %v1848
        %v1850 = vpack.c.bf16 %v1786, %v1783
        %v1852 = vsel %vm783, %v1849, 0
        %1854 = vmatprep.subr.bf16.mxu0 0
        %1855 = vmatpush1.bf16.msra.mxu0 0
        %1856 = vmatprep.subr.bf16.mxu0 0
        %1857 = vmatpush1.bf16.msra.mxu0 0
        %1858 = vmatprep.subr.bf16.mxu0 0
        %1859 = vmatpush1.bf16.msra.mxu0 0
        %1860 = vmatprep.subr.bf16.mxu0 0
        %1861 = vmatpush1.bf16.msra.mxu0 0
        %1862 = vmatprep.subr.bf16.mxu0 0
        %1863 = vmatpush1.bf16.msra.mxu0 0
        %1864 = vmatprep.subr.bf16.mxu0 0
        %1865 = vmatpush1.bf16.msra.mxu0 0
        %1866 = vmatprep.subr.bf16.mxu0 0
        %1867 = vmatpush1.bf16.msra.mxu0 0
        %1868 = vmatprep.subr.bf16.mxu0 0
        %1869 = vmatpush1.bf16.msra.mxu0 %v1850
        %1870 = vmatprep.subr.bf16.mxu0 0
        %1871 = vmatpush2.bf16.msra.mxu0 0
        %1872 = vmatprep.subr.bf16.mxu0 0
        %1873 = vmatpush2.bf16.msra.mxu0 0
        %1874 = vmatprep.subr.bf16.mxu0 0
        %1875 = vmatpush2.bf16.msra.mxu0 0
        %1876 = vmatprep.subr.bf16.mxu0 0
        %1877 = vmatpush2.bf16.msra.mxu0 0
        %1878 = vmatprep.subr.bf16.mxu0 0
        %1879 = vmatpush2.bf16.msra.mxu0 0
        %1880 = vmatprep.subr.bf16.mxu0 0
        %1881 = vmatpush2.bf16.msra.mxu0 0
        %1882 = vmatprep.subr.bf16.mxu0 0
        %1883 = vmatpush2.bf16.msra.mxu0 0
        %1884 = vmatprep.subr.bf16.mxu0 0
        %1885 = vmatpush2.bf16.msra.mxu0 0
        %1886 = vmatprep.mubr.bf16.mxu0 0
        %1887 = vmatmul.mubr.bf16.gmra.mxu0 %v1852
        %v1888 = vpop.f32.mrf.mxu0
        %v1889 = vadd.f32 0.0, %v1888
        %v1890 = vpop.f32.mrf.mxu0
        %v1891 = vpop.f32.mrf.mxu0
        %v1892 = vpop.f32.mrf.mxu0
        %1893 = vdwg.mxu0
        %v1894 = vpack.c.bf16 %v1889, %v1889
        %s1895 = scalar_lea.vmem %s10, 12
        %v1896 = vld [vmem:[%s1895] sm:$0xf]
        %v1898 = vsel %vm736, %v1894, 0
        %v1901 = vsel %vm1150, %v1896, 0
        %1903 = vmatprep.subr.bf16.mxu0 0
        %1904 = vmatpush1.bf16.msra.mxu0 0
        %1905 = vmatprep.subr.bf16.mxu0 0
        %1906 = vmatpush1.bf16.msra.mxu0 0
        %1907 = vmatprep.subr.bf16.mxu0 0
        %1908 = vmatpush1.bf16.msra.mxu0 0
        %1909 = vmatprep.subr.bf16.mxu0 0
        %1910 = vmatpush1.bf16.msra.mxu0 0
        %1911 = vmatprep.subr.bf16.mxu0 0
        %1912 = vmatpush1.bf16.msra.mxu0 0
        %1913 = vmatprep.subr.bf16.mxu0 0
        %1914 = vmatpush1.bf16.msra.mxu0 0
        %1915 = vmatprep.subr.bf16.mxu0 0
        %1916 = vmatpush1.bf16.msra.mxu0 0
        %1917 = vmatprep.subr.bf16.mxu0 0
        %1918 = vmatpush1.bf16.msra.mxu0 %v1901
        %1919 = vmatprep.subr.bf16.mxu0 0
        %1920 = vmatpush2.bf16.msra.mxu0 0
        %1921 = vmatprep.subr.bf16.mxu0 0
        %1922 = vmatpush2.bf16.msra.mxu0 0
        %1923 = vmatprep.subr.bf16.mxu0 0
        %1924 = vmatpush2.bf16.msra.mxu0 0
        %1925 = vmatprep.subr.bf16.mxu0 0
        %1926 = vmatpush2.bf16.msra.mxu0 0
        %1927 = vmatprep.subr.bf16.mxu0 0
        %1928 = vmatpush2.bf16.msra.mxu0 0
        %1929 = vmatprep.subr.bf16.mxu0 0
        %1930 = vmatpush2.bf16.msra.mxu0 0
        %1931 = vmatprep.subr.bf16.mxu0 0
        %1932 = vmatpush2.bf16.msra.mxu0 0
        %1933 = vmatprep.subr.bf16.mxu0 0
        %1934 = vmatpush2.bf16.msra.mxu0 0
        %1935 = vmatprep.mubr.bf16.mxu0 0
        %1936 = vmatmul.mubr.bf16.gmra.mxu0 %v1898
        %v1937 = vpop.f32.mrf.mxu0
        %v1938 = vadd.f32 0.0, %v1937
        %v1939 = vpop.f32.mrf.mxu0
        %v1940 = vpop.f32.mrf.mxu0
        %v1941 = vpop.f32.mrf.mxu0
        %1942 = vdwg.mxu0
        %v1943 = vadd.f32 %v1591, %v1938
        %v1944 = vld [vmem:[%s11] sm:$0x1]
        %v1946 = vlaneseq
        %v1947 = vshrl.u32 %v1946, 7
        %v1948 = vsub.s32 0, %v1947
        %v1949 = vrot.slane %v1944, %v1948
        %v1951 = vadd.f32 %v1943, %v1949
        %v1952 = vadd.f32 %v472, %v1951
        %1953 = vst.msk [vmem:[%s454] sm:$0xff] %vm475, %v1952
        %v1954 = vpack.c.bf16 %v1952, %v1952
        %v1955 = vld [vmem:[%s4] sm:$0xf]
        %v1956 = vld [vmem:[%s4 + $0x4] sm:$0xf]
        %v1957 = vld [vmem:[%s4 + $0x8] sm:$0xf]
        %v1958 = vld [vmem:[%s4 + $0xc] sm:$0xf]
        %v1959 = vld [vmem:[%s5] sm:$0x1]
        %v1961 = vlaneseq
        %v1962 = vshrl.u32 %v1961, 7
        %v1963 = vsub.s32 0, %v1962
        %v1964 = vrot.slane %v1959, %v1963
        %v1970 = vunpack.c.l.b16 %v1955
        %v1971 = vunpack.c.l.b16 %v1956
        %v1972 = vunpack.c.l.b16 %v1957
        %v1973 = vunpack.c.l.b16 %v1958
        %v1974 = vpack.c.b16 %v1971, %v1970
        %v1975 = vpack.c.b16 %v1973, %v1972
        %1978 = vmatprep.subr.bf16.mxu0 0
        %1979 = vmatpush1.bf16.msra.mxu0 0
        %1980 = vmatprep.subr.bf16.mxu0 0
        %1981 = vmatpush1.bf16.msra.mxu0 0
        %1982 = vmatprep.subr.bf16.mxu0 0
        %1983 = vmatpush1.bf16.msra.mxu0 0
        %1984 = vmatprep.subr.bf16.mxu0 0
        %1985 = vmatpush1.bf16.msra.mxu0 0
        %1986 = vmatprep.subr.bf16.mxu0 0
        %1987 = vmatpush1.bf16.msra.mxu0 0
        %1988 = vmatprep.subr.bf16.mxu0 0
        %1989 = vmatpush1.bf16.msra.mxu0 0
        %1990 = vmatprep.subr.bf16.mxu0 0
        %1991 = vmatpush1.bf16.msra.mxu0 %v1975
        %1992 = vmatprep.subr.bf16.mxu0 0
        %1993 = vmatpush1.bf16.msra.mxu0 %v1974
        %1994 = vmatprep.subr.bf16.mxu0 0
        %1995 = vmatpush2.bf16.msra.mxu0 0
        %1996 = vmatprep.subr.bf16.mxu0 0
        %1997 = vmatpush2.bf16.msra.mxu0 0
        %1998 = vmatprep.subr.bf16.mxu0 0
        %1999 = vmatpush2.bf16.msra.mxu0 0
        %2000 = vmatprep.subr.bf16.mxu0 0
        %2001 = vmatpush2.bf16.msra.mxu0 0
        %2002 = vmatprep.subr.bf16.mxu0 0
        %2003 = vmatpush2.bf16.msra.mxu0 0
        %2004 = vmatprep.subr.bf16.mxu0 0
        %2005 = vmatpush2.bf16.msra.mxu0 0
        %2006 = vmatprep.subr.bf16.mxu0 0
        %2007 = vmatpush2.bf16.msra.mxu0 0
        %2008 = vmatprep.subr.bf16.mxu0 0
        %2009 = vmatpush2.bf16.msra.mxu0 0
        %2010 = vmatprep.mubr.bf16.mxu0 0
        %2011 = vmatmul.mubr.bf16.gmra.mxu0 %v626
        %v2012 = vpop.f32.mrf.mxu0
        %v2013 = vadd.f32 %v1964, %v2012
        %v2014 = vpop.f32.mrf.mxu0
        %v2015 = vpop.f32.mrf.mxu0
        %v2016 = vadd.f32 %v1964, %v2015
        %v2017 = vpop.f32.mrf.mxu0
        %2018 = vdwg.mxu0
        %v2019 = vld [vmem:[%s6] sm:$0xf]
        %v2020 = vld [vmem:[%s6 + $0x4] sm:$0xf]
        %v2021 = vld [vmem:[%s6 + $0x8] sm:$0xf]
        %v2022 = vld [vmem:[%s6 + $0xc] sm:$0xf]
        %v2023 = vld [vmem:[%s7] sm:$0x1]
        %v2025 = vlaneseq
        %v2026 = vshrl.u32 %v2025, 7
        %v2027 = vsub.s32 0, %v2026
        %v2028 = vrot.slane %v2023, %v2027
        %v2034 = vunpack.c.l.b16 %v2019
        %v2035 = vunpack.c.l.b16 %v2020
        %v2036 = vunpack.c.l.b16 %v2021
        %v2037 = vunpack.c.l.b16 %v2022
        %v2038 = vpack.c.b16 %v2035, %v2034
        %v2039 = vpack.c.b16 %v2037, %v2036
        %v2043 = vsel %vm475, %v1954, 0
        %2045 = vmatprep.subr.bf16.mxu0 0
        %2046 = vmatpush1.bf16.msra.mxu0 0
        %2047 = vmatprep.subr.bf16.mxu0 0
        %2048 = vmatpush1.bf16.msra.mxu0 0
        %2049 = vmatprep.subr.bf16.mxu0 0
        %2050 = vmatpush1.bf16.msra.mxu0 0
        %2051 = vmatprep.subr.bf16.mxu0 0
        %2052 = vmatpush1.bf16.msra.mxu0 0
        %2053 = vmatprep.subr.bf16.mxu0 0
        %2054 = vmatpush1.bf16.msra.mxu0 0
        %2055 = vmatprep.subr.bf16.mxu0 0
        %2056 = vmatpush1.bf16.msra.mxu0 0
        %2057 = vmatprep.subr.bf16.mxu0 0
        %2058 = vmatpush1.bf16.msra.mxu0 %v2039
        %2059 = vmatprep.subr.bf16.mxu0 0
        %2060 = vmatpush1.bf16.msra.mxu0 %v2038
        %2061 = vmatprep.subr.bf16.mxu0 0
        %2062 = vmatpush2.bf16.msra.mxu0 0
        %2063 = vmatprep.subr.bf16.mxu0 0
        %2064 = vmatpush2.bf16.msra.mxu0 0
        %2065 = vmatprep.subr.bf16.mxu0 0
        %2066 = vmatpush2.bf16.msra.mxu0 0
        %2067 = vmatprep.subr.bf16.mxu0 0
        %2068 = vmatpush2.bf16.msra.mxu0 0
        %2069 = vmatprep.subr.bf16.mxu0 0
        %2070 = vmatpush2.bf16.msra.mxu0 0
        %2071 = vmatprep.subr.bf16.mxu0 0
        %2072 = vmatpush2.bf16.msra.mxu0 0
        %2073 = vmatprep.subr.bf16.mxu0 0
        %2074 = vmatpush2.bf16.msra.mxu0 0
        %2075 = vmatprep.subr.bf16.mxu0 0
        %2076 = vmatpush2.bf16.msra.mxu0 0
        %2077 = vmatprep.mubr.bf16.mxu0 0
        %2078 = vmatmul.mubr.bf16.gmra.mxu0 %v2043
        %v2079 = vpop.f32.mrf.mxu0
        %v2080 = vadd.f32 %v2028, %v2079
        %v2081 = vpop.f32.mrf.mxu0
        %v2082 = vpop.f32.mrf.mxu0
        %v2083 = vpop.f32.mrf.mxu0
        %2084 = vdwg.mxu0
        %v2085 = vld [vmem:[%s8] sm:$0xf]
        %v2086 = vld [vmem:[%s8 + $0x4] sm:$0xf]
        %v2087 = vld [vmem:[%s8 + $0x8] sm:$0xf]
        %v2088 = vld [vmem:[%s8 + $0xc] sm:$0xf]
        %v2089 = vld [vmem:[%s9] sm:$0x1]
        %v2091 = vlaneseq
        %v2092 = vshrl.u32 %v2091, 7
        %v2093 = vsub.s32 0, %v2092
        %v2094 = vrot.slane %v2089, %v2093
        %v2100 = vunpack.c.l.b16 %v2085
        %v2101 = vunpack.c.l.b16 %v2086
        %v2102 = vunpack.c.l.b16 %v2087
        %v2103 = vunpack.c.l.b16 %v2088
        %v2104 = vpack.c.b16 %v2101, %v2100
        %v2105 = vpack.c.b16 %v2103, %v2102
        %2108 = vmatprep.subr.bf16.mxu0 0
        %2109 = vmatpush1.bf16.msra.mxu0 0
        %2110 = vmatprep.subr.bf16.mxu0 0
        %2111 = vmatpush1.bf16.msra.mxu0 0
        %2112 = vmatprep.subr.bf16.mxu0 0
        %2113 = vmatpush1.bf16.msra.mxu0 0
        %2114 = vmatprep.subr.bf16.mxu0 0
        %2115 = vmatpush1.bf16.msra.mxu0 0
        %2116 = vmatprep.subr.bf16.mxu0 0
        %2117 = vmatpush1.bf16.msra.mxu0 0
        %2118 = vmatprep.subr.bf16.mxu0 0
        %2119 = vmatpush1.bf16.msra.mxu0 0
        %2120 = vmatprep.subr.bf16.mxu0 0
        %2121 = vmatpush1.bf16.msra.mxu0 %v2105
        %2122 = vmatprep.subr.bf16.mxu0 0
        %2123 = vmatpush1.bf16.msra.mxu0 %v2104
        %2124 = vmatprep.subr.bf16.mxu0 0
        %2125 = vmatpush2.bf16.msra.mxu0 0
        %2126 = vmatprep.subr.bf16.mxu0 0
        %2127 = vmatpush2.bf16.msra.mxu0 0
        %2128 = vmatprep.subr.bf16.mxu0 0
        %2129 = vmatpush2.bf16.msra.mxu0 0
        %2130 = vmatprep.subr.bf16.mxu0 0
        %2131 = vmatpush2.bf16.msra.mxu0 0
        %2132 = vmatprep.subr.bf16.mxu0 0
        %2133 = vmatpush2.bf16.msra.mxu0 0
        %2134 = vmatprep.subr.bf16.mxu0 0
        %2135 = vmatpush2.bf16.msra.mxu0 0
        %2136 = vmatprep.subr.bf16.mxu0 0
        %2137 = vmatpush2.bf16.msra.mxu0 0
        %2138 = vmatprep.subr.bf16.mxu0 0
        %2139 = vmatpush2.bf16.msra.mxu0 0
        %2140 = vmatprep.mubr.bf16.mxu0 0
        %2141 = vmatmul.mubr.bf16.gmra.mxu0 %v2043
        %v2142 = vpop.f32.mrf.mxu0
        %v2143 = vadd.f32 %v2094, %v2142
        %v2144 = vpop.f32.mrf.mxu0
        %v2145 = vpop.f32.mrf.mxu0
        %v2146 = vpop.f32.mrf.mxu0
        %2147 = vdwg.mxu0
        %v2148 = vmul.f32 %v2013, 0.35355338
        %v2149 = vmul.f32 %v2016, 0.35355338
        %v2150 = vpack.c.bf16 %v2149, %v2148
        %v2151 = vpack.c.bf16 %v2080, %v2080
        %v2153 = vsel %vm736, %v2150, 0
        %v2156 = vsel %vm736, %v2151, 0
        %2158 = vmatprep.subr.bf16.mxu0 0
        %2159 = vmatpush1.bf16.xpose.msra.mxu0 0
        %2160 = vmatprep.subr.bf16.mxu0 0
        %2161 = vmatpush1.bf16.xpose.msra.mxu0 0
        %2162 = vmatprep.subr.bf16.mxu0 0
        %2163 = vmatpush1.bf16.xpose.msra.mxu0 0
        %2164 = vmatprep.subr.bf16.mxu0 0
        %2165 = vmatpush1.bf16.xpose.msra.mxu0 0
        %2166 = vmatprep.subr.bf16.mxu0 0
        %2167 = vmatpush1.bf16.xpose.msra.mxu0 0
        %2168 = vmatprep.subr.bf16.mxu0 0
        %2169 = vmatpush1.bf16.xpose.msra.mxu0 0
        %2170 = vmatprep.subr.bf16.mxu0 0
        %2171 = vmatpush1.bf16.xpose.msra.mxu0 0
        %2172 = vmatprep.subr.bf16.mxu0 0
        %2173 = vmatpush1.bf16.xpose.msra.mxu0 %v2156
        %2174 = vmatprep.subr.bf16.mxu0 0
        %2175 = vmatpush2.bf16.xpose.msra.mxu0 0
        %2176 = vmatprep.subr.bf16.mxu0 0
        %2177 = vmatpush2.bf16.xpose.msra.mxu0 0
        %2178 = vmatprep.subr.bf16.mxu0 0
        %2179 = vmatpush2.bf16.xpose.msra.mxu0 0
        %2180 = vmatprep.subr.bf16.mxu0 0
        %2181 = vmatpush2.bf16.xpose.msra.mxu0 0
        %2182 = vmatprep.subr.bf16.mxu0 0
        %2183 = vmatpush2.bf16.xpose.msra.mxu0 0
        %2184 = vmatprep.subr.bf16.mxu0 0
        %2185 = vmatpush2.bf16.xpose.msra.mxu0 0
        %2186 = vmatprep.subr.bf16.mxu0 0
        %2187 = vmatpush2.bf16.xpose.msra.mxu0 0
        %2188 = vmatprep.subr.bf16.mxu0 0
        %2189 = vmatpush2.bf16.xpose.msra.mxu0 0
        %2190 = vmatprep.mubr.bf16.mxu0 0
        %2191 = vmatmul.mubr.bf16.gmra.mxu0 %v2153
        %v2192 = vpop.f32.mrf.mxu0
        %v2193 = vadd.f32 0.0, %v2192
        %v2194 = vpop.f32.mrf.mxu0
        %v2195 = vpop.f32.mrf.mxu0
        %v2196 = vadd.f32 0.0, %v2195
        %v2197 = vpop.f32.mrf.mxu0
        %2198 = vdwg.mxu0
        %v2199 = vsel %vm736, %v2193, -inf
        %2200 = vmax.xlane.f32.xlu0 %v2199
        %v2201 = vpop.xlane.xlu0 %2200
        %v2202 = vsel %vm736, %v2196, -inf
        %2203 = vmax.xlane.f32.xlu0 %v2202
        %v2204 = vpop.xlane.xlu0 %2203
        %v2205 = vsub.f32 %v2193, %v2201
        %v2206 = vsub.f32 %v2196, %v2204
        %v2207 = vmul.f32 %v2205, 1.442695
        %v2208 = vpow.pop %v2207
        %v2209 = vmul.f32 %v2206, 1.442695
        %v2210 = vpow.pop %v2209
        %v2211 = vsel %vm736, %v2208, 0.0
        %2212 = vadd.xlane.f32.xlu0 %v2211
        %v2213 = vpop.xlane.xlu0 %2212
        %v2214 = vsel %vm736, %v2210, 0.0
        %2215 = vadd.xlane.f32.xlu0 %v2214
        %v2216 = vpop.xlane.xlu0 %2215
        %v2217 = vrcp.pop %v2213
        %v2218 = vrcp.pop %v2216
        %v2219 = vmul.f32 %v2208, %v2217
        %v2220 = vmul.f32 %v2210, %v2218
        %v2221 = vpack.c.bf16 %v2220, %v2219
        %v2222 = vpack.c.bf16 %v2143, %v2143
        %v2224 = vsel %vm736, %v2221, 0
        %v2227 = vsel %vm1150, %v2222, 0
        %2229 = vmatprep.subr.bf16.mxu0 0
        %2230 = vmatpush1.bf16.msra.mxu0 0
        %2231 = vmatprep.subr.bf16.mxu0 0
        %2232 = vmatpush1.bf16.msra.mxu0 0
        %2233 = vmatprep.subr.bf16.mxu0 0
        %2234 = vmatpush1.bf16.msra.mxu0 0
        %2235 = vmatprep.subr.bf16.mxu0 0
        %2236 = vmatpush1.bf16.msra.mxu0 0
        %2237 = vmatprep.subr.bf16.mxu0 0
        %2238 = vmatpush1.bf16.msra.mxu0 0
        %2239 = vmatprep.subr.bf16.mxu0 0
        %2240 = vmatpush1.bf16.msra.mxu0 0
        %2241 = vmatprep.subr.bf16.mxu0 0
        %2242 = vmatpush1.bf16.msra.mxu0 0
        %2243 = vmatprep.subr.bf16.mxu0 0
        %2244 = vmatpush1.bf16.msra.mxu0 %v2227
        %2245 = vmatprep.subr.bf16.mxu0 0
        %2246 = vmatpush2.bf16.msra.mxu0 0
        %2247 = vmatprep.subr.bf16.mxu0 0
        %2248 = vmatpush2.bf16.msra.mxu0 0
        %2249 = vmatprep.subr.bf16.mxu0 0
        %2250 = vmatpush2.bf16.msra.mxu0 0
        %2251 = vmatprep.subr.bf16.mxu0 0
        %2252 = vmatpush2.bf16.msra.mxu0 0
        %2253 = vmatprep.subr.bf16.mxu0 0
        %2254 = vmatpush2.bf16.msra.mxu0 0
        %2255 = vmatprep.subr.bf16.mxu0 0
        %2256 = vmatpush2.bf16.msra.mxu0 0
        %2257 = vmatprep.subr.bf16.mxu0 0
        %2258 = vmatpush2.bf16.msra.mxu0 0
        %2259 = vmatprep.subr.bf16.mxu0 0
        %2260 = vmatpush2.bf16.msra.mxu0 0
        %2261 = vmatprep.mubr.bf16.mxu0 0
        %2262 = vmatmul.mubr.bf16.gmra.mxu0 %v2224
        %v2263 = vpop.f32.mrf.mxu0
        %v2264 = vadd.f32 0.0, %v2263
        %v2265 = vpop.f32.mrf.mxu0
        %v2266 = vpop.f32.mrf.mxu0
        %v2267 = vadd.f32 0.0, %v2266
        %v2268 = vpop.f32.mrf.mxu0
        %2269 = vdwg.mxu0
        %v2270 = vpack.c.bf16 %v2267, %v2264
        %v2271 = vld [vmem:[%s10] sm:$0xf]
        %v2272 = vld [vmem:[%s842] sm:$0xf]
        %v2273 = vld [vmem:[%s842 + $0x4] sm:$0xf]
        %v2274 = vld [vmem:[%s842 + $0x8] sm:$0xf]
        %v2275 = vld [vmem:[%s842 + $0xc] sm:$0xf]
        %v2276 = vld [vmem:[%s847] sm:$0x1]
        %v2278 = vlaneseq
        %v2279 = vshrl.u32 %v2278, 7
        %v2280 = vsub.s32 0, %v2279
        %v2281 = vrot.slane %v2276, %v2280
        %v2287 = vunpack.c.l.b16 %v2272
        %v2288 = vunpack.c.l.b16 %v2273
        %v2289 = vunpack.c.l.b16 %v2274
        %v2290 = vunpack.c.l.b16 %v2275
        %v2291 = vpack.c.b16 %v2288, %v2287
        %v2292 = vpack.c.b16 %v2290, %v2289
        %2295 = vmatprep.subr.bf16.mxu0 0
        %2296 = vmatpush1.bf16.msra.mxu0 0
        %2297 = vmatprep.subr.bf16.mxu0 0
        %2298 = vmatpush1.bf16.msra.mxu0 0
        %2299 = vmatprep.subr.bf16.mxu0 0
        %2300 = vmatpush1.bf16.msra.mxu0 0
        %2301 = vmatprep.subr.bf16.mxu0 0
        %2302 = vmatpush1.bf16.msra.mxu0 0
        %2303 = vmatprep.subr.bf16.mxu0 0
        %2304 = vmatpush1.bf16.msra.mxu0 0
        %2305 = vmatprep.subr.bf16.mxu0 0
        %2306 = vmatpush1.bf16.msra.mxu0 0
        %2307 = vmatprep.subr.bf16.mxu0 0
        %2308 = vmatpush1.bf16.msra.mxu0 %v2292
        %2309 = vmatprep.subr.bf16.mxu0 0
        %2310 = vmatpush1.bf16.msra.mxu0 %v2291
        %2311 = vmatprep.subr.bf16.mxu0 0
        %2312 = vmatpush2.bf16.msra.mxu0 0
        %2313 = vmatprep.subr.bf16.mxu0 0
        %2314 = vmatpush2.bf16.msra.mxu0 0
        %2315 = vmatprep.subr.bf16.mxu0 0
        %2316 = vmatpush2.bf16.msra.mxu0 0
        %2317 = vmatprep.subr.bf16.mxu0 0
        %2318 = vmatpush2.bf16.msra.mxu0 0
        %2319 = vmatprep.subr.bf16.mxu0 0
        %2320 = vmatpush2.bf16.msra.mxu0 0
        %2321 = vmatprep.subr.bf16.mxu0 0
        %2322 = vmatpush2.bf16.msra.mxu0 0
        %2323 = vmatprep.subr.bf16.mxu0 0
        %2324 = vmatpush2.bf16.msra.mxu0 0
        %2325 = vmatprep.subr.bf16.mxu0 0
        %2326 = vmatpush2.bf16.msra.mxu0 0
        %2327 = vmatprep.mubr.bf16.mxu0 0
        %2328 = vmatmul.mubr.bf16.gmra.mxu0 %v626
        %v2329 = vpop.f32.mrf.mxu0
        %v2330 = vadd.f32 %v2281, %v2329
        %v2331 = vpop.f32.mrf.mxu0
        %v2332 = vpop.f32.mrf.mxu0
        %v2333 = vadd.f32 %v2281, %v2332
        %v2334 = vpop.f32.mrf.mxu0
        %2335 = vdwg.mxu0
        %v2336 = vld [vmem:[%s907] sm:$0xf]
        %v2337 = vld [vmem:[%s907 + $0x4] sm:$0xf]
        %v2338 = vld [vmem:[%s907 + $0x8] sm:$0xf]
        %v2339 = vld [vmem:[%s907 + $0xc] sm:$0xf]
        %v2340 = vld [vmem:[%s912] sm:$0x1]
        %v2342 = vlaneseq
        %v2343 = vshrl.u32 %v2342, 7
        %v2344 = vsub.s32 0, %v2343
        %v2345 = vrot.slane %v2340, %v2344
        %v2351 = vunpack.c.l.b16 %v2336
        %v2352 = vunpack.c.l.b16 %v2337
        %v2353 = vunpack.c.l.b16 %v2338
        %v2354 = vunpack.c.l.b16 %v2339
        %v2355 = vpack.c.b16 %v2352, %v2351
        %v2356 = vpack.c.b16 %v2354, %v2353
        %2359 = vmatprep.subr.bf16.mxu0 0
        %2360 = vmatpush1.bf16.msra.mxu0 0
        %2361 = vmatprep.subr.bf16.mxu0 0
        %2362 = vmatpush1.bf16.msra.mxu0 0
        %2363 = vmatprep.subr.bf16.mxu0 0
        %2364 = vmatpush1.bf16.msra.mxu0 0
        %2365 = vmatprep.subr.bf16.mxu0 0
        %2366 = vmatpush1.bf16.msra.mxu0 0
        %2367 = vmatprep.subr.bf16.mxu0 0
        %2368 = vmatpush1.bf16.msra.mxu0 0
        %2369 = vmatprep.subr.bf16.mxu0 0
        %2370 = vmatpush1.bf16.msra.mxu0 0
        %2371 = vmatprep.subr.bf16.mxu0 0
        %2372 = vmatpush1.bf16.msra.mxu0 %v2356
        %2373 = vmatprep.subr.bf16.mxu0 0
        %2374 = vmatpush1.bf16.msra.mxu0 %v2355
        %2375 = vmatprep.subr.bf16.mxu0 0
        %2376 = vmatpush2.bf16.msra.mxu0 0
        %2377 = vmatprep.subr.bf16.mxu0 0
        %2378 = vmatpush2.bf16.msra.mxu0 0
        %2379 = vmatprep.subr.bf16.mxu0 0
        %2380 = vmatpush2.bf16.msra.mxu0 0
        %2381 = vmatprep.subr.bf16.mxu0 0
        %2382 = vmatpush2.bf16.msra.mxu0 0
        %2383 = vmatprep.subr.bf16.mxu0 0
        %2384 = vmatpush2.bf16.msra.mxu0 0
        %2385 = vmatprep.subr.bf16.mxu0 0
        %2386 = vmatpush2.bf16.msra.mxu0 0
        %2387 = vmatprep.subr.bf16.mxu0 0
        %2388 = vmatpush2.bf16.msra.mxu0 0
        %2389 = vmatprep.subr.bf16.mxu0 0
        %2390 = vmatpush2.bf16.msra.mxu0 0
        %2391 = vmatprep.mubr.bf16.mxu0 0
        %2392 = vmatmul.mubr.bf16.gmra.mxu0 %v2043
        %v2393 = vpop.f32.mrf.mxu0
        %v2394 = vadd.f32 %v2345, %v2393
        %v2395 = vpop.f32.mrf.mxu0
        %v2396 = vpop.f32.mrf.mxu0
        %v2397 = vpop.f32.mrf.mxu0
        %2398 = vdwg.mxu0
        %v2399 = vld [vmem:[%s973] sm:$0xf]
        %v2400 = vld [vmem:[%s973 + $0x4] sm:$0xf]
        %v2401 = vld [vmem:[%s973 + $0x8] sm:$0xf]
        %v2402 = vld [vmem:[%s973 + $0xc] sm:$0xf]
        %v2403 = vld [vmem:[%s978] sm:$0x1]
        %v2405 = vlaneseq
        %v2406 = vshrl.u32 %v2405, 7
        %v2407 = vsub.s32 0, %v2406
        %v2408 = vrot.slane %v2403, %v2407
        %v2414 = vunpack.c.l.b16 %v2399
        %v2415 = vunpack.c.l.b16 %v2400
        %v2416 = vunpack.c.l.b16 %v2401
        %v2417 = vunpack.c.l.b16 %v2402
        %v2418 = vpack.c.b16 %v2415, %v2414
        %v2419 = vpack.c.b16 %v2417, %v2416
        %2422 = vmatprep.subr.bf16.mxu0 0
        %2423 = vmatpush1.bf16.msra.mxu0 0
        %2424 = vmatprep.subr.bf16.mxu0 0
        %2425 = vmatpush1.bf16.msra.mxu0 0
        %2426 = vmatprep.subr.bf16.mxu0 0
        %2427 = vmatpush1.bf16.msra.mxu0 0
        %2428 = vmatprep.subr.bf16.mxu0 0
        %2429 = vmatpush1.bf16.msra.mxu0 0
        %2430 = vmatprep.subr.bf16.mxu0 0
        %2431 = vmatpush1.bf16.msra.mxu0 0
        %2432 = vmatprep.subr.bf16.mxu0 0
        %2433 = vmatpush1.bf16.msra.mxu0 0
        %2434 = vmatprep.subr.bf16.mxu0 0
        %2435 = vmatpush1.bf16.msra.mxu0 %v2419
        %2436 = vmatprep.subr.bf16.mxu0 0
        %2437 = vmatpush1.bf16.msra.mxu0 %v2418
        %2438 = vmatprep.subr.bf16.mxu0 0
        %2439 = vmatpush2.bf16.msra.mxu0 0
        %2440 = vmatprep.subr.bf16.mxu0 0
        %2441 = vmatpush2.bf16.msra.mxu0 0
        %2442 = vmatprep.subr.bf16.mxu0 0
        %2443 = vmatpush2.bf16.msra.mxu0 0
        %2444 = vmatprep.subr.bf16.mxu0 0
        %2445 = vmatpush2.bf16.msra.mxu0 0
        %2446 = vmatprep.subr.bf16.mxu0 0
        %2447 = vmatpush2.bf16.msra.mxu0 0
        %2448 = vmatprep.subr.bf16.mxu0 0
        %2449 = vmatpush2.bf16.msra.mxu0 0
        %2450 = vmatprep.subr.bf16.mxu0 0
        %2451 = vmatpush2.bf16.msra.mxu0 0
        %2452 = vmatprep.subr.bf16.mxu0 0
        %2453 = vmatpush2.bf16.msra.mxu0 0
        %2454 = vmatprep.mubr.bf16.mxu0 0
        %2455 = vmatmul.mubr.bf16.gmra.mxu0 %v2043
        %v2456 = vpop.f32.mrf.mxu0
        %v2457 = vadd.f32 %v2408, %v2456
        %v2458 = vpop.f32.mrf.mxu0
        %v2459 = vpop.f32.mrf.mxu0
        %v2460 = vpop.f32.mrf.mxu0
        %2461 = vdwg.mxu0
        %v2462 = vmul.f32 %v2330, 0.35355338
        %v2463 = vmul.f32 %v2333, 0.35355338
        %v2464 = vpack.c.bf16 %v2463, %v2462
        %v2465 = vpack.c.bf16 %v2394, %v2394
        %v2467 = vsel %vm736, %v2464, 0
        %v2470 = vsel %vm736, %v2465, 0
        %2472 = vmatprep.subr.bf16.mxu0 0
        %2473 = vmatpush1.bf16.xpose.msra.mxu0 0
        %2474 = vmatprep.subr.bf16.mxu0 0
        %2475 = vmatpush1.bf16.xpose.msra.mxu0 0
        %2476 = vmatprep.subr.bf16.mxu0 0
        %2477 = vmatpush1.bf16.xpose.msra.mxu0 0
        %2478 = vmatprep.subr.bf16.mxu0 0
        %2479 = vmatpush1.bf16.xpose.msra.mxu0 0
        %2480 = vmatprep.subr.bf16.mxu0 0
        %2481 = vmatpush1.bf16.xpose.msra.mxu0 0
        %2482 = vmatprep.subr.bf16.mxu0 0
        %2483 = vmatpush1.bf16.xpose.msra.mxu0 0
        %2484 = vmatprep.subr.bf16.mxu0 0
        %2485 = vmatpush1.bf16.xpose.msra.mxu0 0
        %2486 = vmatprep.subr.bf16.mxu0 0
        %2487 = vmatpush1.bf16.xpose.msra.mxu0 %v2470
        %2488 = vmatprep.subr.bf16.mxu0 0
        %2489 = vmatpush2.bf16.xpose.msra.mxu0 0
        %2490 = vmatprep.subr.bf16.mxu0 0
        %2491 = vmatpush2.bf16.xpose.msra.mxu0 0
        %2492 = vmatprep.subr.bf16.mxu0 0
        %2493 = vmatpush2.bf16.xpose.msra.mxu0 0
        %2494 = vmatprep.subr.bf16.mxu0 0
        %2495 = vmatpush2.bf16.xpose.msra.mxu0 0
        %2496 = vmatprep.subr.bf16.mxu0 0
        %2497 = vmatpush2.bf16.xpose.msra.mxu0 0
        %2498 = vmatprep.subr.bf16.mxu0 0
        %2499 = vmatpush2.bf16.xpose.msra.mxu0 0
        %2500 = vmatprep.subr.bf16.mxu0 0
        %2501 = vmatpush2.bf16.xpose.msra.mxu0 0
        %2502 = vmatprep.subr.bf16.mxu0 0
        %2503 = vmatpush2.bf16.xpose.msra.mxu0 0
        %2504 = vmatprep.mubr.bf16.mxu0 0
        %2505 = vmatmul.mubr.bf16.gmra.mxu0 %v2467
        %v2506 = vpop.f32.mrf.mxu0
        %v2507 = vadd.f32 0.0, %v2506
        %v2508 = vpop.f32.mrf.mxu0
        %v2509 = vpop.f32.mrf.mxu0
        %v2510 = vadd.f32 0.0, %v2509
        %v2511 = vpop.f32.mrf.mxu0
        %2512 = vdwg.mxu0
        %v2513 = vsel %vm736, %v2507, -inf
        %2514 = vmax.xlane.f32.xlu0 %v2513
        %v2515 = vpop.xlane.xlu0 %2514
        %v2516 = vsel %vm736, %v2510, -inf
        %2517 = vmax.xlane.f32.xlu0 %v2516
        %v2518 = vpop.xlane.xlu0 %2517
        %v2519 = vsub.f32 %v2507, %v2515
        %v2520 = vsub.f32 %v2510, %v2518
        %v2521 = vmul.f32 %v2519, 1.442695
        %v2522 = vpow.pop %v2521
        %v2523 = vmul.f32 %v2520, 1.442695
        %v2524 = vpow.pop %v2523
        %v2525 = vsel %vm736, %v2522, 0.0
        %2526 = vadd.xlane.f32.xlu0 %v2525
        %v2527 = vpop.xlane.xlu0 %2526
        %v2528 = vsel %vm736, %v2524, 0.0
        %2529 = vadd.xlane.f32.xlu0 %v2528
        %v2530 = vpop.xlane.xlu0 %2529
        %v2531 = vrcp.pop %v2527
        %v2532 = vrcp.pop %v2530
        %v2533 = vmul.f32 %v2522, %v2531
        %v2534 = vmul.f32 %v2524, %v2532
        %v2535 = vpack.c.bf16 %v2534, %v2533
        %v2536 = vpack.c.bf16 %v2457, %v2457
        %v2538 = vsel %vm736, %v2535, 0
        %v2541 = vsel %vm1150, %v2536, 0
        %2543 = vmatprep.subr.bf16.mxu0 0
        %2544 = vmatpush1.bf16.msra.mxu0 0
        %2545 = vmatprep.subr.bf16.mxu0 0
        %2546 = vmatpush1.bf16.msra.mxu0 0
        %2547 = vmatprep.subr.bf16.mxu0 0
        %2548 = vmatpush1.bf16.msra.mxu0 0
        %2549 = vmatprep.subr.bf16.mxu0 0
        %2550 = vmatpush1.bf16.msra.mxu0 0
        %2551 = vmatprep.subr.bf16.mxu0 0
        %2552 = vmatpush1.bf16.msra.mxu0 0
        %2553 = vmatprep.subr.bf16.mxu0 0
        %2554 = vmatpush1.bf16.msra.mxu0 0
        %2555 = vmatprep.subr.bf16.mxu0 0
        %2556 = vmatpush1.bf16.msra.mxu0 0
        %2557 = vmatprep.subr.bf16.mxu0 0
        %2558 = vmatpush1.bf16.msra.mxu0 %v2541
        %2559 = vmatprep.subr.bf16.mxu0 0
        %2560 = vmatpush2.bf16.msra.mxu0 0
        %2561 = vmatprep.subr.bf16.mxu0 0
        %2562 = vmatpush2.bf16.msra.mxu0 0
        %2563 = vmatprep.subr.bf16.mxu0 0
        %2564 = vmatpush2.bf16.msra.mxu0 0
        %2565 = vmatprep.subr.bf16.mxu0 0
        %2566 = vmatpush2.bf16.msra.mxu0 0
        %2567 = vmatprep.subr.bf16.mxu0 0
        %2568 = vmatpush2.bf16.msra.mxu0 0
        %2569 = vmatprep.subr.bf16.mxu0 0
        %2570 = vmatpush2.bf16.msra.mxu0 0
        %2571 = vmatprep.subr.bf16.mxu0 0
        %2572 = vmatpush2.bf16.msra.mxu0 0
        %2573 = vmatprep.subr.bf16.mxu0 0
        %2574 = vmatpush2.bf16.msra.mxu0 0
        %2575 = vmatprep.mubr.bf16.mxu0 0
        %2576 = vmatmul.mubr.bf16.gmra.mxu0 %v2538
        %v2577 = vpop.f32.mrf.mxu0
        %v2578 = vadd.f32 0.0, %v2577
        %v2579 = vpop.f32.mrf.mxu0
        %v2580 = vpop.f32.mrf.mxu0
        %v2581 = vadd.f32 0.0, %v2580
        %v2582 = vpop.f32.mrf.mxu0
        %2583 = vdwg.mxu0
        %v2584 = vpack.c.bf16 %v2581, %v2578
        %v2585 = vld [vmem:[%s1145] sm:$0xf]
        %v2587 = vsel %vm736, %v2584, 0
        %v2590 = vsel %vm1150, %v2585, 0
        %2592 = vmatprep.subr.bf16.mxu0 0
        %2593 = vmatpush1.bf16.msra.mxu0 0
        %2594 = vmatprep.subr.bf16.mxu0 0
        %2595 = vmatpush1.bf16.msra.mxu0 0
        %2596 = vmatprep.subr.bf16.mxu0 0
        %2597 = vmatpush1.bf16.msra.mxu0 0
        %2598 = vmatprep.subr.bf16.mxu0 0
        %2599 = vmatpush1.bf16.msra.mxu0 0
        %2600 = vmatprep.subr.bf16.mxu0 0
        %2601 = vmatpush1.bf16.msra.mxu0 0
        %2602 = vmatprep.subr.bf16.mxu0 0
        %2603 = vmatpush1.bf16.msra.mxu0 0
        %2604 = vmatprep.subr.bf16.mxu0 0
        %2605 = vmatpush1.bf16.msra.mxu0 0
        %2606 = vmatprep.subr.bf16.mxu0 0
        %2607 = vmatpush1.bf16.msra.mxu0 %v2590
        %2608 = vmatprep.subr.bf16.mxu0 0
        %2609 = vmatpush2.bf16.msra.mxu0 0
        %2610 = vmatprep.subr.bf16.mxu0 0
        %2611 = vmatpush2.bf16.msra.mxu0 0
        %2612 = vmatprep.subr.bf16.mxu0 0
        %2613 = vmatpush2.bf16.msra.mxu0 0
        %2614 = vmatprep.subr.bf16.mxu0 0
        %2615 = vmatpush2.bf16.msra.mxu0 0
        %2616 = vmatprep.subr.bf16.mxu0 0
        %2617 = vmatpush2.bf16.msra.mxu0 0
        %2618 = vmatprep.subr.bf16.mxu0 0
        %2619 = vmatpush2.bf16.msra.mxu0 0
        %2620 = vmatprep.subr.bf16.mxu0 0
        %2621 = vmatpush2.bf16.msra.mxu0 0
        %2622 = vmatprep.subr.bf16.mxu0 0
        %2623 = vmatpush2.bf16.msra.mxu0 0
        %2624 = vmatprep.mubr.bf16.mxu0 0
        %2625 = vmatmul.mubr.bf16.gmra.mxu0 %v2587
        %v2626 = vpop.f32.mrf.mxu0
        %v2627 = vadd.f32 0.0, %v2626
        %v2628 = vpop.f32.mrf.mxu0
        %v2629 = vpop.f32.mrf.mxu0
        %v2630 = vadd.f32 0.0, %v2629
        %v2631 = vpop.f32.mrf.mxu0
        %2632 = vdwg.mxu0
        %v2634 = vsel %vm736, %v2270, 0
        %v2637 = vsel %vm1150, %v2271, 0
        %2639 = vmatprep.subr.bf16.mxu0 0
        %2640 = vmatpush1.bf16.msra.mxu0 0
        %2641 = vmatprep.subr.bf16.mxu0 0
        %2642 = vmatpush1.bf16.msra.mxu0 0
        %2643 = vmatprep.subr.bf16.mxu0 0
        %2644 = vmatpush1.bf16.msra.mxu0 0
        %2645 = vmatprep.subr.bf16.mxu0 0
        %2646 = vmatpush1.bf16.msra.mxu0 0
        %2647 = vmatprep.subr.bf16.mxu0 0
        %2648 = vmatpush1.bf16.msra.mxu0 0
        %2649 = vmatprep.subr.bf16.mxu0 0
        %2650 = vmatpush1.bf16.msra.mxu0 0
        %2651 = vmatprep.subr.bf16.mxu0 0
        %2652 = vmatpush1.bf16.msra.mxu0 0
        %2653 = vmatprep.subr.bf16.mxu0 0
        %2654 = vmatpush1.bf16.msra.mxu0 %v2637
        %2655 = vmatprep.subr.bf16.mxu0 0
        %2656 = vmatpush2.bf16.msra.mxu0 0
        %2657 = vmatprep.subr.bf16.mxu0 0
        %2658 = vmatpush2.bf16.msra.mxu0 0
        %2659 = vmatprep.subr.bf16.mxu0 0
        %2660 = vmatpush2.bf16.msra.mxu0 0
        %2661 = vmatprep.subr.bf16.mxu0 0
        %2662 = vmatpush2.bf16.msra.mxu0 0
        %2663 = vmatprep.subr.bf16.mxu0 0
        %2664 = vmatpush2.bf16.msra.mxu0 0
        %2665 = vmatprep.subr.bf16.mxu0 0
        %2666 = vmatpush2.bf16.msra.mxu0 0
        %2667 = vmatprep.subr.bf16.mxu0 0
        %2668 = vmatpush2.bf16.msra.mxu0 0
        %2669 = vmatprep.subr.bf16.mxu0 0
        %2670 = vmatpush2.bf16.msra.mxu0 0
        %2671 = vmatprep.mubr.bf16.mxu0 0
        %2672 = vmatmul.mubr.bf16.gmra.mxu0 %v2634
        %v2673 = vpop.f32.mrf.mxu0
        %v2674 = vadd.f32 %v2627, %v2673
        %v2675 = vpop.f32.mrf.mxu0
        %v2676 = vpop.f32.mrf.mxu0
        %v2677 = vadd.f32 %v2630, %v2676
        %v2678 = vpop.f32.mrf.mxu0
        %2679 = vdwg.mxu0
        %v2680 = vld [vmem:[%s1240] sm:$0xf]
        %v2681 = vld [vmem:[%s1240 + $0x4] sm:$0xf]
        %v2682 = vld [vmem:[%s1240 + $0x8] sm:$0xf]
        %v2683 = vld [vmem:[%s1240 + $0xc] sm:$0xf]
        %v2684 = vld [vmem:[%s1245] sm:$0x1]
        %v2686 = vlaneseq
        %v2687 = vshrl.u32 %v2686, 7
        %v2688 = vsub.s32 0, %v2687
        %v2689 = vrot.slane %v2684, %v2688
        %v2695 = vunpack.c.l.b16 %v2680
        %v2696 = vunpack.c.l.b16 %v2681
        %v2697 = vunpack.c.l.b16 %v2682
        %v2698 = vunpack.c.l.b16 %v2683
        %v2699 = vpack.c.b16 %v2696, %v2695
        %v2700 = vpack.c.b16 %v2698, %v2697
        %2703 = vmatprep.subr.bf16.mxu0 0
        %2704 = vmatpush1.bf16.msra.mxu0 0
        %2705 = vmatprep.subr.bf16.mxu0 0
        %2706 = vmatpush1.bf16.msra.mxu0 0
        %2707 = vmatprep.subr.bf16.mxu0 0
        %2708 = vmatpush1.bf16.msra.mxu0 0
        %2709 = vmatprep.subr.bf16.mxu0 0
        %2710 = vmatpush1.bf16.msra.mxu0 0
        %2711 = vmatprep.subr.bf16.mxu0 0
        %2712 = vmatpush1.bf16.msra.mxu0 0
        %2713 = vmatprep.subr.bf16.mxu0 0
        %2714 = vmatpush1.bf16.msra.mxu0 0
        %2715 = vmatprep.subr.bf16.mxu0 0
        %2716 = vmatpush1.bf16.msra.mxu0 %v2700
        %2717 = vmatprep.subr.bf16.mxu0 0
        %2718 = vmatpush1.bf16.msra.mxu0 %v2699
        %2719 = vmatprep.subr.bf16.mxu0 0
        %2720 = vmatpush2.bf16.msra.mxu0 0
        %2721 = vmatprep.subr.bf16.mxu0 0
        %2722 = vmatpush2.bf16.msra.mxu0 0
        %2723 = vmatprep.subr.bf16.mxu0 0
        %2724 = vmatpush2.bf16.msra.mxu0 0
        %2725 = vmatprep.subr.bf16.mxu0 0
        %2726 = vmatpush2.bf16.msra.mxu0 0
        %2727 = vmatprep.subr.bf16.mxu0 0
        %2728 = vmatpush2.bf16.msra.mxu0 0
        %2729 = vmatprep.subr.bf16.mxu0 0
        %2730 = vmatpush2.bf16.msra.mxu0 0
        %2731 = vmatprep.subr.bf16.mxu0 0
        %2732 = vmatpush2.bf16.msra.mxu0 0
        %2733 = vmatprep.subr.bf16.mxu0 0
        %2734 = vmatpush2.bf16.msra.mxu0 0
        %2735 = vmatprep.mubr.bf16.mxu0 0
        %2736 = vmatmul.mubr.bf16.gmra.mxu0 %v626
        %v2737 = vpop.f32.mrf.mxu0
        %v2738 = vadd.f32 %v2689, %v2737
        %v2739 = vpop.f32.mrf.mxu0
        %v2740 = vpop.f32.mrf.mxu0
        %v2741 = vadd.f32 %v2689, %v2740
        %v2742 = vpop.f32.mrf.mxu0
        %2743 = vdwg.mxu0
        %v2744 = vld [vmem:[%s1305] sm:$0xf]
        %v2745 = vld [vmem:[%s1305 + $0x4] sm:$0xf]
        %v2746 = vld [vmem:[%s1305 + $0x8] sm:$0xf]
        %v2747 = vld [vmem:[%s1305 + $0xc] sm:$0xf]
        %v2748 = vld [vmem:[%s1310] sm:$0x1]
        %v2750 = vlaneseq
        %v2751 = vshrl.u32 %v2750, 7
        %v2752 = vsub.s32 0, %v2751
        %v2753 = vrot.slane %v2748, %v2752
        %v2759 = vunpack.c.l.b16 %v2744
        %v2760 = vunpack.c.l.b16 %v2745
        %v2761 = vunpack.c.l.b16 %v2746
        %v2762 = vunpack.c.l.b16 %v2747
        %v2763 = vpack.c.b16 %v2760, %v2759
        %v2764 = vpack.c.b16 %v2762, %v2761
        %2767 = vmatprep.subr.bf16.mxu0 0
        %2768 = vmatpush1.bf16.msra.mxu0 0
        %2769 = vmatprep.subr.bf16.mxu0 0
        %2770 = vmatpush1.bf16.msra.mxu0 0
        %2771 = vmatprep.subr.bf16.mxu0 0
        %2772 = vmatpush1.bf16.msra.mxu0 0
        %2773 = vmatprep.subr.bf16.mxu0 0
        %2774 = vmatpush1.bf16.msra.mxu0 0
        %2775 = vmatprep.subr.bf16.mxu0 0
        %2776 = vmatpush1.bf16.msra.mxu0 0
        %2777 = vmatprep.subr.bf16.mxu0 0
        %2778 = vmatpush1.bf16.msra.mxu0 0
        %2779 = vmatprep.subr.bf16.mxu0 0
        %2780 = vmatpush1.bf16.msra.mxu0 %v2764
        %2781 = vmatprep.subr.bf16.mxu0 0
        %2782 = vmatpush1.bf16.msra.mxu0 %v2763
        %2783 = vmatprep.subr.bf16.mxu0 0
        %2784 = vmatpush2.bf16.msra.mxu0 0
        %2785 = vmatprep.subr.bf16.mxu0 0
        %2786 = vmatpush2.bf16.msra.mxu0 0
        %2787 = vmatprep.subr.bf16.mxu0 0
        %2788 = vmatpush2.bf16.msra.mxu0 0
        %2789 = vmatprep.subr.bf16.mxu0 0
        %2790 = vmatpush2.bf16.msra.mxu0 0
        %2791 = vmatprep.subr.bf16.mxu0 0
        %2792 = vmatpush2.bf16.msra.mxu0 0
        %2793 = vmatprep.subr.bf16.mxu0 0
        %2794 = vmatpush2.bf16.msra.mxu0 0
        %2795 = vmatprep.subr.bf16.mxu0 0
        %2796 = vmatpush2.bf16.msra.mxu0 0
        %2797 = vmatprep.subr.bf16.mxu0 0
        %2798 = vmatpush2.bf16.msra.mxu0 0
        %2799 = vmatprep.mubr.bf16.mxu0 0
        %2800 = vmatmul.mubr.bf16.gmra.mxu0 %v2043
        %v2801 = vpop.f32.mrf.mxu0
        %v2802 = vadd.f32 %v2753, %v2801
        %v2803 = vpop.f32.mrf.mxu0
        %v2804 = vpop.f32.mrf.mxu0
        %v2805 = vpop.f32.mrf.mxu0
        %2806 = vdwg.mxu0
        %v2807 = vld [vmem:[%s1371] sm:$0xf]
        %v2808 = vld [vmem:[%s1371 + $0x4] sm:$0xf]
        %v2809 = vld [vmem:[%s1371 + $0x8] sm:$0xf]
        %v2810 = vld [vmem:[%s1371 + $0xc] sm:$0xf]
        %v2811 = vld [vmem:[%s1376] sm:$0x1]
        %v2813 = vlaneseq
        %v2814 = vshrl.u32 %v2813, 7
        %v2815 = vsub.s32 0, %v2814
        %v2816 = vrot.slane %v2811, %v2815
        %v2822 = vunpack.c.l.b16 %v2807
        %v2823 = vunpack.c.l.b16 %v2808
        %v2824 = vunpack.c.l.b16 %v2809
        %v2825 = vunpack.c.l.b16 %v2810
        %v2826 = vpack.c.b16 %v2823, %v2822
        %v2827 = vpack.c.b16 %v2825, %v2824
        %2830 = vmatprep.subr.bf16.mxu0 0
        %2831 = vmatpush1.bf16.msra.mxu0 0
        %2832 = vmatprep.subr.bf16.mxu0 0
        %2833 = vmatpush1.bf16.msra.mxu0 0
        %2834 = vmatprep.subr.bf16.mxu0 0
        %2835 = vmatpush1.bf16.msra.mxu0 0
        %2836 = vmatprep.subr.bf16.mxu0 0
        %2837 = vmatpush1.bf16.msra.mxu0 0
        %2838 = vmatprep.subr.bf16.mxu0 0
        %2839 = vmatpush1.bf16.msra.mxu0 0
        %2840 = vmatprep.subr.bf16.mxu0 0
        %2841 = vmatpush1.bf16.msra.mxu0 0
        %2842 = vmatprep.subr.bf16.mxu0 0
        %2843 = vmatpush1.bf16.msra.mxu0 %v2827
        %2844 = vmatprep.subr.bf16.mxu0 0
        %2845 = vmatpush1.bf16.msra.mxu0 %v2826
        %2846 = vmatprep.subr.bf16.mxu0 0
        %2847 = vmatpush2.bf16.msra.mxu0 0
        %2848 = vmatprep.subr.bf16.mxu0 0
        %2849 = vmatpush2.bf16.msra.mxu0 0
        %2850 = vmatprep.subr.bf16.mxu0 0
        %2851 = vmatpush2.bf16.msra.mxu0 0
        %2852 = vmatprep.subr.bf16.mxu0 0
        %2853 = vmatpush2.bf16.msra.mxu0 0
        %2854 = vmatprep.subr.bf16.mxu0 0
        %2855 = vmatpush2.bf16.msra.mxu0 0
        %2856 = vmatprep.subr.bf16.mxu0 0
        %2857 = vmatpush2.bf16.msra.mxu0 0
        %2858 = vmatprep.subr.bf16.mxu0 0
        %2859 = vmatpush2.bf16.msra.mxu0 0
        %2860 = vmatprep.subr.bf16.mxu0 0
        %2861 = vmatpush2.bf16.msra.mxu0 0
        %2862 = vmatprep.mubr.bf16.mxu0 0
        %2863 = vmatmul.mubr.bf16.gmra.mxu0 %v2043
        %v2864 = vpop.f32.mrf.mxu0
        %v2865 = vadd.f32 %v2816, %v2864
        %v2866 = vpop.f32.mrf.mxu0
        %v2867 = vpop.f32.mrf.mxu0
        %v2868 = vpop.f32.mrf.mxu0
        %2869 = vdwg.mxu0
        %v2870 = vmul.f32 %v2738, 0.35355338
        %v2871 = vmul.f32 %v2741, 0.35355338
        %v2872 = vpack.c.bf16 %v2871, %v2870
        %v2873 = vpack.c.bf16 %v2802, %v2802
        %v2875 = vsel %vm736, %v2872, 0
        %v2878 = vsel %vm736, %v2873, 0
        %2880 = vmatprep.subr.bf16.mxu0 0
        %2881 = vmatpush1.bf16.xpose.msra.mxu0 0
        %2882 = vmatprep.subr.bf16.mxu0 0
        %2883 = vmatpush1.bf16.xpose.msra.mxu0 0
        %2884 = vmatprep.subr.bf16.mxu0 0
        %2885 = vmatpush1.bf16.xpose.msra.mxu0 0
        %2886 = vmatprep.subr.bf16.mxu0 0
        %2887 = vmatpush1.bf16.xpose.msra.mxu0 0
        %2888 = vmatprep.subr.bf16.mxu0 0
        %2889 = vmatpush1.bf16.xpose.msra.mxu0 0
        %2890 = vmatprep.subr.bf16.mxu0 0
        %2891 = vmatpush1.bf16.xpose.msra.mxu0 0
        %2892 = vmatprep.subr.bf16.mxu0 0
        %2893 = vmatpush1.bf16.xpose.msra.mxu0 0
        %2894 = vmatprep.subr.bf16.mxu0 0
        %2895 = vmatpush1.bf16.xpose.msra.mxu0 %v2878
        %2896 = vmatprep.subr.bf16.mxu0 0
        %2897 = vmatpush2.bf16.xpose.msra.mxu0 0
        %2898 = vmatprep.subr.bf16.mxu0 0
        %2899 = vmatpush2.bf16.xpose.msra.mxu0 0
        %2900 = vmatprep.subr.bf16.mxu0 0
        %2901 = vmatpush2.bf16.xpose.msra.mxu0 0
        %2902 = vmatprep.subr.bf16.mxu0 0
        %2903 = vmatpush2.bf16.xpose.msra.mxu0 0
        %2904 = vmatprep.subr.bf16.mxu0 0
        %2905 = vmatpush2.bf16.xpose.msra.mxu0 0
        %2906 = vmatprep.subr.bf16.mxu0 0
        %2907 = vmatpush2.bf16.xpose.msra.mxu0 0
        %2908 = vmatprep.subr.bf16.mxu0 0
        %2909 = vmatpush2.bf16.xpose.msra.mxu0 0
        %2910 = vmatprep.subr.bf16.mxu0 0
        %2911 = vmatpush2.bf16.xpose.msra.mxu0 0
        %2912 = vmatprep.mubr.bf16.mxu0 0
        %2913 = vmatmul.mubr.bf16.gmra.mxu0 %v2875
        %v2914 = vpop.f32.mrf.mxu0
        %v2915 = vadd.f32 0.0, %v2914
        %v2916 = vpop.f32.mrf.mxu0
        %v2917 = vpop.f32.mrf.mxu0
        %v2918 = vadd.f32 0.0, %v2917
        %v2919 = vpop.f32.mrf.mxu0
        %2920 = vdwg.mxu0
        %v2921 = vsel %vm736, %v2915, -inf
        %2922 = vmax.xlane.f32.xlu0 %v2921
        %v2923 = vpop.xlane.xlu0 %2922
        %v2924 = vsel %vm736, %v2918, -inf
        %2925 = vmax.xlane.f32.xlu0 %v2924
        %v2926 = vpop.xlane.xlu0 %2925
        %v2927 = vsub.f32 %v2915, %v2923
        %v2928 = vsub.f32 %v2918, %v2926
        %v2929 = vmul.f32 %v2927, 1.442695
        %v2930 = vpow.pop %v2929
        %v2931 = vmul.f32 %v2928, 1.442695
        %v2932 = vpow.pop %v2931
        %v2933 = vsel %vm736, %v2930, 0.0
        %2934 = vadd.xlane.f32.xlu0 %v2933
        %v2935 = vpop.xlane.xlu0 %2934
        %v2936 = vsel %vm736, %v2932, 0.0
        %2937 = vadd.xlane.f32.xlu0 %v2936
        %v2938 = vpop.xlane.xlu0 %2937
        %v2939 = vrcp.pop %v2935
        %v2940 = vrcp.pop %v2938
        %v2941 = vmul.f32 %v2930, %v2939
        %v2942 = vmul.f32 %v2932, %v2940
        %v2943 = vpack.c.bf16 %v2942, %v2941
        %v2944 = vpack.c.bf16 %v2865, %v2865
        %v2946 = vsel %vm736, %v2943, 0
        %v2949 = vsel %vm1150, %v2944, 0
        %2951 = vmatprep.subr.bf16.mxu0 0
        %2952 = vmatpush1.bf16.msra.mxu0 0
        %2953 = vmatprep.subr.bf16.mxu0 0
        %2954 = vmatpush1.bf16.msra.mxu0 0
        %2955 = vmatprep.subr.bf16.mxu0 0
        %2956 = vmatpush1.bf16.msra.mxu0 0
        %2957 = vmatprep.subr.bf16.mxu0 0
        %2958 = vmatpush1.bf16.msra.mxu0 0
        %2959 = vmatprep.subr.bf16.mxu0 0
        %2960 = vmatpush1.bf16.msra.mxu0 0
        %2961 = vmatprep.subr.bf16.mxu0 0
        %2962 = vmatpush1.bf16.msra.mxu0 0
        %2963 = vmatprep.subr.bf16.mxu0 0
        %2964 = vmatpush1.bf16.msra.mxu0 0
        %2965 = vmatprep.subr.bf16.mxu0 0
        %2966 = vmatpush1.bf16.msra.mxu0 %v2949
        %2967 = vmatprep.subr.bf16.mxu0 0
        %2968 = vmatpush2.bf16.msra.mxu0 0
        %2969 = vmatprep.subr.bf16.mxu0 0
        %2970 = vmatpush2.bf16.msra.mxu0 0
        %2971 = vmatprep.subr.bf16.mxu0 0
        %2972 = vmatpush2.bf16.msra.mxu0 0
        %2973 = vmatprep.subr.bf16.mxu0 0
        %2974 = vmatpush2.bf16.msra.mxu0 0
        %2975 = vmatprep.subr.bf16.mxu0 0
        %2976 = vmatpush2.bf16.msra.mxu0 0
        %2977 = vmatprep.subr.bf16.mxu0 0
        %2978 = vmatpush2.bf16.msra.mxu0 0
        %2979 = vmatprep.subr.bf16.mxu0 0
        %2980 = vmatpush2.bf16.msra.mxu0 0
        %2981 = vmatprep.subr.bf16.mxu0 0
        %2982 = vmatpush2.bf16.msra.mxu0 0
        %2983 = vmatprep.mubr.bf16.mxu0 0
        %2984 = vmatmul.mubr.bf16.gmra.mxu0 %v2946
        %v2985 = vpop.f32.mrf.mxu0
        %v2986 = vadd.f32 0.0, %v2985
        %v2987 = vpop.f32.mrf.mxu0
        %v2988 = vpop.f32.mrf.mxu0
        %v2989 = vadd.f32 0.0, %v2988
        %v2990 = vpop.f32.mrf.mxu0
        %2991 = vdwg.mxu0
        %v2992 = vpack.c.bf16 %v2989, %v2986
        %v2993 = vld [vmem:[%s1543] sm:$0xf]
        %v2995 = vsel %vm736, %v2992, 0
        %v2998 = vsel %vm1150, %v2993, 0
        %3000 = vmatprep.subr.bf16.mxu0 0
        %3001 = vmatpush1.bf16.msra.mxu0 0
        %3002 = vmatprep.subr.bf16.mxu0 0
        %3003 = vmatpush1.bf16.msra.mxu0 0
        %3004 = vmatprep.subr.bf16.mxu0 0
        %3005 = vmatpush1.bf16.msra.mxu0 0
        %3006 = vmatprep.subr.bf16.mxu0 0
        %3007 = vmatpush1.bf16.msra.mxu0 0
        %3008 = vmatprep.subr.bf16.mxu0 0
        %3009 = vmatpush1.bf16.msra.mxu0 0
        %3010 = vmatprep.subr.bf16.mxu0 0
        %3011 = vmatpush1.bf16.msra.mxu0 0
        %3012 = vmatprep.subr.bf16.mxu0 0
        %3013 = vmatpush1.bf16.msra.mxu0 0
        %3014 = vmatprep.subr.bf16.mxu0 0
        %3015 = vmatpush1.bf16.msra.mxu0 %v2998
        %3016 = vmatprep.subr.bf16.mxu0 0
        %3017 = vmatpush2.bf16.msra.mxu0 0
        %3018 = vmatprep.subr.bf16.mxu0 0
        %3019 = vmatpush2.bf16.msra.mxu0 0
        %3020 = vmatprep.subr.bf16.mxu0 0
        %3021 = vmatpush2.bf16.msra.mxu0 0
        %3022 = vmatprep.subr.bf16.mxu0 0
        %3023 = vmatpush2.bf16.msra.mxu0 0
        %3024 = vmatprep.subr.bf16.mxu0 0
        %3025 = vmatpush2.bf16.msra.mxu0 0
        %3026 = vmatprep.subr.bf16.mxu0 0
        %3027 = vmatpush2.bf16.msra.mxu0 0
        %3028 = vmatprep.subr.bf16.mxu0 0
        %3029 = vmatpush2.bf16.msra.mxu0 0
        %3030 = vmatprep.subr.bf16.mxu0 0
        %3031 = vmatpush2.bf16.msra.mxu0 0
        %3032 = vmatprep.mubr.bf16.mxu0 0
        %3033 = vmatmul.mubr.bf16.gmra.mxu0 %v2995
        %v3034 = vpop.f32.mrf.mxu0
        %v3035 = vadd.f32 0.0, %v3034
        %v3036 = vpop.f32.mrf.mxu0
        %v3037 = vpop.f32.mrf.mxu0
        %v3038 = vadd.f32 0.0, %v3037
        %v3039 = vpop.f32.mrf.mxu0
        %3040 = vdwg.mxu0
        %v3041 = vadd.f32 %v2674, %v3035
        %v3042 = vadd.f32 %v2677, %v3038
        %v3043 = vld [vmem:[%s1592] sm:$0xf]
        %v3044 = vld [vmem:[%s1592 + $0x4] sm:$0xf]
        %v3045 = vld [vmem:[%s1592 + $0x8] sm:$0xf]
        %v3046 = vld [vmem:[%s1592 + $0xc] sm:$0xf]
        %v3047 = vld [vmem:[%s1597] sm:$0x1]
        %v3049 = vlaneseq
        %v3050 = vshrl.u32 %v3049, 7
        %v3051 = vsub.s32 0, %v3050
        %v3052 = vrot.slane %v3047, %v3051
        %v3058 = vunpack.c.l.b16 %v3043
        %v3059 = vunpack.c.l.b16 %v3044
        %v3060 = vunpack.c.l.b16 %v3045
        %v3061 = vunpack.c.l.b16 %v3046
        %v3062 = vpack.c.b16 %v3059, %v3058
        %v3063 = vpack.c.b16 %v3061, %v3060
        %3066 = vmatprep.subr.bf16.mxu0 0
        %3067 = vmatpush1.bf16.msra.mxu0 0
        %3068 = vmatprep.subr.bf16.mxu0 0
        %3069 = vmatpush1.bf16.msra.mxu0 0
        %3070 = vmatprep.subr.bf16.mxu0 0
        %3071 = vmatpush1.bf16.msra.mxu0 0
        %3072 = vmatprep.subr.bf16.mxu0 0
        %3073 = vmatpush1.bf16.msra.mxu0 0
        %3074 = vmatprep.subr.bf16.mxu0 0
        %3075 = vmatpush1.bf16.msra.mxu0 0
        %3076 = vmatprep.subr.bf16.mxu0 0
        %3077 = vmatpush1.bf16.msra.mxu0 0
        %3078 = vmatprep.subr.bf16.mxu0 0
        %3079 = vmatpush1.bf16.msra.mxu0 %v3063
        %3080 = vmatprep.subr.bf16.mxu0 0
        %3081 = vmatpush1.bf16.msra.mxu0 %v3062
        %3082 = vmatprep.subr.bf16.mxu0 0
        %3083 = vmatpush2.bf16.msra.mxu0 0
        %3084 = vmatprep.subr.bf16.mxu0 0
        %3085 = vmatpush2.bf16.msra.mxu0 0
        %3086 = vmatprep.subr.bf16.mxu0 0
        %3087 = vmatpush2.bf16.msra.mxu0 0
        %3088 = vmatprep.subr.bf16.mxu0 0
        %3089 = vmatpush2.bf16.msra.mxu0 0
        %3090 = vmatprep.subr.bf16.mxu0 0
        %3091 = vmatpush2.bf16.msra.mxu0 0
        %3092 = vmatprep.subr.bf16.mxu0 0
        %3093 = vmatpush2.bf16.msra.mxu0 0
        %3094 = vmatprep.subr.bf16.mxu0 0
        %3095 = vmatpush2.bf16.msra.mxu0 0
        %3096 = vmatprep.subr.bf16.mxu0 0
        %3097 = vmatpush2.bf16.msra.mxu0 0
        %3098 = vmatprep.mubr.bf16.mxu0 0
        %3099 = vmatmul.mubr.bf16.gmra.mxu0 %v626
        %v3100 = vpop.f32.mrf.mxu0
        %v3101 = vadd.f32 %v3052, %v3100
        %v3102 = vpop.f32.mrf.mxu0
        %v3103 = vpop.f32.mrf.mxu0
        %v3104 = vadd.f32 %v3052, %v3103
        %v3105 = vpop.f32.mrf.mxu0
        %3106 = vdwg.mxu0
        %v3107 = vld [vmem:[%s1657] sm:$0xf]
        %v3108 = vld [vmem:[%s1657 + $0x4] sm:$0xf]
        %v3109 = vld [vmem:[%s1657 + $0x8] sm:$0xf]
        %v3110 = vld [vmem:[%s1657 + $0xc] sm:$0xf]
        %v3111 = vld [vmem:[%s1662] sm:$0x1]
        %v3113 = vlaneseq
        %v3114 = vshrl.u32 %v3113, 7
        %v3115 = vsub.s32 0, %v3114
        %v3116 = vrot.slane %v3111, %v3115
        %v3122 = vunpack.c.l.b16 %v3107
        %v3123 = vunpack.c.l.b16 %v3108
        %v3124 = vunpack.c.l.b16 %v3109
        %v3125 = vunpack.c.l.b16 %v3110
        %v3126 = vpack.c.b16 %v3123, %v3122
        %v3127 = vpack.c.b16 %v3125, %v3124
        %3130 = vmatprep.subr.bf16.mxu0 0
        %3131 = vmatpush1.bf16.msra.mxu0 0
        %3132 = vmatprep.subr.bf16.mxu0 0
        %3133 = vmatpush1.bf16.msra.mxu0 0
        %3134 = vmatprep.subr.bf16.mxu0 0
        %3135 = vmatpush1.bf16.msra.mxu0 0
        %3136 = vmatprep.subr.bf16.mxu0 0
        %3137 = vmatpush1.bf16.msra.mxu0 0
        %3138 = vmatprep.subr.bf16.mxu0 0
        %3139 = vmatpush1.bf16.msra.mxu0 0
        %3140 = vmatprep.subr.bf16.mxu0 0
        %3141 = vmatpush1.bf16.msra.mxu0 0
        %3142 = vmatprep.subr.bf16.mxu0 0
        %3143 = vmatpush1.bf16.msra.mxu0 %v3127
        %3144 = vmatprep.subr.bf16.mxu0 0
        %3145 = vmatpush1.bf16.msra.mxu0 %v3126
        %3146 = vmatprep.subr.bf16.mxu0 0
        %3147 = vmatpush2.bf16.msra.mxu0 0
        %3148 = vmatprep.subr.bf16.mxu0 0
        %3149 = vmatpush2.bf16.msra.mxu0 0
        %3150 = vmatprep.subr.bf16.mxu0 0
        %3151 = vmatpush2.bf16.msra.mxu0 0
        %3152 = vmatprep.subr.bf16.mxu0 0
        %3153 = vmatpush2.bf16.msra.mxu0 0
        %3154 = vmatprep.subr.bf16.mxu0 0
        %3155 = vmatpush2.bf16.msra.mxu0 0
        %3156 = vmatprep.subr.bf16.mxu0 0
        %3157 = vmatpush2.bf16.msra.mxu0 0
        %3158 = vmatprep.subr.bf16.mxu0 0
        %3159 = vmatpush2.bf16.msra.mxu0 0
        %3160 = vmatprep.subr.bf16.mxu0 0
        %3161 = vmatpush2.bf16.msra.mxu0 0
        %3162 = vmatprep.mubr.bf16.mxu0 0
        %3163 = vmatmul.mubr.bf16.gmra.mxu0 %v2043
        %v3164 = vpop.f32.mrf.mxu0
        %v3165 = vadd.f32 %v3116, %v3164
        %v3166 = vpop.f32.mrf.mxu0
        %v3167 = vpop.f32.mrf.mxu0
        %v3168 = vpop.f32.mrf.mxu0
        %3169 = vdwg.mxu0
        %v3170 = vld [vmem:[%s1723] sm:$0xf]
        %v3171 = vld [vmem:[%s1723 + $0x4] sm:$0xf]
        %v3172 = vld [vmem:[%s1723 + $0x8] sm:$0xf]
        %v3173 = vld [vmem:[%s1723 + $0xc] sm:$0xf]
        %v3174 = vld [vmem:[%s1728] sm:$0x1]
        %v3176 = vlaneseq
        %v3177 = vshrl.u32 %v3176, 7
        %v3178 = vsub.s32 0, %v3177
        %v3179 = vrot.slane %v3174, %v3178
        %v3185 = vunpack.c.l.b16 %v3170
        %v3186 = vunpack.c.l.b16 %v3171
        %v3187 = vunpack.c.l.b16 %v3172
        %v3188 = vunpack.c.l.b16 %v3173
        %v3189 = vpack.c.b16 %v3186, %v3185
        %v3190 = vpack.c.b16 %v3188, %v3187
        %3193 = vmatprep.subr.bf16.mxu0 0
        %3194 = vmatpush1.bf16.msra.mxu0 0
        %3195 = vmatprep.subr.bf16.mxu0 0
        %3196 = vmatpush1.bf16.msra.mxu0 0
        %3197 = vmatprep.subr.bf16.mxu0 0
        %3198 = vmatpush1.bf16.msra.mxu0 0
        %3199 = vmatprep.subr.bf16.mxu0 0
        %3200 = vmatpush1.bf16.msra.mxu0 0
        %3201 = vmatprep.subr.bf16.mxu0 0
        %3202 = vmatpush1.bf16.msra.mxu0 0
        %3203 = vmatprep.subr.bf16.mxu0 0
        %3204 = vmatpush1.bf16.msra.mxu0 0
        %3205 = vmatprep.subr.bf16.mxu0 0
        %3206 = vmatpush1.bf16.msra.mxu0 %v3190
        %3207 = vmatprep.subr.bf16.mxu0 0
        %3208 = vmatpush1.bf16.msra.mxu0 %v3189
        %3209 = vmatprep.subr.bf16.mxu0 0
        %3210 = vmatpush2.bf16.msra.mxu0 0
        %3211 = vmatprep.subr.bf16.mxu0 0
        %3212 = vmatpush2.bf16.msra.mxu0 0
        %3213 = vmatprep.subr.bf16.mxu0 0
        %3214 = vmatpush2.bf16.msra.mxu0 0
        %3215 = vmatprep.subr.bf16.mxu0 0
        %3216 = vmatpush2.bf16.msra.mxu0 0
        %3217 = vmatprep.subr.bf16.mxu0 0
        %3218 = vmatpush2.bf16.msra.mxu0 0
        %3219 = vmatprep.subr.bf16.mxu0 0
        %3220 = vmatpush2.bf16.msra.mxu0 0
        %3221 = vmatprep.subr.bf16.mxu0 0
        %3222 = vmatpush2.bf16.msra.mxu0 0
        %3223 = vmatprep.subr.bf16.mxu0 0
        %3224 = vmatpush2.bf16.msra.mxu0 0
        %3225 = vmatprep.mubr.bf16.mxu0 0
        %3226 = vmatmul.mubr.bf16.gmra.mxu0 %v2043
        %v3227 = vpop.f32.mrf.mxu0
        %v3228 = vadd.f32 %v3179, %v3227
        %v3229 = vpop.f32.mrf.mxu0
        %v3230 = vpop.f32.mrf.mxu0
        %v3231 = vpop.f32.mrf.mxu0
        %3232 = vdwg.mxu0
        %v3233 = vmul.f32 %v3101, 0.35355338
        %v3234 = vmul.f32 %v3104, 0.35355338
        %v3235 = vpack.c.bf16 %v3234, %v3233
        %v3236 = vpack.c.bf16 %v3165, %v3165
        %v3238 = vsel %vm736, %v3235, 0
        %v3241 = vsel %vm736, %v3236, 0
        %3243 = vmatprep.subr.bf16.mxu0 0
        %3244 = vmatpush1.bf16.xpose.msra.mxu0 0
        %3245 = vmatprep.subr.bf16.mxu0 0
        %3246 = vmatpush1.bf16.xpose.msra.mxu0 0
        %3247 = vmatprep.subr.bf16.mxu0 0
        %3248 = vmatpush1.bf16.xpose.msra.mxu0 0
        %3249 = vmatprep.subr.bf16.mxu0 0
        %3250 = vmatpush1.bf16.xpose.msra.mxu0 0
        %3251 = vmatprep.subr.bf16.mxu0 0
        %3252 = vmatpush1.bf16.xpose.msra.mxu0 0
        %3253 = vmatprep.subr.bf16.mxu0 0
        %3254 = vmatpush1.bf16.xpose.msra.mxu0 0
        %3255 = vmatprep.subr.bf16.mxu0 0
        %3256 = vmatpush1.bf16.xpose.msra.mxu0 0
        %3257 = vmatprep.subr.bf16.mxu0 0
        %3258 = vmatpush1.bf16.xpose.msra.mxu0 %v3241
        %3259 = vmatprep.subr.bf16.mxu0 0
        %3260 = vmatpush2.bf16.xpose.msra.mxu0 0
        %3261 = vmatprep.subr.bf16.mxu0 0
        %3262 = vmatpush2.bf16.xpose.msra.mxu0 0
        %3263 = vmatprep.subr.bf16.mxu0 0
        %3264 = vmatpush2.bf16.xpose.msra.mxu0 0
        %3265 = vmatprep.subr.bf16.mxu0 0
        %3266 = vmatpush2.bf16.xpose.msra.mxu0 0
        %3267 = vmatprep.subr.bf16.mxu0 0
        %3268 = vmatpush2.bf16.xpose.msra.mxu0 0
        %3269 = vmatprep.subr.bf16.mxu0 0
        %3270 = vmatpush2.bf16.xpose.msra.mxu0 0
        %3271 = vmatprep.subr.bf16.mxu0 0
        %3272 = vmatpush2.bf16.xpose.msra.mxu0 0
        %3273 = vmatprep.subr.bf16.mxu0 0
        %3274 = vmatpush2.bf16.xpose.msra.mxu0 0
        %3275 = vmatprep.mubr.bf16.mxu0 0
        %3276 = vmatmul.mubr.bf16.gmra.mxu0 %v3238
        %v3277 = vpop.f32.mrf.mxu0
        %v3278 = vadd.f32 0.0, %v3277
        %v3279 = vpop.f32.mrf.mxu0
        %v3280 = vpop.f32.mrf.mxu0
        %v3281 = vadd.f32 0.0, %v3280
        %v3282 = vpop.f32.mrf.mxu0
        %3283 = vdwg.mxu0
        %v3284 = vsel %vm736, %v3278, -inf
        %3285 = vmax.xlane.f32.xlu0 %v3284
        %v3286 = vpop.xlane.xlu0 %3285
        %v3287 = vsel %vm736, %v3281, -inf
        %3288 = vmax.xlane.f32.xlu0 %v3287
        %v3289 = vpop.xlane.xlu0 %3288
        %v3290 = vsub.f32 %v3278, %v3286
        %v3291 = vsub.f32 %v3281, %v3289
        %v3292 = vmul.f32 %v3290, 1.442695
        %v3293 = vpow.pop %v3292
        %v3294 = vmul.f32 %v3291, 1.442695
        %v3295 = vpow.pop %v3294
        %v3296 = vsel %vm736, %v3293, 0.0
        %3297 = vadd.xlane.f32.xlu0 %v3296
        %v3298 = vpop.xlane.xlu0 %3297
        %v3299 = vsel %vm736, %v3295, 0.0
        %3300 = vadd.xlane.f32.xlu0 %v3299
        %v3301 = vpop.xlane.xlu0 %3300
        %v3302 = vrcp.pop %v3298
        %v3303 = vrcp.pop %v3301
        %v3304 = vmul.f32 %v3293, %v3302
        %v3305 = vmul.f32 %v3295, %v3303
        %v3306 = vpack.c.bf16 %v3305, %v3304
        %v3307 = vpack.c.bf16 %v3228, %v3228
        %v3309 = vsel %vm736, %v3306, 0
        %v3312 = vsel %vm1150, %v3307, 0
        %3314 = vmatprep.subr.bf16.mxu0 0
        %3315 = vmatpush1.bf16.msra.mxu0 0
        %3316 = vmatprep.subr.bf16.mxu0 0
        %3317 = vmatpush1.bf16.msra.mxu0 0
        %3318 = vmatprep.subr.bf16.mxu0 0
        %3319 = vmatpush1.bf16.msra.mxu0 0
        %3320 = vmatprep.subr.bf16.mxu0 0
        %3321 = vmatpush1.bf16.msra.mxu0 0
        %3322 = vmatprep.subr.bf16.mxu0 0
        %3323 = vmatpush1.bf16.msra.mxu0 0
        %3324 = vmatprep.subr.bf16.mxu0 0
        %3325 = vmatpush1.bf16.msra.mxu0 0
        %3326 = vmatprep.subr.bf16.mxu0 0
        %3327 = vmatpush1.bf16.msra.mxu0 0
        %3328 = vmatprep.subr.bf16.mxu0 0
        %3329 = vmatpush1.bf16.msra.mxu0 %v3312
        %3330 = vmatprep.subr.bf16.mxu0 0
        %3331 = vmatpush2.bf16.msra.mxu0 0
        %3332 = vmatprep.subr.bf16.mxu0 0
        %3333 = vmatpush2.bf16.msra.mxu0 0
        %3334 = vmatprep.subr.bf16.mxu0 0
        %3335 = vmatpush2.bf16.msra.mxu0 0
        %3336 = vmatprep.subr.bf16.mxu0 0
        %3337 = vmatpush2.bf16.msra.mxu0 0
        %3338 = vmatprep.subr.bf16.mxu0 0
        %3339 = vmatpush2.bf16.msra.mxu0 0
        %3340 = vmatprep.subr.bf16.mxu0 0
        %3341 = vmatpush2.bf16.msra.mxu0 0
        %3342 = vmatprep.subr.bf16.mxu0 0
        %3343 = vmatpush2.bf16.msra.mxu0 0
        %3344 = vmatprep.subr.bf16.mxu0 0
        %3345 = vmatpush2.bf16.msra.mxu0 0
        %3346 = vmatprep.mubr.bf16.mxu0 0
        %3347 = vmatmul.mubr.bf16.gmra.mxu0 %v3309
        %v3348 = vpop.f32.mrf.mxu0
        %v3349 = vadd.f32 0.0, %v3348
        %v3350 = vpop.f32.mrf.mxu0
        %v3351 = vpop.f32.mrf.mxu0
        %v3352 = vadd.f32 0.0, %v3351
        %v3353 = vpop.f32.mrf.mxu0
        %3354 = vdwg.mxu0
        %v3355 = vpack.c.bf16 %v3352, %v3349
        %v3356 = vld [vmem:[%s1895] sm:$0xf]
        %v3358 = vsel %vm736, %v3355, 0
        %v3361 = vsel %vm1150, %v3356, 0
        %3363 = vmatprep.subr.bf16.mxu0 0
        %3364 = vmatpush1.bf16.msra.mxu0 0
        %3365 = vmatprep.subr.bf16.mxu0 0
        %3366 = vmatpush1.bf16.msra.mxu0 0
        %3367 = vmatprep.subr.bf16.mxu0 0
        %3368 = vmatpush1.bf16.msra.mxu0 0
        %3369 = vmatprep.subr.bf16.mxu0 0
        %3370 = vmatpush1.bf16.msra.mxu0 0
        %3371 = vmatprep.subr.bf16.mxu0 0
        %3372 = vmatpush1.bf16.msra.mxu0 0
        %3373 = vmatprep.subr.bf16.mxu0 0
        %3374 = vmatpush1.bf16.msra.mxu0 0
        %3375 = vmatprep.subr.bf16.mxu0 0
        %3376 = vmatpush1.bf16.msra.mxu0 0
        %3377 = vmatprep.subr.bf16.mxu0 0
        %3378 = vmatpush1.bf16.msra.mxu0 %v3361
        %3379 = vmatprep.subr.bf16.mxu0 0
        %3380 = vmatpush2.bf16.msra.mxu0 0
        %3381 = vmatprep.subr.bf16.mxu0 0
        %3382 = vmatpush2.bf16.msra.mxu0 0
        %3383 = vmatprep.subr.bf16.mxu0 0
        %3384 = vmatpush2.bf16.msra.mxu0 0
        %3385 = vmatprep.subr.bf16.mxu0 0
        %3386 = vmatpush2.bf16.msra.mxu0 0
        %3387 = vmatprep.subr.bf16.mxu0 0
        %3388 = vmatpush2.bf16.msra.mxu0 0
        %3389 = vmatprep.subr.bf16.mxu0 0
        %3390 = vmatpush2.bf16.msra.mxu0 0
        %3391 = vmatprep.subr.bf16.mxu0 0
        %3392 = vmatpush2.bf16.msra.mxu0 0
        %3393 = vmatprep.subr.bf16.mxu0 0
        %3394 = vmatpush2.bf16.msra.mxu0 0
        %3395 = vmatprep.mubr.bf16.mxu0 0
        %3396 = vmatmul.mubr.bf16.gmra.mxu0 %v3358
        %v3397 = vpop.f32.mrf.mxu0
        %v3398 = vadd.f32 0.0, %v3397
        %v3399 = vpop.f32.mrf.mxu0
        %v3400 = vpop.f32.mrf.mxu0
        %v3401 = vadd.f32 0.0, %v3400
        %v3402 = vpop.f32.mrf.mxu0
        %3403 = vdwg.mxu0
        %v3404 = vadd.f32 %v3041, %v3398
        %v3405 = vadd.f32 %v3042, %v3401
        %v3406 = vld [vmem:[%s11] sm:$0x1]
        %v3408 = vlaneseq
        %v3409 = vshrl.u32 %v3408, 7
        %v3410 = vsub.s32 0, %v3409
        %v3411 = vrot.slane %v3406, %v3410
        %v3413 = vadd.f32 %v3404, %v3411
        %v3414 = vadd.f32 %v3405, %v3411
        %v3415 = vmul.f32 %v3413, 2.0
        %v3416 = vmul.f32 %v3414, 2.0
        %3417 = vst.msk [vmem:[%s468] sm:$0xff] %vm475, %v3415
        %3418 = vst.msk [vmem:[%s468 + $0x8] sm:$0xff] %vm475, %v3416
        %p3419 = scmp.lt.s32.totalorder %s28, 1
        %s3420 = scalar_select %p3419, %s28, 1
        %s3421 = smul.addr %s3420, 2
        %s3422 = smul.addr %s3421, 8
        %s3423 = scalar_lea.vmem %s12, %s3422
        %s3424 = sand.u32 %s324, 1
        %s3425 = scalar_lea.sflag [#allocation3], %s3424
        %s3426 = sand.u32 %s324, 1
        %s3427 = smul.addr %s3426, 8
        %s3428 = scalar_lea.vmem [#allocation2], %s3427
        // Predicated region
        $region69: #{duplex_encoder_layer_conv.2} parent=67 // pred_check
          %p3429 = pneg %p308
        $region70: #{duplex_encoder_layer_conv.2} parent=67 // pred_check_branch
          %3431 = sbr.rel (%p3429) target = $region72
        $region71: #{duplex_encoder_layer_conv.2} parent=67 // pred_region
          _
        $region72: #{duplex_encoder_layer_conv.2} parent=67 // pred_fallthru
          _
        // Predicated region
        $region73: #{duplex_encoder_layer_conv.2} parent=67 // pred_check
          %p3432 = pneg %p334
        $region74: #{duplex_encoder_layer_conv.2} parent=67 // pred_check_branch
          %3434 = sbr.rel (%p3432) target = $region76
        $region75: #{duplex_encoder_layer_conv.2} parent=67 // pred_region
          %s3436 = ssub.s32 128, 128
          %3437 = vsyncadd %s3425, %s3436
          %s3438 = smul.addr %s28, 128
          %s3439 = scalar_lea.hbm %s13, %s3438
          %s3441 = sshll.u32 %s3428, 4
          %s3442 = int_to_ptr.vmem [resolvable:$true] %s3441
          %3444 = dma.vmem_to_hbm [thread:$0]  %s3442, 128, %s3439, %s3425
        $region76: #{duplex_encoder_layer_conv.2} parent=67 // pred_fallthru
          _
      $region68: #{duplex_encoder_layer_conv.2} parent=5 // pred_fallthru
        _
      %p3445 = scmp.le.s32.totalorder 2, %s23
      // Predicated region
      $region77: #{duplex_encoder_layer_conv.2} parent=5 // pred_check
        %p3446 = pneg %p3445
      $region78: #{duplex_encoder_layer_conv.2} parent=5 // pred_check_branch
        %3448 = sbr.rel (%p3446) target = $region80
      $region79: #{duplex_encoder_layer_conv.2} parent=5 // pred_region
        %s3449 = ssub.s32 %s23, 2
        // Predicated region
        $region81: #{duplex_encoder_layer_conv.2} parent=79 // pred_check
          %p3450 = pneg %p314
        $region82: #{duplex_encoder_layer_conv.2} parent=79 // pred_check_branch
          %3452 = sbr.rel (%p3450) target = $region84
        $region83: #{duplex_encoder_layer_conv.2} parent=79 // pred_region
          %p3453 = scmp.lt.s32.totalorder %s29, 1
          %s3454 = scalar_select %p3453, %s29, 1
          %s3455 = smul.addr %s3454, 2
          %s3456 = smul.addr %s3455, 8
          %s3457 = scalar_lea.vmem %s12, %s3456
        $region84: #{duplex_encoder_layer_conv.2} parent=79 // pred_fallthru
          _
        // Predicated region
        $region85: #{duplex_encoder_layer_conv.2} parent=79 // pred_check
          %p3458 = pneg %p340
        $region86: #{duplex_encoder_layer_conv.2} parent=79 // pred_check_branch
          %3460 = sbr.rel (%p3458) target = $region88
        $region87: #{duplex_encoder_layer_conv.2} parent=79 // pred_region
          %s3461 = sand.u32 %s325, 1
          %s3462 = scalar_lea.sflag [#allocation3], %s3461
          %s3463 = sand.u32 %s325, 1
          %s3464 = smul.addr %s3463, 8
          %s3465 = scalar_lea.vmem [#allocation2], %s3464
          %3466 = dma.done %s3462, 128
        $region88: #{duplex_encoder_layer_conv.2} parent=79 // pred_fallthru
          _
      $region80: #{duplex_encoder_layer_conv.2} parent=5 // pred_fallthru
        _
    $region6: #{duplex_encoder_layer_conv.2} parent=1 // loop_footer
      %s27 = sadd.s32 1, %s23
    $region7: #{duplex_encoder_layer_conv.2} parent=1 // loop_footer_branch
      %22 = sbr.rel target = $region3
    $region8: #{duplex_encoder_layer_conv.2} parent=1 // loop_exit
      _
    %3467 = vsyncpa [#allocation3], 1
    %s3468 = scalar_lea.sflag [#allocation3], 1
    %3469 = vsyncpa %s3468, 1

</llo_original>
